<compile_context>
chip_gen: v7x
topology: tpu7x:2x2x1
jax: 0.10.0
libtpu: 0.0.40
codegen_flags: <defaults>
</compile_context>

<pallas_src>
import functools

import jax
import jax.numpy as jnp
from jax.experimental import pallas as pl
from jax.experimental.pallas import tpu as pltpu


def _linear_kernel(x_ref, w_ref, b_ref, o_ref):
    # x_ref: (tm, C_in)    bf16 activation tile in VMEM
    # w_ref: (C_in, C_out) bf16 weight, already [C_in, C_out] -> plain
    #                      contraction, no XLU transpose of the weight tile
    # b_ref: (1, C_out)    f32 bias
    # o_ref: (tm, C_out)   f32 output tile
    acc = jnp.dot(x_ref[...], w_ref[...], preferred_element_type=jnp.float32)
    # Kernel is HBM-bound: the fp32 bias add (and any extra elementwise
    # fusion, e.g. dropout at p>0) rides for free on idle VALU slots.
    o_ref[...] = (acc + b_ref[...]).astype(o_ref.dtype)


def _num_tensorcores():
    """Best-effort TensorCore count of device 0 (v7x has 2 TCs per chip)."""
    try:
        dev = jax.devices()[0]
        n = getattr(dev, "num_cores", None)
        if isinstance(n, int) and n >= 1:
            return n
        kind = (getattr(dev, "device_kind", "") or "").lower()
        if "v7" in kind:
            return 2
    except Exception:
        pass
    return 1


def prepare_linear_params(weight, bias):
    """One-time parameter prep (amortized across all calls).

    PyTorch-layout weight [C_out, C_in] (f32) -> [C_in, C_out] bf16, f32 bias.
    Doing the transpose + cast at the parameter level avoids both a per-call
    XLA transpose and an in-VMEM XLU transpose inside the kernel.
    """
    return jnp.asarray(weight).T.astype(jnp.bfloat16), jnp.asarray(bias, jnp.float32)


@functools.partial(jax.jit, static_argnames=("num_cores",))
def dropout_linear_dropout(x_nhwc, weight_t, bias, *, num_cores=1):
    """Forward of Dropout(p=0) -> Linear(1536, 384) -> Dropout(p=0).

    x_nhwc:   [N, H, W, C_in]   activations (f32 or bf16)
    weight_t: [C_in, C_out]     pre-transposed bf16 weight (prepare_linear_params)
    bias:     [C_out]           f32 bias
    Returns   [N, H, W, C_out]  f32
    """
    n, h, w_dim, c_in = x_nhwc.shape
    c_out = weight_t.shape[1]
    m = n * h * w_dim

    # Contiguous reshape (free bitcast) + bf16 cast (halves HBM bytes; in a
    # real model this cast fuses with the producer / x is already bf16).
    x2d = x_nhwc.reshape(m, c_in).astype(jnp.bfloat16)
    w = weight_t.astype(jnp.bfloat16)
    b2d = bias.reshape(1, c_out).astype(jnp.float32)

    out_dtype = jnp.float32
    flops = 2 * m * c_in * c_out
    bytes_accessed = (
        m * c_in * 2 + c_in * c_out * 2 + c_out * 4 + m * c_out * 4
    )
    cost = pl.CostEstimate(
        flops=flops, bytes_accessed=bytes_accessed, transcendentals=0
    )

    if num_cores >= 2 and m >= 2 * 16:
        # v7x: shard rows across the 2 TensorCores.  tm is 16-aligned (bf16
        # sublane packing); the ragged last tile is masked on writeback.
        tm = ((m + num_cores - 1) // num_cores + 15) // 16 * 16
        grid = (pl.cdiv(m, tm),)
        out2d = pl.pallas_call(
            _linear_kernel,
            out_shape=jax.ShapeDtypeStruct((m, c_out), out_dtype),
            grid=grid,
            in_specs=[
                pl.BlockSpec((tm, c_in), lambda i: (i, 0)),
                pl.BlockSpec((c_in, c_out), lambda i: (0, 0)),
                pl.BlockSpec((1, c_out), lambda i: (0, 0)),
            ],
            out_specs=pl.BlockSpec((tm, c_out), lambda i: (i, 0)),
            compiler_params=pltpu.CompilerParams(
                dimension_semantics=("parallel",)
            ),
            cost_estimate=cost,
        )(x2d, w, b2d)
    else:
        # v5e / v6e (single TC): whole problem (~2.7 MB in bf16/f32) fits VMEM
        # on every generation; single-shot call, no grid, no pipeline overhead.
        out2d = pl.pallas_call(
            _linear_kernel,
            out_shape=jax.ShapeDtypeStruct((m, c_out), out_dtype),
            in_specs=[
                pl.BlockSpec(memory_space=pltpu.MemorySpace.VMEM),
                pl.BlockSpec(memory_space=pltpu.MemorySpace.VMEM),
                pl.BlockSpec(memory_space=pltpu.MemorySpace.VMEM),
            ],
            out_specs=pl.BlockSpec(memory_space=pltpu.MemorySpace.VMEM),
            cost_estimate=cost,
        )(x2d, w, b2d)

    return out2d.reshape(n, h, w_dim, c_out)


if __name__ == "__main__":
    key = jax.random.PRNGKey(0)
    k_x, k_w, k_b = jax.random.split(key, 3)

    C_IN, C_OUT = 1536, 384

    # Input matching the module: [1, 14, 14, 1536]
    x = jax.random.normal(k_x, (1, 14, 14, C_IN), dtype=jnp.float32)

    # Deterministic parameters (PyTorch Linear-style uniform bound), in the
    # original PyTorch [C_out, C_in] layout, then one-time prepped.
    bound = 1.0 / (C_IN ** 0.5)
    weight = jax.random.uniform(k_w, (C_OUT, C_IN), jnp.float32, -bound, bound)
    bias = jax.random.uniform(k_b, (C_OUT,), jnp.float32, -bound, bound)

    weight_t, bias_f32 = prepare_linear_params(weight, bias)

    out = dropout_linear_dropout(
        x, weight_t, bias_f32, num_cores=_num_tensorcores()
    )
    out = jax.block_until_ready(out)
    assert out.shape == (1, 14, 14, C_OUT)

    # Reference checks (dropout p=0.0 is identity).
    # (1) Tight check against the same bf16-quantized inputs.
    x_q = x.astype(jnp.bfloat16).astype(jnp.float32)
    w_q = weight.astype(jnp.bfloat16).astype(jnp.float32)
    ref_q = x_q @ w_q.T + bias
    assert jnp.allclose(out, ref_q, atol=2e-3, rtol=2e-3)
    # (2) Loose check against the full-f32 reference (bf16 rounding of x/w).
    ref_f32 = x @ weight.T + bias
    assert jnp.allclose(out, ref_f32, atol=5e-2, rtol=5e-2)

    print("KERNEL_OK")
</pallas_src>

<mosaic_0001>
module attributes {stable_mosaic.version = 11 : i64} {
  func.func @_linear_kernel(%arg0: memref<196x1536xbf16, #tpu.memory_space<vmem>>, %arg1: memref<1536x384xbf16, #tpu.memory_space<vmem>>, %arg2: memref<1x384xf32, #tpu.memory_space<vmem>>, %arg3: memref<196x384xf32, #tpu.memory_space<vmem>>) attributes {dimension_semantics = [], scalar_prefetch = 0 : i64, scratch_operands = 0 : i64, tpu.core_type = #tpu.core_type<tc>} {
    %c0 = arith.constant 0 : index
    %c0_0 = arith.constant 0 : index
    %0 = vector.load %arg0[%c0, %c0_0] : memref<196x1536xbf16, #tpu.memory_space<vmem>>, vector<196x1536xbf16>
    %c0_1 = arith.constant 0 : index
    %c0_2 = arith.constant 0 : index
    %1 = vector.load %arg1[%c0_1, %c0_2] : memref<1536x384xbf16, #tpu.memory_space<vmem>>, vector<1536x384xbf16>
    %cst = arith.constant dense<0.000000e+00> : vector<196x384xf32>
    %2 = tpu.matmul %0, %1, %cst {dimension_numbers = #tpu.dot_dimension_numbers<[1], [0], [0], [1], [0, 0, 1, 1], [], []>} : vector<196x1536xbf16>, vector<1536x384xbf16>, vector<196x384xf32> -> vector<196x384xf32>
    %c0_3 = arith.constant 0 : index
    %c0_4 = arith.constant 0 : index
    %3 = vector.load %arg2[%c0_3, %c0_4] : memref<1x384xf32, #tpu.memory_space<vmem>>, vector<1x384xf32>
    %4 = vector.broadcast %3 : vector<1x384xf32> to vector<196x384xf32>
    %5 = arith.addf %2, %4 : vector<196x384xf32>
    %c0_5 = arith.constant 0 : index
    %c0_6 = arith.constant 0 : index
    %6 = vector.load %arg3[%c0_5, %c0_6] : memref<196x384xf32, #tpu.memory_space<vmem>>, vector<196x384xf32>
    tpu.vector_store %arg3[%c0_5, %c0_6], %5 {strides = array<i32>} : memref<196x384xf32, #tpu.memory_space<vmem>>, vector<196x384xf32>,
    return
  }
}

</mosaic_0001>

<llo_original>
// kernel: dropout_linear_dropout.1
$region0: #{dropout_linear_dropout.1}
  #allocation0 [shape = 'u32[]', space=smem, size = 0x4, offset = 0x4, fixed_abs, tag = 'smem constant byte address 0x4 - core index']
  #allocation1 [shape = 'u32[144,128]{1,0:T(1,128)}', space=vmem, size = 0x12000, scoped, tag = 'internal scratch']
  %s0 = inlined_call_operand.vmem [shape: bf16[196,1536], index: 0, kind: input, shape index: {}]
  %s1 = inlined_call_operand.vmem [shape: bf16[1536,384], index: 1, kind: input, shape index: {}]
  %s2 = inlined_call_operand.vmem [shape: f32[1,384], index: 2, kind: input, shape index: {}]
  %s3 = inlined_call_operand.vmem [shape: f32[196,384], index: 3, kind: output, shape index: {}]
  %s4 = sld [smem:[#allocation0]]
  $region22: #{dropout_linear_dropout.1} parent=0
    _
  %s6 = ssub.s32 1, %s4
  %s7 = scalar_select 0, %s6, %s4
  // Predicated region
  $region2: #{dropout_linear_dropout.1} parent=0 // pred_check
    _
  $region3: #{dropout_linear_dropout.1} parent=0 // pred_check_branch
    %9 = sbr.rel (0) target = $region5
  $region4: #{dropout_linear_dropout.1} parent=0 // pred_region
    _
  $region5: #{dropout_linear_dropout.1} parent=0 // pred_fallthru
    _
  // Predicated region
  $region6: #{dropout_linear_dropout.1} parent=0 // pred_check
    _
  $region7: #{dropout_linear_dropout.1} parent=0 // pred_check_branch
    %11 = sbr.rel (0) target = $region9
  $region8: #{dropout_linear_dropout.1} parent=0 // pred_region
    _
  $region9: #{dropout_linear_dropout.1} parent=0 // pred_fallthru
    _
  // Predicated region
  $region10: #{dropout_linear_dropout.1} parent=0 // pred_check
    _
  $region11: #{dropout_linear_dropout.1} parent=0 // pred_check_branch
    %13 = sbr.rel (0) target = $region13
  $region12: #{dropout_linear_dropout.1} parent=0 // pred_region
    _
  $region13: #{dropout_linear_dropout.1} parent=0 // pred_fallthru
    _
  %v15 = vld [vmem:[%s0] sm:$0xff]
  %v16 = vld [vmem:[%s0 + $0x8] sm:$0xff]
  %v17 = vld [vmem:[%s0 + $0x10] sm:$0xff]
  %v18 = vld [vmem:[%s0 + $0x18] sm:$0xff]
  %v19 = vld [vmem:[%s0 + $0x20] sm:$0xff]
  %v20 = vld [vmem:[%s0 + $0x28] sm:$0xff]
  %v21 = vld [vmem:[%s0 + $0x30] sm:$0xff]
  %v22 = vld [vmem:[%s0 + $0x38] sm:$0xff]
  %v23 = vld [vmem:[%s0 + $0x40] sm:$0xff]
  %v24 = vld [vmem:[%s0 + $0x48] sm:$0xff]
  %v25 = vld [vmem:[%s0 + $0x50] sm:$0xff]
  %v26 = vld [vmem:[%s0 + $0x58] sm:$0xff]
  %v27 = vld [vmem:[%s0 + $0x60] sm:$0xff]
  %v28 = vld [vmem:[%s0 + $0x68] sm:$0xff]
  %v29 = vld [vmem:[%s0 + $0x70] sm:$0xff]
  %v30 = vld [vmem:[%s0 + $0x78] sm:$0xff]
  %v31 = vld [vmem:[%s0 + $0x80] sm:$0xff]
  %v32 = vld [vmem:[%s0 + $0x88] sm:$0xff]
  %v33 = vld [vmem:[%s0 + $0x90] sm:$0xff]
  %v34 = vld [vmem:[%s0 + $0x98] sm:$0xff]
  %v35 = vld [vmem:[%s0 + $0xa0] sm:$0xff]
  %v36 = vld [vmem:[%s0 + $0xa8] sm:$0xff]
  %v37 = vld [vmem:[%s0 + $0xb0] sm:$0xff]
  %v38 = vld [vmem:[%s0 + $0xb8] sm:$0xff]
  %v39 = vld [vmem:[%s0 + $0xc0] sm:$0xff]
  %v40 = vld [vmem:[%s0 + $0xc8] sm:$0xff]
  %v41 = vld [vmem:[%s0 + $0xd0] sm:$0xff]
  %v42 = vld [vmem:[%s0 + $0xd8] sm:$0xff]
  %v43 = vld [vmem:[%s0 + $0xe0] sm:$0xff]
  %v44 = vld [vmem:[%s0 + $0xe8] sm:$0xff]
  %v45 = vld [vmem:[%s0 + $0xf0] sm:$0xff]
  %v46 = vld [vmem:[%s0 + $0xf8] sm:$0xff]
  %v47 = vld [vmem:[%s0 + $0x100] sm:$0xff]
  %v48 = vld [vmem:[%s0 + $0x108] sm:$0xff]
  %v49 = vld [vmem:[%s0 + $0x110] sm:$0xff]
  %v50 = vld [vmem:[%s0 + $0x118] sm:$0xff]
  %v51 = vld [vmem:[%s0 + $0x120] sm:$0xff]
  %v52 = vld [vmem:[%s0 + $0x128] sm:$0xff]
  %v53 = vld [vmem:[%s0 + $0x130] sm:$0xff]
  %v54 = vld [vmem:[%s0 + $0x138] sm:$0xff]
  %v55 = vld [vmem:[%s0 + $0x140] sm:$0xff]
  %v56 = vld [vmem:[%s0 + $0x148] sm:$0xff]
  %v57 = vld [vmem:[%s0 + $0x150] sm:$0xff]
  %v58 = vld [vmem:[%s0 + $0x158] sm:$0xff]
  %v59 = vld [vmem:[%s0 + $0x160] sm:$0xff]
  %v60 = vld [vmem:[%s0 + $0x168] sm:$0xff]
  %v61 = vld [vmem:[%s0 + $0x170] sm:$0xff]
  %v62 = vld [vmem:[%s0 + $0x178] sm:$0xff]
  %v63 = vld [vmem:[%s0 + $0x180] sm:$0xff]
  %v64 = vld [vmem:[%s0 + $0x188] sm:$0xff]
  %v65 = vld [vmem:[%s0 + $0x190] sm:$0xff]
  %v66 = vld [vmem:[%s0 + $0x198] sm:$0xff]
  %v67 = vld [vmem:[%s0 + $0x1a0] sm:$0xff]
  %v68 = vld [vmem:[%s0 + $0x1a8] sm:$0xff]
  %v69 = vld [vmem:[%s0 + $0x1b0] sm:$0xff]
  %v70 = vld [vmem:[%s0 + $0x1b8] sm:$0xff]
  %v71 = vld [vmem:[%s0 + $0x1c0] sm:$0xff]
  %v72 = vld [vmem:[%s0 + $0x1c8] sm:$0xff]
  %v73 = vld [vmem:[%s0 + $0x1d0] sm:$0xff]
  %v74 = vld [vmem:[%s0 + $0x1d8] sm:$0xff]
  %v75 = vld [vmem:[%s0 + $0x1e0] sm:$0xff]
  %v76 = vld [vmem:[%s0 + $0x1e8] sm:$0xff]
  %v77 = vld [vmem:[%s0 + $0x1f0] sm:$0xff]
  %v78 = vld [vmem:[%s0 + $0x1f8] sm:$0xff]
  %v79 = vld [vmem:[%s0 + $0x200] sm:$0xff]
  %v80 = vld [vmem:[%s0 + $0x208] sm:$0xff]
  %v81 = vld [vmem:[%s0 + $0x210] sm:$0xff]
  %v82 = vld [vmem:[%s0 + $0x218] sm:$0xff]
  %v83 = vld [vmem:[%s0 + $0x220] sm:$0xff]
  %v84 = vld [vmem:[%s0 + $0x228] sm:$0xff]
  %v85 = vld [vmem:[%s0 + $0x230] sm:$0xff]
  %v86 = vld [vmem:[%s0 + $0x238] sm:$0xff]
  %v87 = vld [vmem:[%s0 + $0x240] sm:$0xff]
  %v88 = vld [vmem:[%s0 + $0x248] sm:$0xff]
  %v89 = vld [vmem:[%s0 + $0x250] sm:$0xff]
  %v90 = vld [vmem:[%s0 + $0x258] sm:$0xff]
  %v91 = vld [vmem:[%s0 + $0x260] sm:$0xff]
  %v92 = vld [vmem:[%s0 + $0x268] sm:$0xff]
  %v93 = vld [vmem:[%s0 + $0x270] sm:$0xff]
  %v94 = vld [vmem:[%s0 + $0x278] sm:$0xff]
  %v95 = vld [vmem:[%s0 + $0x280] sm:$0xff]
  %v96 = vld [vmem:[%s0 + $0x288] sm:$0xff]
  %v97 = vld [vmem:[%s0 + $0x290] sm:$0xff]
  %v98 = vld [vmem:[%s0 + $0x298] sm:$0xff]
  %v99 = vld [vmem:[%s0 + $0x2a0] sm:$0xff]
  %v100 = vld [vmem:[%s0 + $0x2a8] sm:$0xff]
  %v101 = vld [vmem:[%s0 + $0x2b0] sm:$0xff]
  %v102 = vld [vmem:[%s0 + $0x2b8] sm:$0xff]
  %v103 = vld [vmem:[%s0 + $0x2c0] sm:$0xff]
  %v104 = vld [vmem:[%s0 + $0x2c8] sm:$0xff]
  %v105 = vld [vmem:[%s0 + $0x2d0] sm:$0xff]
  %v106 = vld [vmem:[%s0 + $0x2d8] sm:$0xff]
  %v107 = vld [vmem:[%s0 + $0x2e0] sm:$0xff]
  %v108 = vld [vmem:[%s0 + $0x2e8] sm:$0xff]
  %v109 = vld [vmem:[%s0 + $0x2f0] sm:$0xff]
  %v110 = vld [vmem:[%s0 + $0x2f8] sm:$0xff]
  %v111 = vld [vmem:[%s0 + $0x300] sm:$0xff]
  %v112 = vld [vmem:[%s0 + $0x308] sm:$0xff]
  %v113 = vld [vmem:[%s0 + $0x310] sm:$0xff]
  %v114 = vld [vmem:[%s0 + $0x318] sm:$0xff]
  %v115 = vld [vmem:[%s0 + $0x320] sm:$0xff]
  %v116 = vld [vmem:[%s0 + $0x328] sm:$0xff]
  %v117 = vld [vmem:[%s0 + $0x330] sm:$0xff]
  %v118 = vld [vmem:[%s0 + $0x338] sm:$0xff]
  %v119 = vld [vmem:[%s0 + $0x340] sm:$0xff]
  %v120 = vld [vmem:[%s0 + $0x348] sm:$0xff]
  %v121 = vld [vmem:[%s0 + $0x350] sm:$0xff]
  %v122 = vld [vmem:[%s0 + $0x358] sm:$0xff]
  %v123 = vld [vmem:[%s0 + $0x360] sm:$0xff]
  %v124 = vld [vmem:[%s0 + $0x368] sm:$0xff]
  %v125 = vld [vmem:[%s0 + $0x370] sm:$0xff]
  %v126 = vld [vmem:[%s0 + $0x378] sm:$0xff]
  %v127 = vld [vmem:[%s0 + $0x380] sm:$0xff]
  %v128 = vld [vmem:[%s0 + $0x388] sm:$0xff]
  %v129 = vld [vmem:[%s0 + $0x390] sm:$0xff]
  %v130 = vld [vmem:[%s0 + $0x398] sm:$0xff]
  %v131 = vld [vmem:[%s0 + $0x3a0] sm:$0xff]
  %v132 = vld [vmem:[%s0 + $0x3a8] sm:$0xff]
  %v133 = vld [vmem:[%s0 + $0x3b0] sm:$0xff]
  %v134 = vld [vmem:[%s0 + $0x3b8] sm:$0xff]
  %v135 = vld [vmem:[%s0 + $0x3c0] sm:$0xff]
  %v136 = vld [vmem:[%s0 + $0x3c8] sm:$0xff]
  %v137 = vld [vmem:[%s0 + $0x3d0] sm:$0xff]
  %v138 = vld [vmem:[%s0 + $0x3d8] sm:$0xff]
  %v139 = vld [vmem:[%s0 + $0x3e0] sm:$0xff]
  %v140 = vld [vmem:[%s0 + $0x3e8] sm:$0xff]
  %v141 = vld [vmem:[%s0 + $0x3f0] sm:$0xff]
  %v142 = vld [vmem:[%s0 + $0x3f8] sm:$0xff]
  %v143 = vld [vmem:[%s0 + $0x400] sm:$0xff]
  %v144 = vld [vmem:[%s0 + $0x408] sm:$0xff]
  %v145 = vld [vmem:[%s0 + $0x410] sm:$0xff]
  %v146 = vld [vmem:[%s0 + $0x418] sm:$0xff]
  %v147 = vld [vmem:[%s0 + $0x420] sm:$0xff]
  %v148 = vld [vmem:[%s0 + $0x428] sm:$0xff]
  %v149 = vld [vmem:[%s0 + $0x430] sm:$0xff]
  %v150 = vld [vmem:[%s0 + $0x438] sm:$0xff]
  %v151 = vld [vmem:[%s0 + $0x440] sm:$0xff]
  %v152 = vld [vmem:[%s0 + $0x448] sm:$0xff]
  %v153 = vld [vmem:[%s0 + $0x450] sm:$0xff]
  %v154 = vld [vmem:[%s0 + $0x458] sm:$0xff]
  %v155 = vld [vmem:[%s0 + $0x460] sm:$0xff]
  %v156 = vld [vmem:[%s0 + $0x468] sm:$0xff]
  %v157 = vld [vmem:[%s0 + $0x470] sm:$0xff]
  %v158 = vld [vmem:[%s0 + $0x478] sm:$0xff]
  %v159 = vld [vmem:[%s0 + $0x480] sm:$0x33]
  %v160 = vld [vmem:[%s0 + $0x488] sm:$0x33]
  %v161 = vld [vmem:[%s0 + $0x490] sm:$0x33]
  %v162 = vld [vmem:[%s0 + $0x498] sm:$0x33]
  %v163 = vld [vmem:[%s0 + $0x4a0] sm:$0x33]
  %v164 = vld [vmem:[%s0 + $0x4a8] sm:$0x33]
  %v165 = vld [vmem:[%s1] sm:$0xff]
  %v166 = vld [vmem:[%s1 + $0x8] sm:$0xf]
  %v167 = vld [vmem:[%s1 + $0xc] sm:$0xff]
  %v168 = vld [vmem:[%s1 + $0x14] sm:$0xf]
  %v169 = vld [vmem:[%s1 + $0x18] sm:$0xff]
  %v170 = vld [vmem:[%s1 + $0x20] sm:$0xf]
  %v171 = vld [vmem:[%s1 + $0x24] sm:$0xff]
  %v172 = vld [vmem:[%s1 + $0x2c] sm:$0xf]
  %v173 = vld [vmem:[%s1 + $0x30] sm:$0xff]
  %v174 = vld [vmem:[%s1 + $0x38] sm:$0xf]
  %v175 = vld [vmem:[%s1 + $0x3c] sm:$0xff]
  %v176 = vld [vmem:[%s1 + $0x44] sm:$0xf]
  %v177 = vld [vmem:[%s1 + $0x48] sm:$0xff]
  %v178 = vld [vmem:[%s1 + $0x50] sm:$0xf]
  %v179 = vld [vmem:[%s1 + $0x54] sm:$0xff]
  %v180 = vld [vmem:[%s1 + $0x5c] sm:$0xf]
  %v181 = vld [vmem:[%s1 + $0x60] sm:$0xff]
  %v182 = vld [vmem:[%s1 + $0x68] sm:$0xf]
  %v183 = vld [vmem:[%s1 + $0x6c] sm:$0xff]
  %v184 = vld [vmem:[%s1 + $0x74] sm:$0xf]
  %v185 = vld [vmem:[%s1 + $0x78] sm:$0xff]
  %v186 = vld [vmem:[%s1 + $0x80] sm:$0xf]
  %v187 = vld [vmem:[%s1 + $0x84] sm:$0xff]
  %v188 = vld [vmem:[%s1 + $0x8c] sm:$0xf]
  %v189 = vld [vmem:[%s1 + $0x90] sm:$0xff]
  %v190 = vld [vmem:[%s1 + $0x98] sm:$0xf]
  %v191 = vld [vmem:[%s1 + $0x9c] sm:$0xff]
  %v192 = vld [vmem:[%s1 + $0xa4] sm:$0xf]
  %v193 = vld [vmem:[%s1 + $0xa8] sm:$0xff]
  %v194 = vld [vmem:[%s1 + $0xb0] sm:$0xf]
  %v195 = vld [vmem:[%s1 + $0xb4] sm:$0xff]
  %v196 = vld [vmem:[%s1 + $0xbc] sm:$0xf]
  %v197 = vld [vmem:[%s1 + $0xc0] sm:$0xff]
  %v198 = vld [vmem:[%s1 + $0xc8] sm:$0xf]
  %v199 = vld [vmem:[%s1 + $0xcc] sm:$0xff]
  %v200 = vld [vmem:[%s1 + $0xd4] sm:$0xf]
  %v201 = vld [vmem:[%s1 + $0xd8] sm:$0xff]
  %v202 = vld [vmem:[%s1 + $0xe0] sm:$0xf]
  %v203 = vld [vmem:[%s1 + $0xe4] sm:$0xff]
  %v204 = vld [vmem:[%s1 + $0xec] sm:$0xf]
  %v205 = vld [vmem:[%s1 + $0xf0] sm:$0xff]
  %v206 = vld [vmem:[%s1 + $0xf8] sm:$0xf]
  %v207 = vld [vmem:[%s1 + $0xfc] sm:$0xff]
  %v208 = vld [vmem:[%s1 + $0x104] sm:$0xf]
  %v209 = vld [vmem:[%s1 + $0x108] sm:$0xff]
  %v210 = vld [vmem:[%s1 + $0x110] sm:$0xf]
  %v211 = vld [vmem:[%s1 + $0x114] sm:$0xff]
  %v212 = vld [vmem:[%s1 + $0x11c] sm:$0xf]
  %v213 = vld [vmem:[%s1 + $0x120] sm:$0xff]
  %v214 = vld [vmem:[%s1 + $0x128] sm:$0xf]
  %v215 = vld [vmem:[%s1 + $0x12c] sm:$0xff]
  %v216 = vld [vmem:[%s1 + $0x134] sm:$0xf]
  %v217 = vld [vmem:[%s1 + $0x138] sm:$0xff]
  %v218 = vld [vmem:[%s1 + $0x140] sm:$0xf]
  %v219 = vld [vmem:[%s1 + $0x144] sm:$0xff]
  %v220 = vld [vmem:[%s1 + $0x14c] sm:$0xf]
  %v221 = vld [vmem:[%s1 + $0x150] sm:$0xff]
  %v222 = vld [vmem:[%s1 + $0x158] sm:$0xf]
  %v223 = vld [vmem:[%s1 + $0x15c] sm:$0xff]
  %v224 = vld [vmem:[%s1 + $0x164] sm:$0xf]
  %v225 = vld [vmem:[%s1 + $0x168] sm:$0xff]
  %v226 = vld [vmem:[%s1 + $0x170] sm:$0xf]
  %v227 = vld [vmem:[%s1 + $0x174] sm:$0xff]
  %v228 = vld [vmem:[%s1 + $0x17c] sm:$0xf]
  %v229 = vld [vmem:[%s1 + $0x180] sm:$0xff]
  %v230 = vld [vmem:[%s1 + $0x188] sm:$0xf]
  %v231 = vld [vmem:[%s1 + $0x18c] sm:$0xff]
  %v232 = vld [vmem:[%s1 + $0x194] sm:$0xf]
  %v233 = vld [vmem:[%s1 + $0x198] sm:$0xff]
  %v234 = vld [vmem:[%s1 + $0x1a0] sm:$0xf]
  %v235 = vld [vmem:[%s1 + $0x1a4] sm:$0xff]
  %v236 = vld [vmem:[%s1 + $0x1ac] sm:$0xf]
  %v237 = vld [vmem:[%s1 + $0x1b0] sm:$0xff]
  %v238 = vld [vmem:[%s1 + $0x1b8] sm:$0xf]
  %v239 = vld [vmem:[%s1 + $0x1bc] sm:$0xff]
  %v240 = vld [vmem:[%s1 + $0x1c4] sm:$0xf]
  %v241 = vld [vmem:[%s1 + $0x1c8] sm:$0xff]
  %v242 = vld [vmem:[%s1 + $0x1d0] sm:$0xf]
  %v243 = vld [vmem:[%s1 + $0x1d4] sm:$0xff]
  %v244 = vld [vmem:[%s1 + $0x1dc] sm:$0xf]
  %v245 = vld [vmem:[%s1 + $0x1e0] sm:$0xff]
  %v246 = vld [vmem:[%s1 + $0x1e8] sm:$0xf]
  %v247 = vld [vmem:[%s1 + $0x1ec] sm:$0xff]
  %v248 = vld [vmem:[%s1 + $0x1f4] sm:$0xf]
  %v249 = vld [vmem:[%s1 + $0x1f8] sm:$0xff]
  %v250 = vld [vmem:[%s1 + $0x200] sm:$0xf]
  %v251 = vld [vmem:[%s1 + $0x204] sm:$0xff]
  %v252 = vld [vmem:[%s1 + $0x20c] sm:$0xf]
  %v253 = vld [vmem:[%s1 + $0x210] sm:$0xff]
  %v254 = vld [vmem:[%s1 + $0x218] sm:$0xf]
  %v255 = vld [vmem:[%s1 + $0x21c] sm:$0xff]
  %v256 = vld [vmem:[%s1 + $0x224] sm:$0xf]
  %v257 = vld [vmem:[%s1 + $0x228] sm:$0xff]
  %v258 = vld [vmem:[%s1 + $0x230] sm:$0xf]
  %v259 = vld [vmem:[%s1 + $0x234] sm:$0xff]
  %v260 = vld [vmem:[%s1 + $0x23c] sm:$0xf]
  %v261 = vld [vmem:[%s1 + $0x240] sm:$0xff]
  %v262 = vld [vmem:[%s1 + $0x248] sm:$0xf]
  %v263 = vld [vmem:[%s1 + $0x24c] sm:$0xff]
  %v264 = vld [vmem:[%s1 + $0x254] sm:$0xf]
  %v265 = vld [vmem:[%s1 + $0x258] sm:$0xff]
  %v266 = vld [vmem:[%s1 + $0x260] sm:$0xf]
  %v267 = vld [vmem:[%s1 + $0x264] sm:$0xff]
  %v268 = vld [vmem:[%s1 + $0x26c] sm:$0xf]
  %v269 = vld [vmem:[%s1 + $0x270] sm:$0xff]
  %v270 = vld [vmem:[%s1 + $0x278] sm:$0xf]
  %v271 = vld [vmem:[%s1 + $0x27c] sm:$0xff]
  %v272 = vld [vmem:[%s1 + $0x284] sm:$0xf]
  %v273 = vld [vmem:[%s1 + $0x288] sm:$0xff]
  %v274 = vld [vmem:[%s1 + $0x290] sm:$0xf]
  %v275 = vld [vmem:[%s1 + $0x294] sm:$0xff]
  %v276 = vld [vmem:[%s1 + $0x29c] sm:$0xf]
  %v277 = vld [vmem:[%s1 + $0x2a0] sm:$0xff]
  %v278 = vld [vmem:[%s1 + $0x2a8] sm:$0xf]
  %v279 = vld [vmem:[%s1 + $0x2ac] sm:$0xff]
  %v280 = vld [vmem:[%s1 + $0x2b4] sm:$0xf]
  %v281 = vld [vmem:[%s1 + $0x2b8] sm:$0xff]
  %v282 = vld [vmem:[%s1 + $0x2c0] sm:$0xf]
  %v283 = vld [vmem:[%s1 + $0x2c4] sm:$0xff]
  %v284 = vld [vmem:[%s1 + $0x2cc] sm:$0xf]
  %v285 = vld [vmem:[%s1 + $0x2d0] sm:$0xff]
  %v286 = vld [vmem:[%s1 + $0x2d8] sm:$0xf]
  %v287 = vld [vmem:[%s1 + $0x2dc] sm:$0xff]
  %v288 = vld [vmem:[%s1 + $0x2e4] sm:$0xf]
  %v289 = vld [vmem:[%s1 + $0x2e8] sm:$0xff]
  %v290 = vld [vmem:[%s1 + $0x2f0] sm:$0xf]
  %v291 = vld [vmem:[%s1 + $0x2f4] sm:$0xff]
  %v292 = vld [vmem:[%s1 + $0x2fc] sm:$0xf]
  %v293 = vld [vmem:[%s1 + $0x300] sm:$0xff]
  %v294 = vld [vmem:[%s1 + $0x308] sm:$0xf]
  %v295 = vld [vmem:[%s1 + $0x30c] sm:$0xff]
  %v296 = vld [vmem:[%s1 + $0x314] sm:$0xf]
  %v297 = vld [vmem:[%s1 + $0x318] sm:$0xff]
  %v298 = vld [vmem:[%s1 + $0x320] sm:$0xf]
  %v299 = vld [vmem:[%s1 + $0x324] sm:$0xff]
  %v300 = vld [vmem:[%s1 + $0x32c] sm:$0xf]
  %v301 = vld [vmem:[%s1 + $0x330] sm:$0xff]
  %v302 = vld [vmem:[%s1 + $0x338] sm:$0xf]
  %v303 = vld [vmem:[%s1 + $0x33c] sm:$0xff]
  %v304 = vld [vmem:[%s1 + $0x344] sm:$0xf]
  %v305 = vld [vmem:[%s1 + $0x348] sm:$0xff]
  %v306 = vld [vmem:[%s1 + $0x350] sm:$0xf]
  %v307 = vld [vmem:[%s1 + $0x354] sm:$0xff]
  %v308 = vld [vmem:[%s1 + $0x35c] sm:$0xf]
  %v309 = vld [vmem:[%s1 + $0x360] sm:$0xff]
  %v310 = vld [vmem:[%s1 + $0x368] sm:$0xf]
  %v311 = vld [vmem:[%s1 + $0x36c] sm:$0xff]
  %v312 = vld [vmem:[%s1 + $0x374] sm:$0xf]
  %v313 = vld [vmem:[%s1 + $0x378] sm:$0xff]
  %v314 = vld [vmem:[%s1 + $0x380] sm:$0xf]
  %v315 = vld [vmem:[%s1 + $0x384] sm:$0xff]
  %v316 = vld [vmem:[%s1 + $0x38c] sm:$0xf]
  %v317 = vld [vmem:[%s1 + $0x390] sm:$0xff]
  %v318 = vld [vmem:[%s1 + $0x398] sm:$0xf]
  %v319 = vld [vmem:[%s1 + $0x39c] sm:$0xff]
  %v320 = vld [vmem:[%s1 + $0x3a4] sm:$0xf]
  %v321 = vld [vmem:[%s1 + $0x3a8] sm:$0xff]
  %v322 = vld [vmem:[%s1 + $0x3b0] sm:$0xf]
  %v323 = vld [vmem:[%s1 + $0x3b4] sm:$0xff]
  %v324 = vld [vmem:[%s1 + $0x3bc] sm:$0xf]
  %v325 = vld [vmem:[%s1 + $0x3c0] sm:$0xff]
  %v326 = vld [vmem:[%s1 + $0x3c8] sm:$0xf]
  %v327 = vld [vmem:[%s1 + $0x3cc] sm:$0xff]
  %v328 = vld [vmem:[%s1 + $0x3d4] sm:$0xf]
  %v329 = vld [vmem:[%s1 + $0x3d8] sm:$0xff]
  %v330 = vld [vmem:[%s1 + $0x3e0] sm:$0xf]
  %v331 = vld [vmem:[%s1 + $0x3e4] sm:$0xff]
  %v332 = vld [vmem:[%s1 + $0x3ec] sm:$0xf]
  %v333 = vld [vmem:[%s1 + $0x3f0] sm:$0xff]
  %v334 = vld [vmem:[%s1 + $0x3f8] sm:$0xf]
  %v335 = vld [vmem:[%s1 + $0x3fc] sm:$0xff]
  %v336 = vld [vmem:[%s1 + $0x404] sm:$0xf]
  %v337 = vld [vmem:[%s1 + $0x408] sm:$0xff]
  %v338 = vld [vmem:[%s1 + $0x410] sm:$0xf]
  %v339 = vld [vmem:[%s1 + $0x414] sm:$0xff]
  %v340 = vld [vmem:[%s1 + $0x41c] sm:$0xf]
  %v341 = vld [vmem:[%s1 + $0x420] sm:$0xff]
  %v342 = vld [vmem:[%s1 + $0x428] sm:$0xf]
  %v343 = vld [vmem:[%s1 + $0x42c] sm:$0xff]
  %v344 = vld [vmem:[%s1 + $0x434] sm:$0xf]
  %v345 = vld [vmem:[%s1 + $0x438] sm:$0xff]
  %v346 = vld [vmem:[%s1 + $0x440] sm:$0xf]
  %v347 = vld [vmem:[%s1 + $0x444] sm:$0xff]
  %v348 = vld [vmem:[%s1 + $0x44c] sm:$0xf]
  %v349 = vld [vmem:[%s1 + $0x450] sm:$0xff]
  %v350 = vld [vmem:[%s1 + $0x458] sm:$0xf]
  %v351 = vld [vmem:[%s1 + $0x45c] sm:$0xff]
  %v352 = vld [vmem:[%s1 + $0x464] sm:$0xf]
  %v353 = vld [vmem:[%s1 + $0x468] sm:$0xff]
  %v354 = vld [vmem:[%s1 + $0x470] sm:$0xf]
  %v355 = vld [vmem:[%s1 + $0x474] sm:$0xff]
  %v356 = vld [vmem:[%s1 + $0x47c] sm:$0xf]
  %v357 = vld [vmem:[%s1 + $0x480] sm:$0xff]
  %v358 = vld [vmem:[%s1 + $0x488] sm:$0xf]
  %v359 = vld [vmem:[%s1 + $0x48c] sm:$0xff]
  %v360 = vld [vmem:[%s1 + $0x494] sm:$0xf]
  %v361 = vld [vmem:[%s1 + $0x498] sm:$0xff]
  %v362 = vld [vmem:[%s1 + $0x4a0] sm:$0xf]
  %v363 = vld [vmem:[%s1 + $0x4a4] sm:$0xff]
  %v364 = vld [vmem:[%s1 + $0x4ac] sm:$0xf]
  %v365 = vld [vmem:[%s1 + $0x4b0] sm:$0xff]
  %v366 = vld [vmem:[%s1 + $0x4b8] sm:$0xf]
  %v367 = vld [vmem:[%s1 + $0x4bc] sm:$0xff]
  %v368 = vld [vmem:[%s1 + $0x4c4] sm:$0xf]
  %v369 = vld [vmem:[%s1 + $0x4c8] sm:$0xff]
  %v370 = vld [vmem:[%s1 + $0x4d0] sm:$0xf]
  %v371 = vld [vmem:[%s1 + $0x4d4] sm:$0xff]
  %v372 = vld [vmem:[%s1 + $0x4dc] sm:$0xf]
  %v373 = vld [vmem:[%s1 + $0x4e0] sm:$0xff]
  %v374 = vld [vmem:[%s1 + $0x4e8] sm:$0xf]
  %v375 = vld [vmem:[%s1 + $0x4ec] sm:$0xff]
  %v376 = vld [vmem:[%s1 + $0x4f4] sm:$0xf]
  %v377 = vld [vmem:[%s1 + $0x4f8] sm:$0xff]
  %v378 = vld [vmem:[%s1 + $0x500] sm:$0xf]
  %v379 = vld [vmem:[%s1 + $0x504] sm:$0xff]
  %v380 = vld [vmem:[%s1 + $0x50c] sm:$0xf]
  %v381 = vld [vmem:[%s1 + $0x510] sm:$0xff]
  %v382 = vld [vmem:[%s1 + $0x518] sm:$0xf]
  %v383 = vld [vmem:[%s1 + $0x51c] sm:$0xff]
  %v384 = vld [vmem:[%s1 + $0x524] sm:$0xf]
  %v385 = vld [vmem:[%s1 + $0x528] sm:$0xff]
  %v386 = vld [vmem:[%s1 + $0x530] sm:$0xf]
  %v387 = vld [vmem:[%s1 + $0x534] sm:$0xff]
  %v388 = vld [vmem:[%s1 + $0x53c] sm:$0xf]
  %v389 = vld [vmem:[%s1 + $0x540] sm:$0xff]
  %v390 = vld [vmem:[%s1 + $0x548] sm:$0xf]
  %v391 = vld [vmem:[%s1 + $0x54c] sm:$0xff]
  %v392 = vld [vmem:[%s1 + $0x554] sm:$0xf]
  %v393 = vld [vmem:[%s1 + $0x558] sm:$0xff]
  %v394 = vld [vmem:[%s1 + $0x560] sm:$0xf]
  %v395 = vld [vmem:[%s1 + $0x564] sm:$0xff]
  %v396 = vld [vmem:[%s1 + $0x56c] sm:$0xf]
  %v397 = vld [vmem:[%s1 + $0x570] sm:$0xff]
  %v398 = vld [vmem:[%s1 + $0x578] sm:$0xf]
  %v399 = vld [vmem:[%s1 + $0x57c] sm:$0xff]
  %v400 = vld [vmem:[%s1 + $0x584] sm:$0xf]
  %v401 = vld [vmem:[%s1 + $0x588] sm:$0xff]
  %v402 = vld [vmem:[%s1 + $0x590] sm:$0xf]
  %v403 = vld [vmem:[%s1 + $0x594] sm:$0xff]
  %v404 = vld [vmem:[%s1 + $0x59c] sm:$0xf]
  %v405 = vld [vmem:[%s1 + $0x5a0] sm:$0xff]
  %v406 = vld [vmem:[%s1 + $0x5a8] sm:$0xf]
  %v407 = vld [vmem:[%s1 + $0x5ac] sm:$0xff]
  %v408 = vld [vmem:[%s1 + $0x5b4] sm:$0xf]
  %v409 = vld [vmem:[%s1 + $0x5b8] sm:$0xff]
  %v410 = vld [vmem:[%s1 + $0x5c0] sm:$0xf]
  %v411 = vld [vmem:[%s1 + $0x5c4] sm:$0xff]
  %v412 = vld [vmem:[%s1 + $0x5cc] sm:$0xf]
  %v413 = vld [vmem:[%s1 + $0x5d0] sm:$0xff]
  %v414 = vld [vmem:[%s1 + $0x5d8] sm:$0xf]
  %v415 = vld [vmem:[%s1 + $0x5dc] sm:$0xff]
  %v416 = vld [vmem:[%s1 + $0x5e4] sm:$0xf]
  %v417 = vld [vmem:[%s1 + $0x5e8] sm:$0xff]
  %v418 = vld [vmem:[%s1 + $0x5f0] sm:$0xf]
  %v419 = vld [vmem:[%s1 + $0x5f4] sm:$0xff]
  %v420 = vld [vmem:[%s1 + $0x5fc] sm:$0xf]
  %v421 = vld [vmem:[%s1 + $0x600] sm:$0xff]
  %v422 = vld [vmem:[%s1 + $0x608] sm:$0xf]
  %v423 = vld [vmem:[%s1 + $0x60c] sm:$0xff]
  %v424 = vld [vmem:[%s1 + $0x614] sm:$0xf]
  %v425 = vld [vmem:[%s1 + $0x618] sm:$0xff]
  %v426 = vld [vmem:[%s1 + $0x620] sm:$0xf]
  %v427 = vld [vmem:[%s1 + $0x624] sm:$0xff]
  %v428 = vld [vmem:[%s1 + $0x62c] sm:$0xf]
  %v429 = vld [vmem:[%s1 + $0x630] sm:$0xff]
  %v430 = vld [vmem:[%s1 + $0x638] sm:$0xf]
  %v431 = vld [vmem:[%s1 + $0x63c] sm:$0xff]
  %v432 = vld [vmem:[%s1 + $0x644] sm:$0xf]
  %v433 = vld [vmem:[%s1 + $0x648] sm:$0xff]
  %v434 = vld [vmem:[%s1 + $0x650] sm:$0xf]
  %v435 = vld [vmem:[%s1 + $0x654] sm:$0xff]
  %v436 = vld [vmem:[%s1 + $0x65c] sm:$0xf]
  %v437 = vld [vmem:[%s1 + $0x660] sm:$0xff]
  %v438 = vld [vmem:[%s1 + $0x668] sm:$0xf]
  %v439 = vld [vmem:[%s1 + $0x66c] sm:$0xff]
  %v440 = vld [vmem:[%s1 + $0x674] sm:$0xf]
  %v441 = vld [vmem:[%s1 + $0x678] sm:$0xff]
  %v442 = vld [vmem:[%s1 + $0x680] sm:$0xf]
  %v443 = vld [vmem:[%s1 + $0x684] sm:$0xff]
  %v444 = vld [vmem:[%s1 + $0x68c] sm:$0xf]
  %v445 = vld [vmem:[%s1 + $0x690] sm:$0xff]
  %v446 = vld [vmem:[%s1 + $0x698] sm:$0xf]
  %v447 = vld [vmem:[%s1 + $0x69c] sm:$0xff]
  %v448 = vld [vmem:[%s1 + $0x6a4] sm:$0xf]
  %v449 = vld [vmem:[%s1 + $0x6a8] sm:$0xff]
  %v450 = vld [vmem:[%s1 + $0x6b0] sm:$0xf]
  %v451 = vld [vmem:[%s1 + $0x6b4] sm:$0xff]
  %v452 = vld [vmem:[%s1 + $0x6bc] sm:$0xf]
  %v453 = vld [vmem:[%s1 + $0x6c0] sm:$0xff]
  %v454 = vld [vmem:[%s1 + $0x6c8] sm:$0xf]
  %v455 = vld [vmem:[%s1 + $0x6cc] sm:$0xff]
  %v456 = vld [vmem:[%s1 + $0x6d4] sm:$0xf]
  %v457 = vld [vmem:[%s1 + $0x6d8] sm:$0xff]
  %v458 = vld [vmem:[%s1 + $0x6e0] sm:$0xf]
  %v459 = vld [vmem:[%s1 + $0x6e4] sm:$0xff]
  %v460 = vld [vmem:[%s1 + $0x6ec] sm:$0xf]
  %v461 = vld [vmem:[%s1 + $0x6f0] sm:$0xff]
  %v462 = vld [vmem:[%s1 + $0x6f8] sm:$0xf]
  %v463 = vld [vmem:[%s1 + $0x6fc] sm:$0xff]
  %v464 = vld [vmem:[%s1 + $0x704] sm:$0xf]
  %v465 = vld [vmem:[%s1 + $0x708] sm:$0xff]
  %v466 = vld [vmem:[%s1 + $0x710] sm:$0xf]
  %v467 = vld [vmem:[%s1 + $0x714] sm:$0xff]
  %v468 = vld [vmem:[%s1 + $0x71c] sm:$0xf]
  %v469 = vld [vmem:[%s1 + $0x720] sm:$0xff]
  %v470 = vld [vmem:[%s1 + $0x728] sm:$0xf]
  %v471 = vld [vmem:[%s1 + $0x72c] sm:$0xff]
  %v472 = vld [vmem:[%s1 + $0x734] sm:$0xf]
  %v473 = vld [vmem:[%s1 + $0x738] sm:$0xff]
  %v474 = vld [vmem:[%s1 + $0x740] sm:$0xf]
  %v475 = vld [vmem:[%s1 + $0x744] sm:$0xff]
  %v476 = vld [vmem:[%s1 + $0x74c] sm:$0xf]
  %v477 = vld [vmem:[%s1 + $0x750] sm:$0xff]
  %v478 = vld [vmem:[%s1 + $0x758] sm:$0xf]
  %v479 = vld [vmem:[%s1 + $0x75c] sm:$0xff]
  %v480 = vld [vmem:[%s1 + $0x764] sm:$0xf]
  %v481 = vld [vmem:[%s1 + $0x768] sm:$0xff]
  %v482 = vld [vmem:[%s1 + $0x770] sm:$0xf]
  %v483 = vld [vmem:[%s1 + $0x774] sm:$0xff]
  %v484 = vld [vmem:[%s1 + $0x77c] sm:$0xf]
  %v485 = vld [vmem:[%s1 + $0x780] sm:$0xff]
  %v486 = vld [vmem:[%s1 + $0x788] sm:$0xf]
  %v487 = vld [vmem:[%s1 + $0x78c] sm:$0xff]
  %v488 = vld [vmem:[%s1 + $0x794] sm:$0xf]
  %v489 = vld [vmem:[%s1 + $0x798] sm:$0xff]
  %v490 = vld [vmem:[%s1 + $0x7a0] sm:$0xf]
  %v491 = vld [vmem:[%s1 + $0x7a4] sm:$0xff]
  %v492 = vld [vmem:[%s1 + $0x7ac] sm:$0xf]
  %v493 = vld [vmem:[%s1 + $0x7b0] sm:$0xff]
  %v494 = vld [vmem:[%s1 + $0x7b8] sm:$0xf]
  %v495 = vld [vmem:[%s1 + $0x7bc] sm:$0xff]
  %v496 = vld [vmem:[%s1 + $0x7c4] sm:$0xf]
  %v497 = vld [vmem:[%s1 + $0x7c8] sm:$0xff]
  %v498 = vld [vmem:[%s1 + $0x7d0] sm:$0xf]
  %v499 = vld [vmem:[%s1 + $0x7d4] sm:$0xff]
  %v500 = vld [vmem:[%s1 + $0x7dc] sm:$0xf]
  %v501 = vld [vmem:[%s1 + $0x7e0] sm:$0xff]
  %v502 = vld [vmem:[%s1 + $0x7e8] sm:$0xf]
  %v503 = vld [vmem:[%s1 + $0x7ec] sm:$0xff]
  %v504 = vld [vmem:[%s1 + $0x7f4] sm:$0xf]
  %v505 = vld [vmem:[%s1 + $0x7f8] sm:$0xff]
  %v506 = vld [vmem:[%s1 + $0x800] sm:$0xf]
  %v507 = vld [vmem:[%s1 + $0x804] sm:$0xff]
  %v508 = vld [vmem:[%s1 + $0x80c] sm:$0xf]
  %v509 = vld [vmem:[%s1 + $0x810] sm:$0xff]
  %v510 = vld [vmem:[%s1 + $0x818] sm:$0xf]
  %v511 = vld [vmem:[%s1 + $0x81c] sm:$0xff]
  %v512 = vld [vmem:[%s1 + $0x824] sm:$0xf]
  %v513 = vld [vmem:[%s1 + $0x828] sm:$0xff]
  %v514 = vld [vmem:[%s1 + $0x830] sm:$0xf]
  %v515 = vld [vmem:[%s1 + $0x834] sm:$0xff]
  %v516 = vld [vmem:[%s1 + $0x83c] sm:$0xf]
  %v517 = vld [vmem:[%s1 + $0x840] sm:$0xff]
  %v518 = vld [vmem:[%s1 + $0x848] sm:$0xf]
  %v519 = vld [vmem:[%s1 + $0x84c] sm:$0xff]
  %v520 = vld [vmem:[%s1 + $0x854] sm:$0xf]
  %v521 = vld [vmem:[%s1 + $0x858] sm:$0xff]
  %v522 = vld [vmem:[%s1 + $0x860] sm:$0xf]
  %v523 = vld [vmem:[%s1 + $0x864] sm:$0xff]
  %v524 = vld [vmem:[%s1 + $0x86c] sm:$0xf]
  %v525 = vld [vmem:[%s1 + $0x870] sm:$0xff]
  %v526 = vld [vmem:[%s1 + $0x878] sm:$0xf]
  %v527 = vld [vmem:[%s1 + $0x87c] sm:$0xff]
  %v528 = vld [vmem:[%s1 + $0x884] sm:$0xf]
  %v529 = vld [vmem:[%s1 + $0x888] sm:$0xff]
  %v530 = vld [vmem:[%s1 + $0x890] sm:$0xf]
  %v531 = vld [vmem:[%s1 + $0x894] sm:$0xff]
  %v532 = vld [vmem:[%s1 + $0x89c] sm:$0xf]
  %v533 = vld [vmem:[%s1 + $0x8a0] sm:$0xff]
  %v534 = vld [vmem:[%s1 + $0x8a8] sm:$0xf]
  %v535 = vld [vmem:[%s1 + $0x8ac] sm:$0xff]
  %v536 = vld [vmem:[%s1 + $0x8b4] sm:$0xf]
  %v537 = vld [vmem:[%s1 + $0x8b8] sm:$0xff]
  %v538 = vld [vmem:[%s1 + $0x8c0] sm:$0xf]
  %v539 = vld [vmem:[%s1 + $0x8c4] sm:$0xff]
  %v540 = vld [vmem:[%s1 + $0x8cc] sm:$0xf]
  %v541 = vld [vmem:[%s1 + $0x8d0] sm:$0xff]
  %v542 = vld [vmem:[%s1 + $0x8d8] sm:$0xf]
  %v543 = vld [vmem:[%s1 + $0x8dc] sm:$0xff]
  %v544 = vld [vmem:[%s1 + $0x8e4] sm:$0xf]
  %v545 = vld [vmem:[%s1 + $0x8e8] sm:$0xff]
  %v546 = vld [vmem:[%s1 + $0x8f0] sm:$0xf]
  %v547 = vld [vmem:[%s1 + $0x8f4] sm:$0xff]
  %v548 = vld [vmem:[%s1 + $0x8fc] sm:$0xf]
  %v549 = vld [vmem:[%s2] sm:$0x7]
  %v551 = vlaneseq
  %v552 = vshrl.u32 %v551, 7
  %v553 = vsub.s32 0, %v552
  %v554 = vrot.slane %v549, %v553
  %v555 = vlaneseq
  %v556 = vshrl.u32 %v555, 7
  %v557 = vsub.s32 1, %v556
  %v558 = vrot.slane %v549, %v557
  %v559 = vlaneseq
  %v560 = vshrl.u32 %v559, 7
  %v561 = vsub.s32 2, %v560
  %v562 = vrot.slane %v549, %v561
  %v716 = vunpack.c.l.b16 %v15
  %v717 = vunpack.c.h.b16 %v15
  %v718 = vunpack.c.l.b16 %v16
  %v719 = vunpack.c.h.b16 %v16
  %v720 = vunpack.c.l.b16 %v17
  %v721 = vunpack.c.h.b16 %v17
  %v722 = vunpack.c.l.b16 %v18
  %v723 = vunpack.c.h.b16 %v18
  %v724 = vunpack.c.l.b16 %v19
  %v725 = vunpack.c.h.b16 %v19
  %v726 = vunpack.c.l.b16 %v20
  %v727 = vunpack.c.h.b16 %v20
  %v728 = vunpack.c.l.b16 %v21
  %v729 = vunpack.c.h.b16 %v21
  %v730 = vunpack.c.l.b16 %v22
  %v731 = vunpack.c.h.b16 %v22
  %v732 = vunpack.c.l.b16 %v23
  %v733 = vunpack.c.h.b16 %v23
  %v734 = vunpack.c.l.b16 %v24
  %v735 = vunpack.c.h.b16 %v24
  %v736 = vunpack.c.l.b16 %v25
  %v737 = vunpack.c.h.b16 %v25
  %v738 = vunpack.c.l.b16 %v26
  %v739 = vunpack.c.h.b16 %v26
  %v740 = vunpack.c.l.b16 %v27
  %v741 = vunpack.c.h.b16 %v27
  %v742 = vunpack.c.l.b16 %v28
  %v743 = vunpack.c.h.b16 %v28
  %v744 = vunpack.c.l.b16 %v29
  %v745 = vunpack.c.h.b16 %v29
  %v746 = vunpack.c.l.b16 %v30
  %v747 = vunpack.c.h.b16 %v30
  %v748 = vunpack.c.l.b16 %v31
  %v749 = vunpack.c.h.b16 %v31
  %v750 = vunpack.c.l.b16 %v32
  %v751 = vunpack.c.h.b16 %v32
  %v752 = vunpack.c.l.b16 %v33
  %v753 = vunpack.c.h.b16 %v33
  %v754 = vunpack.c.l.b16 %v34
  %v755 = vunpack.c.h.b16 %v34
  %v756 = vunpack.c.l.b16 %v35
  %v757 = vunpack.c.h.b16 %v35
  %v758 = vunpack.c.l.b16 %v36
  %v759 = vunpack.c.h.b16 %v36
  %v760 = vunpack.c.l.b16 %v37
  %v761 = vunpack.c.h.b16 %v37
  %v762 = vunpack.c.l.b16 %v38
  %v763 = vunpack.c.h.b16 %v38
  %v764 = vunpack.c.l.b16 %v39
  %v765 = vunpack.c.h.b16 %v39
  %v766 = vunpack.c.l.b16 %v40
  %v767 = vunpack.c.h.b16 %v40
  %v768 = vunpack.c.l.b16 %v41
  %v769 = vunpack.c.h.b16 %v41
  %v770 = vunpack.c.l.b16 %v42
  %v771 = vunpack.c.h.b16 %v42
  %v772 = vunpack.c.l.b16 %v43
  %v773 = vunpack.c.h.b16 %v43
  %v774 = vunpack.c.l.b16 %v44
  %v775 = vunpack.c.h.b16 %v44
  %v776 = vunpack.c.l.b16 %v45
  %v777 = vunpack.c.h.b16 %v45
  %v778 = vunpack.c.l.b16 %v46
  %v779 = vunpack.c.h.b16 %v46
  %v780 = vunpack.c.l.b16 %v47
  %v781 = vunpack.c.h.b16 %v47
  %v782 = vunpack.c.l.b16 %v48
  %v783 = vunpack.c.h.b16 %v48
  %v784 = vunpack.c.l.b16 %v49
  %v785 = vunpack.c.h.b16 %v49
  %v786 = vunpack.c.l.b16 %v50
  %v787 = vunpack.c.h.b16 %v50
  %v788 = vunpack.c.l.b16 %v51
  %v789 = vunpack.c.h.b16 %v51
  %v790 = vunpack.c.l.b16 %v52
  %v791 = vunpack.c.h.b16 %v52
  %v792 = vunpack.c.l.b16 %v53
  %v793 = vunpack.c.h.b16 %v53
  %v794 = vunpack.c.l.b16 %v54
  %v795 = vunpack.c.h.b16 %v54
  %v796 = vunpack.c.l.b16 %v55
  %v797 = vunpack.c.h.b16 %v55
  %v798 = vunpack.c.l.b16 %v56
  %v799 = vunpack.c.h.b16 %v56
  %v800 = vunpack.c.l.b16 %v57
  %v801 = vunpack.c.h.b16 %v57
  %v802 = vunpack.c.l.b16 %v58
  %v803 = vunpack.c.h.b16 %v58
  %v804 = vunpack.c.l.b16 %v59
  %v805 = vunpack.c.h.b16 %v59
  %v806 = vunpack.c.l.b16 %v60
  %v807 = vunpack.c.h.b16 %v60
  %v808 = vunpack.c.l.b16 %v61
  %v809 = vunpack.c.h.b16 %v61
  %v810 = vunpack.c.l.b16 %v62
  %v811 = vunpack.c.h.b16 %v62
  %v812 = vunpack.c.l.b16 %v63
  %v813 = vunpack.c.h.b16 %v63
  %v814 = vunpack.c.l.b16 %v64
  %v815 = vunpack.c.h.b16 %v64
  %v816 = vunpack.c.l.b16 %v65
  %v817 = vunpack.c.h.b16 %v65
  %v818 = vunpack.c.l.b16 %v66
  %v819 = vunpack.c.h.b16 %v66
  %v820 = vunpack.c.l.b16 %v67
  %v821 = vunpack.c.h.b16 %v67
  %v822 = vunpack.c.l.b16 %v68
  %v823 = vunpack.c.h.b16 %v68
  %v824 = vunpack.c.l.b16 %v69
  %v825 = vunpack.c.h.b16 %v69
  %v826 = vunpack.c.l.b16 %v70
  %v827 = vunpack.c.h.b16 %v70
  %v828 = vunpack.c.l.b16 %v71
  %v829 = vunpack.c.h.b16 %v71
  %v830 = vunpack.c.l.b16 %v72
  %v831 = vunpack.c.h.b16 %v72
  %v832 = vunpack.c.l.b16 %v73
  %v833 = vunpack.c.h.b16 %v73
  %v834 = vunpack.c.l.b16 %v74
  %v835 = vunpack.c.h.b16 %v74
  %v836 = vunpack.c.l.b16 %v75
  %v837 = vunpack.c.h.b16 %v75
  %v838 = vunpack.c.l.b16 %v76
  %v839 = vunpack.c.h.b16 %v76
  %v840 = vunpack.c.l.b16 %v77
  %v841 = vunpack.c.h.b16 %v77
  %v842 = vunpack.c.l.b16 %v78
  %v843 = vunpack.c.h.b16 %v78
  %v844 = vunpack.c.l.b16 %v79
  %v845 = vunpack.c.h.b16 %v79
  %v846 = vunpack.c.l.b16 %v80
  %v847 = vunpack.c.h.b16 %v80
  %v848 = vunpack.c.l.b16 %v81
  %v849 = vunpack.c.h.b16 %v81
  %v850 = vunpack.c.l.b16 %v82
  %v851 = vunpack.c.h.b16 %v82
  %v852 = vunpack.c.l.b16 %v83
  %v853 = vunpack.c.h.b16 %v83
  %v854 = vunpack.c.l.b16 %v84
  %v855 = vunpack.c.h.b16 %v84
  %v856 = vunpack.c.l.b16 %v85
  %v857 = vunpack.c.h.b16 %v85
  %v858 = vunpack.c.l.b16 %v86
  %v859 = vunpack.c.h.b16 %v86
  %v860 = vunpack.c.l.b16 %v87
  %v861 = vunpack.c.h.b16 %v87
  %v862 = vunpack.c.l.b16 %v88
  %v863 = vunpack.c.h.b16 %v88
  %v864 = vunpack.c.l.b16 %v89
  %v865 = vunpack.c.h.b16 %v89
  %v866 = vunpack.c.l.b16 %v90
  %v867 = vunpack.c.h.b16 %v90
  %v868 = vunpack.c.l.b16 %v91
  %v869 = vunpack.c.h.b16 %v91
  %v870 = vunpack.c.l.b16 %v92
  %v871 = vunpack.c.h.b16 %v92
  %v872 = vunpack.c.l.b16 %v93
  %v873 = vunpack.c.h.b16 %v93
  %v874 = vunpack.c.l.b16 %v94
  %v875 = vunpack.c.h.b16 %v94
  %v876 = vunpack.c.l.b16 %v95
  %v877 = vunpack.c.h.b16 %v95
  %v878 = vunpack.c.l.b16 %v96
  %v879 = vunpack.c.h.b16 %v96
  %v880 = vunpack.c.l.b16 %v97
  %v881 = vunpack.c.h.b16 %v97
  %v882 = vunpack.c.l.b16 %v98
  %v883 = vunpack.c.h.b16 %v98
  %v884 = vunpack.c.l.b16 %v99
  %v885 = vunpack.c.h.b16 %v99
  %v886 = vunpack.c.l.b16 %v100
  %v887 = vunpack.c.h.b16 %v100
  %v888 = vunpack.c.l.b16 %v101
  %v889 = vunpack.c.h.b16 %v101
  %v890 = vunpack.c.l.b16 %v102
  %v891 = vunpack.c.h.b16 %v102
  %v892 = vunpack.c.l.b16 %v103
  %v893 = vunpack.c.h.b16 %v103
  %v894 = vunpack.c.l.b16 %v104
  %v895 = vunpack.c.h.b16 %v104
  %v896 = vunpack.c.l.b16 %v105
  %v897 = vunpack.c.h.b16 %v105
  %v898 = vunpack.c.l.b16 %v106
  %v899 = vunpack.c.h.b16 %v106
  %v900 = vunpack.c.l.b16 %v107
  %v901 = vunpack.c.h.b16 %v107
  %v902 = vunpack.c.l.b16 %v108
  %v903 = vunpack.c.h.b16 %v108
  %v904 = vunpack.c.l.b16 %v109
  %v905 = vunpack.c.h.b16 %v109
  %v906 = vunpack.c.l.b16 %v110
  %v907 = vunpack.c.h.b16 %v110
  %v908 = vunpack.c.l.b16 %v111
  %v909 = vunpack.c.h.b16 %v111
  %v910 = vunpack.c.l.b16 %v112
  %v911 = vunpack.c.h.b16 %v112
  %v912 = vunpack.c.l.b16 %v113
  %v913 = vunpack.c.h.b16 %v113
  %v914 = vunpack.c.l.b16 %v114
  %v915 = vunpack.c.h.b16 %v114
  %v916 = vunpack.c.l.b16 %v115
  %v917 = vunpack.c.h.b16 %v115
  %v918 = vunpack.c.l.b16 %v116
  %v919 = vunpack.c.h.b16 %v116
  %v920 = vunpack.c.l.b16 %v117
  %v921 = vunpack.c.h.b16 %v117
  %v922 = vunpack.c.l.b16 %v118
  %v923 = vunpack.c.h.b16 %v118
  %v924 = vunpack.c.l.b16 %v119
  %v925 = vunpack.c.h.b16 %v119
  %v926 = vunpack.c.l.b16 %v120
  %v927 = vunpack.c.h.b16 %v120
  %v928 = vunpack.c.l.b16 %v121
  %v929 = vunpack.c.h.b16 %v121
  %v930 = vunpack.c.l.b16 %v122
  %v931 = vunpack.c.h.b16 %v122
  %v932 = vunpack.c.l.b16 %v123
  %v933 = vunpack.c.h.b16 %v123
  %v934 = vunpack.c.l.b16 %v124
  %v935 = vunpack.c.h.b16 %v124
  %v936 = vunpack.c.l.b16 %v125
  %v937 = vunpack.c.h.b16 %v125
  %v938 = vunpack.c.l.b16 %v126
  %v939 = vunpack.c.h.b16 %v126
  %v940 = vunpack.c.l.b16 %v127
  %v941 = vunpack.c.h.b16 %v127
  %v942 = vunpack.c.l.b16 %v128
  %v943 = vunpack.c.h.b16 %v128
  %v944 = vunpack.c.l.b16 %v129
  %v945 = vunpack.c.h.b16 %v129
  %v946 = vunpack.c.l.b16 %v130
  %v947 = vunpack.c.h.b16 %v130
  %v948 = vunpack.c.l.b16 %v131
  %v949 = vunpack.c.h.b16 %v131
  %v950 = vunpack.c.l.b16 %v132
  %v951 = vunpack.c.h.b16 %v132
  %v952 = vunpack.c.l.b16 %v133
  %v953 = vunpack.c.h.b16 %v133
  %v954 = vunpack.c.l.b16 %v134
  %v955 = vunpack.c.h.b16 %v134
  %v956 = vunpack.c.l.b16 %v135
  %v957 = vunpack.c.h.b16 %v135
  %v958 = vunpack.c.l.b16 %v136
  %v959 = vunpack.c.h.b16 %v136
  %v960 = vunpack.c.l.b16 %v137
  %v961 = vunpack.c.h.b16 %v137
  %v962 = vunpack.c.l.b16 %v138
  %v963 = vunpack.c.h.b16 %v138
  %v964 = vunpack.c.l.b16 %v139
  %v965 = vunpack.c.h.b16 %v139
  %v966 = vunpack.c.l.b16 %v140
  %v967 = vunpack.c.h.b16 %v140
  %v968 = vunpack.c.l.b16 %v141
  %v969 = vunpack.c.h.b16 %v141
  %v970 = vunpack.c.l.b16 %v142
  %v971 = vunpack.c.h.b16 %v142
  %v972 = vunpack.c.l.b16 %v143
  %v973 = vunpack.c.h.b16 %v143
  %v974 = vunpack.c.l.b16 %v144
  %v975 = vunpack.c.h.b16 %v144
  %v976 = vunpack.c.l.b16 %v145
  %v977 = vunpack.c.h.b16 %v145
  %v978 = vunpack.c.l.b16 %v146
  %v979 = vunpack.c.h.b16 %v146
  %v980 = vunpack.c.l.b16 %v147
  %v981 = vunpack.c.h.b16 %v147
  %v982 = vunpack.c.l.b16 %v148
  %v983 = vunpack.c.h.b16 %v148
  %v984 = vunpack.c.l.b16 %v149
  %v985 = vunpack.c.h.b16 %v149
  %v986 = vunpack.c.l.b16 %v150
  %v987 = vunpack.c.h.b16 %v150
  %v988 = vunpack.c.l.b16 %v151
  %v989 = vunpack.c.h.b16 %v151
  %v990 = vunpack.c.l.b16 %v152
  %v991 = vunpack.c.h.b16 %v152
  %v992 = vunpack.c.l.b16 %v153
  %v993 = vunpack.c.h.b16 %v153
  %v994 = vunpack.c.l.b16 %v154
  %v995 = vunpack.c.h.b16 %v154
  %v996 = vunpack.c.l.b16 %v155
  %v997 = vunpack.c.h.b16 %v155
  %v998 = vunpack.c.l.b16 %v156
  %v999 = vunpack.c.h.b16 %v156
  %v1000 = vunpack.c.l.b16 %v157
  %v1001 = vunpack.c.h.b16 %v157
  %v1002 = vunpack.c.l.b16 %v158
  %v1003 = vunpack.c.h.b16 %v158
  %v1004 = vunpack.c.l.b16 %v159
  %v1005 = vunpack.c.h.b16 %v159
  %v1006 = vunpack.c.l.b16 %v160
  %v1007 = vunpack.c.h.b16 %v160
  %v1008 = vunpack.c.l.b16 %v161
  %v1009 = vunpack.c.h.b16 %v161
  %v1010 = vunpack.c.l.b16 %v162
  %v1011 = vunpack.c.h.b16 %v162
  %v1012 = vunpack.c.l.b16 %v163
  %v1013 = vunpack.c.h.b16 %v163
  %v1014 = vunpack.c.l.b16 %v164
  %v1015 = vunpack.c.h.b16 %v164
  %v1016 = vpack.c.b16 %v728, %v716
  %v1017 = vpack.c.b16 %v729, %v717
  %v1018 = vpack.c.b16 %v730, %v718
  %v1019 = vpack.c.b16 %v731, %v719
  %v1020 = vpack.c.b16 %v732, %v720
  %v1021 = vpack.c.b16 %v733, %v721
  %v1022 = vpack.c.b16 %v734, %v722
  %v1023 = vpack.c.b16 %v735, %v723
  %v1024 = vpack.c.b16 %v736, %v724
  %v1025 = vpack.c.b16 %v737, %v725
  %v1026 = vpack.c.b16 %v738, %v726
  %v1027 = vpack.c.b16 %v739, %v727
  %v1028 = vpack.c.b16 %v752, %v740
  %v1029 = vpack.c.b16 %v753, %v741
  %v1030 = vpack.c.b16 %v754, %v742
  %v1031 = vpack.c.b16 %v755, %v743
  %v1032 = vpack.c.b16 %v756, %v744
  %v1033 = vpack.c.b16 %v757, %v745
  %v1034 = vpack.c.b16 %v758, %v746
  %v1035 = vpack.c.b16 %v759, %v747
  %v1036 = vpack.c.b16 %v760, %v748
  %v1037 = vpack.c.b16 %v761, %v749
  %v1038 = vpack.c.b16 %v762, %v750
  %v1039 = vpack.c.b16 %v763, %v751
  %v1040 = vpack.c.b16 %v776, %v764
  %v1041 = vpack.c.b16 %v777, %v765
  %v1042 = vpack.c.b16 %v778, %v766
  %v1043 = vpack.c.b16 %v779, %v767
  %v1044 = vpack.c.b16 %v780, %v768
  %v1045 = vpack.c.b16 %v781, %v769
  %v1046 = vpack.c.b16 %v782, %v770
  %v1047 = vpack.c.b16 %v783, %v771
  %v1048 = vpack.c.b16 %v784, %v772
  %v1049 = vpack.c.b16 %v785, %v773
  %v1050 = vpack.c.b16 %v786, %v774
  %v1051 = vpack.c.b16 %v787, %v775
  %v1052 = vpack.c.b16 %v800, %v788
  %v1053 = vpack.c.b16 %v801, %v789
  %v1054 = vpack.c.b16 %v802, %v790
  %v1055 = vpack.c.b16 %v803, %v791
  %v1056 = vpack.c.b16 %v804, %v792
  %v1057 = vpack.c.b16 %v805, %v793
  %v1058 = vpack.c.b16 %v806, %v794
  %v1059 = vpack.c.b16 %v807, %v795
  %v1060 = vpack.c.b16 %v808, %v796
  %v1061 = vpack.c.b16 %v809, %v797
  %v1062 = vpack.c.b16 %v810, %v798
  %v1063 = vpack.c.b16 %v811, %v799
  %v1064 = vpack.c.b16 %v824, %v812
  %v1065 = vpack.c.b16 %v825, %v813
  %v1066 = vpack.c.b16 %v826, %v814
  %v1067 = vpack.c.b16 %v827, %v815
  %v1068 = vpack.c.b16 %v828, %v816
  %v1069 = vpack.c.b16 %v829, %v817
  %v1070 = vpack.c.b16 %v830, %v818
  %v1071 = vpack.c.b16 %v831, %v819
  %v1072 = vpack.c.b16 %v832, %v820
  %v1073 = vpack.c.b16 %v833, %v821
  %v1074 = vpack.c.b16 %v834, %v822
  %v1075 = vpack.c.b16 %v835, %v823
  %v1076 = vpack.c.b16 %v848, %v836
  %v1077 = vpack.c.b16 %v849, %v837
  %v1078 = vpack.c.b16 %v850, %v838
  %v1079 = vpack.c.b16 %v851, %v839
  %v1080 = vpack.c.b16 %v852, %v840
  %v1081 = vpack.c.b16 %v853, %v841
  %v1082 = vpack.c.b16 %v854, %v842
  %v1083 = vpack.c.b16 %v855, %v843
  %v1084 = vpack.c.b16 %v856, %v844
  %v1085 = vpack.c.b16 %v857, %v845
  %v1086 = vpack.c.b16 %v858, %v846
  %v1087 = vpack.c.b16 %v859, %v847
  %v1088 = vpack.c.b16 %v872, %v860
  %v1089 = vpack.c.b16 %v873, %v861
  %v1090 = vpack.c.b16 %v874, %v862
  %v1091 = vpack.c.b16 %v875, %v863
  %v1092 = vpack.c.b16 %v876, %v864
  %v1093 = vpack.c.b16 %v877, %v865
  %v1094 = vpack.c.b16 %v878, %v866
  %v1095 = vpack.c.b16 %v879, %v867
  %v1096 = vpack.c.b16 %v880, %v868
  %v1097 = vpack.c.b16 %v881, %v869
  %v1098 = vpack.c.b16 %v882, %v870
  %v1099 = vpack.c.b16 %v883, %v871
  %v1100 = vpack.c.b16 %v896, %v884
  %v1101 = vpack.c.b16 %v897, %v885
  %v1102 = vpack.c.b16 %v898, %v886
  %v1103 = vpack.c.b16 %v899, %v887
  %v1104 = vpack.c.b16 %v900, %v888
  %v1105 = vpack.c.b16 %v901, %v889
  %v1106 = vpack.c.b16 %v902, %v890
  %v1107 = vpack.c.b16 %v903, %v891
  %v1108 = vpack.c.b16 %v904, %v892
  %v1109 = vpack.c.b16 %v905, %v893
  %v1110 = vpack.c.b16 %v906, %v894
  %v1111 = vpack.c.b16 %v907, %v895
  %v1112 = vpack.c.b16 %v920, %v908
  %v1113 = vpack.c.b16 %v921, %v909
  %v1114 = vpack.c.b16 %v922, %v910
  %v1115 = vpack.c.b16 %v923, %v911
  %v1116 = vpack.c.b16 %v924, %v912
  %v1117 = vpack.c.b16 %v925, %v913
  %v1118 = vpack.c.b16 %v926, %v914
  %v1119 = vpack.c.b16 %v927, %v915
  %v1120 = vpack.c.b16 %v928, %v916
  %v1121 = vpack.c.b16 %v929, %v917
  %v1122 = vpack.c.b16 %v930, %v918
  %v1123 = vpack.c.b16 %v931, %v919
  %v1124 = vpack.c.b16 %v944, %v932
  %v1125 = vpack.c.b16 %v945, %v933
  %v1126 = vpack.c.b16 %v946, %v934
  %v1127 = vpack.c.b16 %v947, %v935
  %v1128 = vpack.c.b16 %v948, %v936
  %v1129 = vpack.c.b16 %v949, %v937
  %v1130 = vpack.c.b16 %v950, %v938
  %v1131 = vpack.c.b16 %v951, %v939
  %v1132 = vpack.c.b16 %v952, %v940
  %v1133 = vpack.c.b16 %v953, %v941
  %v1134 = vpack.c.b16 %v954, %v942
  %v1135 = vpack.c.b16 %v955, %v943
  %v1136 = vpack.c.b16 %v968, %v956
  %v1137 = vpack.c.b16 %v969, %v957
  %v1138 = vpack.c.b16 %v970, %v958
  %v1139 = vpack.c.b16 %v971, %v959
  %v1140 = vpack.c.b16 %v972, %v960
  %v1141 = vpack.c.b16 %v973, %v961
  %v1142 = vpack.c.b16 %v974, %v962
  %v1143 = vpack.c.b16 %v975, %v963
  %v1144 = vpack.c.b16 %v976, %v964
  %v1145 = vpack.c.b16 %v977, %v965
  %v1146 = vpack.c.b16 %v978, %v966
  %v1147 = vpack.c.b16 %v979, %v967
  %v1148 = vpack.c.b16 %v992, %v980
  %v1149 = vpack.c.b16 %v993, %v981
  %v1150 = vpack.c.b16 %v994, %v982
  %v1151 = vpack.c.b16 %v995, %v983
  %v1152 = vpack.c.b16 %v996, %v984
  %v1153 = vpack.c.b16 %v997, %v985
  %v1154 = vpack.c.b16 %v998, %v986
  %v1155 = vpack.c.b16 %v999, %v987
  %v1156 = vpack.c.b16 %v1000, %v988
  %v1157 = vpack.c.b16 %v1001, %v989
  %v1158 = vpack.c.b16 %v1002, %v990
  %v1159 = vpack.c.b16 %v1003, %v991
  %v1160 = vpack.c.b16 %v1004, %v1004
  %v1161 = vpack.c.b16 %v1005, %v1005
  %v1162 = vpack.c.b16 %v1006, %v1006
  %v1163 = vpack.c.b16 %v1007, %v1007
  %v1164 = vpack.c.b16 %v1008, %v1008
  %v1165 = vpack.c.b16 %v1009, %v1009
  %v1166 = vpack.c.b16 %v1010, %v1010
  %v1167 = vpack.c.b16 %v1011, %v1011
  %v1168 = vpack.c.b16 %v1012, %v1012
  %v1169 = vpack.c.b16 %v1013, %v1013
  %v1170 = vpack.c.b16 %v1014, %v1014
  %v1171 = vpack.c.b16 %v1015, %v1015
  %v1712 = vunpack.c.l.b16 %v165
  %v1713 = vunpack.c.h.b16 %v165
  %v1714 = vunpack.c.l.b16 %v166
  %v1715 = vunpack.c.l.b16 %v167
  %v1716 = vunpack.c.h.b16 %v167
  %v1717 = vunpack.c.l.b16 %v168
  %v1718 = vunpack.c.l.b16 %v169
  %v1719 = vunpack.c.h.b16 %v169
  %v1720 = vunpack.c.l.b16 %v170
  %v1721 = vunpack.c.l.b16 %v171
  %v1722 = vunpack.c.h.b16 %v171
  %v1723 = vunpack.c.l.b16 %v172
  %v1724 = vunpack.c.l.b16 %v173
  %v1725 = vunpack.c.h.b16 %v173
  %v1726 = vunpack.c.l.b16 %v174
  %v1727 = vunpack.c.l.b16 %v175
  %v1728 = vunpack.c.h.b16 %v175
  %v1729 = vunpack.c.l.b16 %v176
  %v1730 = vunpack.c.l.b16 %v177
  %v1731 = vunpack.c.h.b16 %v177
  %v1732 = vunpack.c.l.b16 %v178
  %v1733 = vunpack.c.l.b16 %v179
  %v1734 = vunpack.c.h.b16 %v179
  %v1735 = vunpack.c.l.b16 %v180
  %v1736 = vunpack.c.l.b16 %v181
  %v1737 = vunpack.c.h.b16 %v181
  %v1738 = vunpack.c.l.b16 %v182
  %v1739 = vunpack.c.l.b16 %v183
  %v1740 = vunpack.c.h.b16 %v183
  %v1741 = vunpack.c.l.b16 %v184
  %v1742 = vunpack.c.l.b16 %v185
  %v1743 = vunpack.c.h.b16 %v185
  %v1744 = vunpack.c.l.b16 %v186
  %v1745 = vunpack.c.l.b16 %v187
  %v1746 = vunpack.c.h.b16 %v187
  %v1747 = vunpack.c.l.b16 %v188
  %v1748 = vunpack.c.l.b16 %v189
  %v1749 = vunpack.c.h.b16 %v189
  %v1750 = vunpack.c.l.b16 %v190
  %v1751 = vunpack.c.l.b16 %v191
  %v1752 = vunpack.c.h.b16 %v191
  %v1753 = vunpack.c.l.b16 %v192
  %v1754 = vunpack.c.l.b16 %v193
  %v1755 = vunpack.c.h.b16 %v193
  %v1756 = vunpack.c.l.b16 %v194
  %v1757 = vunpack.c.l.b16 %v195
  %v1758 = vunpack.c.h.b16 %v195
  %v1759 = vunpack.c.l.b16 %v196
  %v1760 = vunpack.c.l.b16 %v197
  %v1761 = vunpack.c.h.b16 %v197
  %v1762 = vunpack.c.l.b16 %v198
  %v1763 = vunpack.c.l.b16 %v199
  %v1764 = vunpack.c.h.b16 %v199
  %v1765 = vunpack.c.l.b16 %v200
  %v1766 = vunpack.c.l.b16 %v201
  %v1767 = vunpack.c.h.b16 %v201
  %v1768 = vunpack.c.l.b16 %v202
  %v1769 = vunpack.c.l.b16 %v203
  %v1770 = vunpack.c.h.b16 %v203
  %v1771 = vunpack.c.l.b16 %v204
  %v1772 = vunpack.c.l.b16 %v205
  %v1773 = vunpack.c.h.b16 %v205
  %v1774 = vunpack.c.l.b16 %v206
  %v1775 = vunpack.c.l.b16 %v207
  %v1776 = vunpack.c.h.b16 %v207
  %v1777 = vunpack.c.l.b16 %v208
  %v1778 = vunpack.c.l.b16 %v209
  %v1779 = vunpack.c.h.b16 %v209
  %v1780 = vunpack.c.l.b16 %v210
  %v1781 = vunpack.c.l.b16 %v211
  %v1782 = vunpack.c.h.b16 %v211
  %v1783 = vunpack.c.l.b16 %v212
  %v1784 = vunpack.c.l.b16 %v213
  %v1785 = vunpack.c.h.b16 %v213
  %v1786 = vunpack.c.l.b16 %v214
  %v1787 = vunpack.c.l.b16 %v215
  %v1788 = vunpack.c.h.b16 %v215
  %v1789 = vunpack.c.l.b16 %v216
  %v1790 = vunpack.c.l.b16 %v217
  %v1791 = vunpack.c.h.b16 %v217
  %v1792 = vunpack.c.l.b16 %v218
  %v1793 = vunpack.c.l.b16 %v219
  %v1794 = vunpack.c.h.b16 %v219
  %v1795 = vunpack.c.l.b16 %v220
  %v1796 = vunpack.c.l.b16 %v221
  %v1797 = vunpack.c.h.b16 %v221
  %v1798 = vunpack.c.l.b16 %v222
  %v1799 = vunpack.c.l.b16 %v223
  %v1800 = vunpack.c.h.b16 %v223
  %v1801 = vunpack.c.l.b16 %v224
  %v1802 = vunpack.c.l.b16 %v225
  %v1803 = vunpack.c.h.b16 %v225
  %v1804 = vunpack.c.l.b16 %v226
  %v1805 = vunpack.c.l.b16 %v227
  %v1806 = vunpack.c.h.b16 %v227
  %v1807 = vunpack.c.l.b16 %v228
  %v1808 = vunpack.c.l.b16 %v229
  %v1809 = vunpack.c.h.b16 %v229
  %v1810 = vunpack.c.l.b16 %v230
  %v1811 = vunpack.c.l.b16 %v231
  %v1812 = vunpack.c.h.b16 %v231
  %v1813 = vunpack.c.l.b16 %v232
  %v1814 = vunpack.c.l.b16 %v233
  %v1815 = vunpack.c.h.b16 %v233
  %v1816 = vunpack.c.l.b16 %v234
  %v1817 = vunpack.c.l.b16 %v235
  %v1818 = vunpack.c.h.b16 %v235
  %v1819 = vunpack.c.l.b16 %v236
  %v1820 = vunpack.c.l.b16 %v237
  %v1821 = vunpack.c.h.b16 %v237
  %v1822 = vunpack.c.l.b16 %v238
  %v1823 = vunpack.c.l.b16 %v239
  %v1824 = vunpack.c.h.b16 %v239
  %v1825 = vunpack.c.l.b16 %v240
  %v1826 = vunpack.c.l.b16 %v241
  %v1827 = vunpack.c.h.b16 %v241
  %v1828 = vunpack.c.l.b16 %v242
  %v1829 = vunpack.c.l.b16 %v243
  %v1830 = vunpack.c.h.b16 %v243
  %v1831 = vunpack.c.l.b16 %v244
  %v1832 = vunpack.c.l.b16 %v245
  %v1833 = vunpack.c.h.b16 %v245
  %v1834 = vunpack.c.l.b16 %v246
  %v1835 = vunpack.c.l.b16 %v247
  %v1836 = vunpack.c.h.b16 %v247
  %v1837 = vunpack.c.l.b16 %v248
  %v1838 = vunpack.c.l.b16 %v249
  %v1839 = vunpack.c.h.b16 %v249
  %v1840 = vunpack.c.l.b16 %v250
  %v1841 = vunpack.c.l.b16 %v251
  %v1842 = vunpack.c.h.b16 %v251
  %v1843 = vunpack.c.l.b16 %v252
  %v1844 = vunpack.c.l.b16 %v253
  %v1845 = vunpack.c.h.b16 %v253
  %v1846 = vunpack.c.l.b16 %v254
  %v1847 = vunpack.c.l.b16 %v255
  %v1848 = vunpack.c.h.b16 %v255
  %v1849 = vunpack.c.l.b16 %v256
  %v1850 = vunpack.c.l.b16 %v257
  %v1851 = vunpack.c.h.b16 %v257
  %v1852 = vunpack.c.l.b16 %v258
  %v1853 = vunpack.c.l.b16 %v259
  %v1854 = vunpack.c.h.b16 %v259
  %v1855 = vunpack.c.l.b16 %v260
  %v1856 = vunpack.c.l.b16 %v261
  %v1857 = vunpack.c.h.b16 %v261
  %v1858 = vunpack.c.l.b16 %v262
  %v1859 = vunpack.c.l.b16 %v263
  %v1860 = vunpack.c.h.b16 %v263
  %v1861 = vunpack.c.l.b16 %v264
  %v1862 = vunpack.c.l.b16 %v265
  %v1863 = vunpack.c.h.b16 %v265
  %v1864 = vunpack.c.l.b16 %v266
  %v1865 = vunpack.c.l.b16 %v267
  %v1866 = vunpack.c.h.b16 %v267
  %v1867 = vunpack.c.l.b16 %v268
  %v1868 = vunpack.c.l.b16 %v269
  %v1869 = vunpack.c.h.b16 %v269
  %v1870 = vunpack.c.l.b16 %v270
  %v1871 = vunpack.c.l.b16 %v271
  %v1872 = vunpack.c.h.b16 %v271
  %v1873 = vunpack.c.l.b16 %v272
  %v1874 = vunpack.c.l.b16 %v273
  %v1875 = vunpack.c.h.b16 %v273
  %v1876 = vunpack.c.l.b16 %v274
  %v1877 = vunpack.c.l.b16 %v275
  %v1878 = vunpack.c.h.b16 %v275
  %v1879 = vunpack.c.l.b16 %v276
  %v1880 = vunpack.c.l.b16 %v277
  %v1881 = vunpack.c.h.b16 %v277
  %v1882 = vunpack.c.l.b16 %v278
  %v1883 = vunpack.c.l.b16 %v279
  %v1884 = vunpack.c.h.b16 %v279
  %v1885 = vunpack.c.l.b16 %v280
  %v1886 = vunpack.c.l.b16 %v281
  %v1887 = vunpack.c.h.b16 %v281
  %v1888 = vunpack.c.l.b16 %v282
  %v1889 = vunpack.c.l.b16 %v283
  %v1890 = vunpack.c.h.b16 %v283
  %v1891 = vunpack.c.l.b16 %v284
  %v1892 = vunpack.c.l.b16 %v285
  %v1893 = vunpack.c.h.b16 %v285
  %v1894 = vunpack.c.l.b16 %v286
  %v1895 = vunpack.c.l.b16 %v287
  %v1896 = vunpack.c.h.b16 %v287
  %v1897 = vunpack.c.l.b16 %v288
  %v1898 = vunpack.c.l.b16 %v289
  %v1899 = vunpack.c.h.b16 %v289
  %v1900 = vunpack.c.l.b16 %v290
  %v1901 = vunpack.c.l.b16 %v291
  %v1902 = vunpack.c.h.b16 %v291
  %v1903 = vunpack.c.l.b16 %v292
  %v1904 = vunpack.c.l.b16 %v293
  %v1905 = vunpack.c.h.b16 %v293
  %v1906 = vunpack.c.l.b16 %v294
  %v1907 = vunpack.c.l.b16 %v295
  %v1908 = vunpack.c.h.b16 %v295
  %v1909 = vunpack.c.l.b16 %v296
  %v1910 = vunpack.c.l.b16 %v297
  %v1911 = vunpack.c.h.b16 %v297
  %v1912 = vunpack.c.l.b16 %v298
  %v1913 = vunpack.c.l.b16 %v299
  %v1914 = vunpack.c.h.b16 %v299
  %v1915 = vunpack.c.l.b16 %v300
  %v1916 = vunpack.c.l.b16 %v301
  %v1917 = vunpack.c.h.b16 %v301
  %v1918 = vunpack.c.l.b16 %v302
  %v1919 = vunpack.c.l.b16 %v303
  %v1920 = vunpack.c.h.b16 %v303
  %v1921 = vunpack.c.l.b16 %v304
  %v1922 = vunpack.c.l.b16 %v305
  %v1923 = vunpack.c.h.b16 %v305
  %v1924 = vunpack.c.l.b16 %v306
  %v1925 = vunpack.c.l.b16 %v307
  %v1926 = vunpack.c.h.b16 %v307
  %v1927 = vunpack.c.l.b16 %v308
  %v1928 = vunpack.c.l.b16 %v309
  %v1929 = vunpack.c.h.b16 %v309
  %v1930 = vunpack.c.l.b16 %v310
  %v1931 = vunpack.c.l.b16 %v311
  %v1932 = vunpack.c.h.b16 %v311
  %v1933 = vunpack.c.l.b16 %v312
  %v1934 = vunpack.c.l.b16 %v313
  %v1935 = vunpack.c.h.b16 %v313
  %v1936 = vunpack.c.l.b16 %v314
  %v1937 = vunpack.c.l.b16 %v315
  %v1938 = vunpack.c.h.b16 %v315
  %v1939 = vunpack.c.l.b16 %v316
  %v1940 = vunpack.c.l.b16 %v317
  %v1941 = vunpack.c.h.b16 %v317
  %v1942 = vunpack.c.l.b16 %v318
  %v1943 = vunpack.c.l.b16 %v319
  %v1944 = vunpack.c.h.b16 %v319
  %v1945 = vunpack.c.l.b16 %v320
  %v1946 = vunpack.c.l.b16 %v321
  %v1947 = vunpack.c.h.b16 %v321
  %v1948 = vunpack.c.l.b16 %v322
  %v1949 = vunpack.c.l.b16 %v323
  %v1950 = vunpack.c.h.b16 %v323
  %v1951 = vunpack.c.l.b16 %v324
  %v1952 = vunpack.c.l.b16 %v325
  %v1953 = vunpack.c.h.b16 %v325
  %v1954 = vunpack.c.l.b16 %v326
  %v1955 = vunpack.c.l.b16 %v327
  %v1956 = vunpack.c.h.b16 %v327
  %v1957 = vunpack.c.l.b16 %v328
  %v1958 = vunpack.c.l.b16 %v329
  %v1959 = vunpack.c.h.b16 %v329
  %v1960 = vunpack.c.l.b16 %v330
  %v1961 = vunpack.c.l.b16 %v331
  %v1962 = vunpack.c.h.b16 %v331
  %v1963 = vunpack.c.l.b16 %v332
  %v1964 = vunpack.c.l.b16 %v333
  %v1965 = vunpack.c.h.b16 %v333
  %v1966 = vunpack.c.l.b16 %v334
  %v1967 = vunpack.c.l.b16 %v335
  %v1968 = vunpack.c.h.b16 %v335
  %v1969 = vunpack.c.l.b16 %v336
  %v1970 = vunpack.c.l.b16 %v337
  %v1971 = vunpack.c.h.b16 %v337
  %v1972 = vunpack.c.l.b16 %v338
  %v1973 = vunpack.c.l.b16 %v339
  %v1974 = vunpack.c.h.b16 %v339
  %v1975 = vunpack.c.l.b16 %v340
  %v1976 = vunpack.c.l.b16 %v341
  %v1977 = vunpack.c.h.b16 %v341
  %v1978 = vunpack.c.l.b16 %v342
  %v1979 = vunpack.c.l.b16 %v343
  %v1980 = vunpack.c.h.b16 %v343
  %v1981 = vunpack.c.l.b16 %v344
  %v1982 = vunpack.c.l.b16 %v345
  %v1983 = vunpack.c.h.b16 %v345
  %v1984 = vunpack.c.l.b16 %v346
  %v1985 = vunpack.c.l.b16 %v347
  %v1986 = vunpack.c.h.b16 %v347
  %v1987 = vunpack.c.l.b16 %v348
  %v1988 = vunpack.c.l.b16 %v349
  %v1989 = vunpack.c.h.b16 %v349
  %v1990 = vunpack.c.l.b16 %v350
  %v1991 = vunpack.c.l.b16 %v351
  %v1992 = vunpack.c.h.b16 %v351
  %v1993 = vunpack.c.l.b16 %v352
  %v1994 = vunpack.c.l.b16 %v353
  %v1995 = vunpack.c.h.b16 %v353
  %v1996 = vunpack.c.l.b16 %v354
  %v1997 = vunpack.c.l.b16 %v355
  %v1998 = vunpack.c.h.b16 %v355
  %v1999 = vunpack.c.l.b16 %v356
  %v2000 = vunpack.c.l.b16 %v357
  %v2001 = vunpack.c.h.b16 %v357
  %v2002 = vunpack.c.l.b16 %v358
  %v2003 = vunpack.c.l.b16 %v359
  %v2004 = vunpack.c.h.b16 %v359
  %v2005 = vunpack.c.l.b16 %v360
  %v2006 = vunpack.c.l.b16 %v361
  %v2007 = vunpack.c.h.b16 %v361
  %v2008 = vunpack.c.l.b16 %v362
  %v2009 = vunpack.c.l.b16 %v363
  %v2010 = vunpack.c.h.b16 %v363
  %v2011 = vunpack.c.l.b16 %v364
  %v2012 = vunpack.c.l.b16 %v365
  %v2013 = vunpack.c.h.b16 %v365
  %v2014 = vunpack.c.l.b16 %v366
  %v2015 = vunpack.c.l.b16 %v367
  %v2016 = vunpack.c.h.b16 %v367
  %v2017 = vunpack.c.l.b16 %v368
  %v2018 = vunpack.c.l.b16 %v369
  %v2019 = vunpack.c.h.b16 %v369
  %v2020 = vunpack.c.l.b16 %v370
  %v2021 = vunpack.c.l.b16 %v371
  %v2022 = vunpack.c.h.b16 %v371
  %v2023 = vunpack.c.l.b16 %v372
  %v2024 = vunpack.c.l.b16 %v373
  %v2025 = vunpack.c.h.b16 %v373
  %v2026 = vunpack.c.l.b16 %v374
  %v2027 = vunpack.c.l.b16 %v375
  %v2028 = vunpack.c.h.b16 %v375
  %v2029 = vunpack.c.l.b16 %v376
  %v2030 = vunpack.c.l.b16 %v377
  %v2031 = vunpack.c.h.b16 %v377
  %v2032 = vunpack.c.l.b16 %v378
  %v2033 = vunpack.c.l.b16 %v379
  %v2034 = vunpack.c.h.b16 %v379
  %v2035 = vunpack.c.l.b16 %v380
  %v2036 = vunpack.c.l.b16 %v381
  %v2037 = vunpack.c.h.b16 %v381
  %v2038 = vunpack.c.l.b16 %v382
  %v2039 = vunpack.c.l.b16 %v383
  %v2040 = vunpack.c.h.b16 %v383
  %v2041 = vunpack.c.l.b16 %v384
  %v2042 = vunpack.c.l.b16 %v385
  %v2043 = vunpack.c.h.b16 %v385
  %v2044 = vunpack.c.l.b16 %v386
  %v2045 = vunpack.c.l.b16 %v387
  %v2046 = vunpack.c.h.b16 %v387
  %v2047 = vunpack.c.l.b16 %v388
  %v2048 = vunpack.c.l.b16 %v389
  %v2049 = vunpack.c.h.b16 %v389
  %v2050 = vunpack.c.l.b16 %v390
  %v2051 = vunpack.c.l.b16 %v391
  %v2052 = vunpack.c.h.b16 %v391
  %v2053 = vunpack.c.l.b16 %v392
  %v2054 = vunpack.c.l.b16 %v393
  %v2055 = vunpack.c.h.b16 %v393
  %v2056 = vunpack.c.l.b16 %v394
  %v2057 = vunpack.c.l.b16 %v395
  %v2058 = vunpack.c.h.b16 %v395
  %v2059 = vunpack.c.l.b16 %v396
  %v2060 = vunpack.c.l.b16 %v397
  %v2061 = vunpack.c.h.b16 %v397
  %v2062 = vunpack.c.l.b16 %v398
  %v2063 = vunpack.c.l.b16 %v399
  %v2064 = vunpack.c.h.b16 %v399
  %v2065 = vunpack.c.l.b16 %v400
  %v2066 = vunpack.c.l.b16 %v401
  %v2067 = vunpack.c.h.b16 %v401
  %v2068 = vunpack.c.l.b16 %v402
  %v2069 = vunpack.c.l.b16 %v403
  %v2070 = vunpack.c.h.b16 %v403
  %v2071 = vunpack.c.l.b16 %v404
  %v2072 = vunpack.c.l.b16 %v405
  %v2073 = vunpack.c.h.b16 %v405
  %v2074 = vunpack.c.l.b16 %v406
  %v2075 = vunpack.c.l.b16 %v407
  %v2076 = vunpack.c.h.b16 %v407
  %v2077 = vunpack.c.l.b16 %v408
  %v2078 = vunpack.c.l.b16 %v409
  %v2079 = vunpack.c.h.b16 %v409
  %v2080 = vunpack.c.l.b16 %v410
  %v2081 = vunpack.c.l.b16 %v411
  %v2082 = vunpack.c.h.b16 %v411
  %v2083 = vunpack.c.l.b16 %v412
  %v2084 = vunpack.c.l.b16 %v413
  %v2085 = vunpack.c.h.b16 %v413
  %v2086 = vunpack.c.l.b16 %v414
  %v2087 = vunpack.c.l.b16 %v415
  %v2088 = vunpack.c.h.b16 %v415
  %v2089 = vunpack.c.l.b16 %v416
  %v2090 = vunpack.c.l.b16 %v417
  %v2091 = vunpack.c.h.b16 %v417
  %v2092 = vunpack.c.l.b16 %v418
  %v2093 = vunpack.c.l.b16 %v419
  %v2094 = vunpack.c.h.b16 %v419
  %v2095 = vunpack.c.l.b16 %v420
  %v2096 = vunpack.c.l.b16 %v421
  %v2097 = vunpack.c.h.b16 %v421
  %v2098 = vunpack.c.l.b16 %v422
  %v2099 = vunpack.c.l.b16 %v423
  %v2100 = vunpack.c.h.b16 %v423
  %v2101 = vunpack.c.l.b16 %v424
  %v2102 = vunpack.c.l.b16 %v425
  %v2103 = vunpack.c.h.b16 %v425
  %v2104 = vunpack.c.l.b16 %v426
  %v2105 = vunpack.c.l.b16 %v427
  %v2106 = vunpack.c.h.b16 %v427
  %v2107 = vunpack.c.l.b16 %v428
  %v2108 = vunpack.c.l.b16 %v429
  %v2109 = vunpack.c.h.b16 %v429
  %v2110 = vunpack.c.l.b16 %v430
  %v2111 = vunpack.c.l.b16 %v431
  %v2112 = vunpack.c.h.b16 %v431
  %v2113 = vunpack.c.l.b16 %v432
  %v2114 = vunpack.c.l.b16 %v433
  %v2115 = vunpack.c.h.b16 %v433
  %v2116 = vunpack.c.l.b16 %v434
  %v2117 = vunpack.c.l.b16 %v435
  %v2118 = vunpack.c.h.b16 %v435
  %v2119 = vunpack.c.l.b16 %v436
  %v2120 = vunpack.c.l.b16 %v437
  %v2121 = vunpack.c.h.b16 %v437
  %v2122 = vunpack.c.l.b16 %v438
  %v2123 = vunpack.c.l.b16 %v439
  %v2124 = vunpack.c.h.b16 %v439
  %v2125 = vunpack.c.l.b16 %v440
  %v2126 = vunpack.c.l.b16 %v441
  %v2127 = vunpack.c.h.b16 %v441
  %v2128 = vunpack.c.l.b16 %v442
  %v2129 = vunpack.c.l.b16 %v443
  %v2130 = vunpack.c.h.b16 %v443
  %v2131 = vunpack.c.l.b16 %v444
  %v2132 = vunpack.c.l.b16 %v445
  %v2133 = vunpack.c.h.b16 %v445
  %v2134 = vunpack.c.l.b16 %v446
  %v2135 = vunpack.c.l.b16 %v447
  %v2136 = vunpack.c.h.b16 %v447
  %v2137 = vunpack.c.l.b16 %v448
  %v2138 = vunpack.c.l.b16 %v449
  %v2139 = vunpack.c.h.b16 %v449
  %v2140 = vunpack.c.l.b16 %v450
  %v2141 = vunpack.c.l.b16 %v451
  %v2142 = vunpack.c.h.b16 %v451
  %v2143 = vunpack.c.l.b16 %v452
  %v2144 = vunpack.c.l.b16 %v453
  %v2145 = vunpack.c.h.b16 %v453
  %v2146 = vunpack.c.l.b16 %v454
  %v2147 = vunpack.c.l.b16 %v455
  %v2148 = vunpack.c.h.b16 %v455
  %v2149 = vunpack.c.l.b16 %v456
  %v2150 = vunpack.c.l.b16 %v457
  %v2151 = vunpack.c.h.b16 %v457
  %v2152 = vunpack.c.l.b16 %v458
  %v2153 = vunpack.c.l.b16 %v459
  %v2154 = vunpack.c.h.b16 %v459
  %v2155 = vunpack.c.l.b16 %v460
  %v2156 = vunpack.c.l.b16 %v461
  %v2157 = vunpack.c.h.b16 %v461
  %v2158 = vunpack.c.l.b16 %v462
  %v2159 = vunpack.c.l.b16 %v463
  %v2160 = vunpack.c.h.b16 %v463
  %v2161 = vunpack.c.l.b16 %v464
  %v2162 = vunpack.c.l.b16 %v465
  %v2163 = vunpack.c.h.b16 %v465
  %v2164 = vunpack.c.l.b16 %v466
  %v2165 = vunpack.c.l.b16 %v467
  %v2166 = vunpack.c.h.b16 %v467
  %v2167 = vunpack.c.l.b16 %v468
  %v2168 = vunpack.c.l.b16 %v469
  %v2169 = vunpack.c.h.b16 %v469
  %v2170 = vunpack.c.l.b16 %v470
  %v2171 = vunpack.c.l.b16 %v471
  %v2172 = vunpack.c.h.b16 %v471
  %v2173 = vunpack.c.l.b16 %v472
  %v2174 = vunpack.c.l.b16 %v473
  %v2175 = vunpack.c.h.b16 %v473
  %v2176 = vunpack.c.l.b16 %v474
  %v2177 = vunpack.c.l.b16 %v475
  %v2178 = vunpack.c.h.b16 %v475
  %v2179 = vunpack.c.l.b16 %v476
  %v2180 = vunpack.c.l.b16 %v477
  %v2181 = vunpack.c.h.b16 %v477
  %v2182 = vunpack.c.l.b16 %v478
  %v2183 = vunpack.c.l.b16 %v479
  %v2184 = vunpack.c.h.b16 %v479
  %v2185 = vunpack.c.l.b16 %v480
  %v2186 = vunpack.c.l.b16 %v481
  %v2187 = vunpack.c.h.b16 %v481
  %v2188 = vunpack.c.l.b16 %v482
  %v2189 = vunpack.c.l.b16 %v483
  %v2190 = vunpack.c.h.b16 %v483
  %v2191 = vunpack.c.l.b16 %v484
  %v2192 = vunpack.c.l.b16 %v485
  %v2193 = vunpack.c.h.b16 %v485
  %v2194 = vunpack.c.l.b16 %v486
  %v2195 = vunpack.c.l.b16 %v487
  %v2196 = vunpack.c.h.b16 %v487
  %v2197 = vunpack.c.l.b16 %v488
  %v2198 = vunpack.c.l.b16 %v489
  %v2199 = vunpack.c.h.b16 %v489
  %v2200 = vunpack.c.l.b16 %v490
  %v2201 = vunpack.c.l.b16 %v491
  %v2202 = vunpack.c.h.b16 %v491
  %v2203 = vunpack.c.l.b16 %v492
  %v2204 = vunpack.c.l.b16 %v493
  %v2205 = vunpack.c.h.b16 %v493
  %v2206 = vunpack.c.l.b16 %v494
  %v2207 = vunpack.c.l.b16 %v495
  %v2208 = vunpack.c.h.b16 %v495
  %v2209 = vunpack.c.l.b16 %v496
  %v2210 = vunpack.c.l.b16 %v497
  %v2211 = vunpack.c.h.b16 %v497
  %v2212 = vunpack.c.l.b16 %v498
  %v2213 = vunpack.c.l.b16 %v499
  %v2214 = vunpack.c.h.b16 %v499
  %v2215 = vunpack.c.l.b16 %v500
  %v2216 = vunpack.c.l.b16 %v501
  %v2217 = vunpack.c.h.b16 %v501
  %v2218 = vunpack.c.l.b16 %v502
  %v2219 = vunpack.c.l.b16 %v503
  %v2220 = vunpack.c.h.b16 %v503
  %v2221 = vunpack.c.l.b16 %v504
  %v2222 = vunpack.c.l.b16 %v505
  %v2223 = vunpack.c.h.b16 %v505
  %v2224 = vunpack.c.l.b16 %v506
  %v2225 = vunpack.c.l.b16 %v507
  %v2226 = vunpack.c.h.b16 %v507
  %v2227 = vunpack.c.l.b16 %v508
  %v2228 = vunpack.c.l.b16 %v509
  %v2229 = vunpack.c.h.b16 %v509
  %v2230 = vunpack.c.l.b16 %v510
  %v2231 = vunpack.c.l.b16 %v511
  %v2232 = vunpack.c.h.b16 %v511
  %v2233 = vunpack.c.l.b16 %v512
  %v2234 = vunpack.c.l.b16 %v513
  %v2235 = vunpack.c.h.b16 %v513
  %v2236 = vunpack.c.l.b16 %v514
  %v2237 = vunpack.c.l.b16 %v515
  %v2238 = vunpack.c.h.b16 %v515
  %v2239 = vunpack.c.l.b16 %v516
  %v2240 = vunpack.c.l.b16 %v517
  %v2241 = vunpack.c.h.b16 %v517
  %v2242 = vunpack.c.l.b16 %v518
  %v2243 = vunpack.c.l.b16 %v519
  %v2244 = vunpack.c.h.b16 %v519
  %v2245 = vunpack.c.l.b16 %v520
  %v2246 = vunpack.c.l.b16 %v521
  %v2247 = vunpack.c.h.b16 %v521
  %v2248 = vunpack.c.l.b16 %v522
  %v2249 = vunpack.c.l.b16 %v523
  %v2250 = vunpack.c.h.b16 %v523
  %v2251 = vunpack.c.l.b16 %v524
  %v2252 = vunpack.c.l.b16 %v525
  %v2253 = vunpack.c.h.b16 %v525
  %v2254 = vunpack.c.l.b16 %v526
  %v2255 = vunpack.c.l.b16 %v527
  %v2256 = vunpack.c.h.b16 %v527
  %v2257 = vunpack.c.l.b16 %v528
  %v2258 = vunpack.c.l.b16 %v529
  %v2259 = vunpack.c.h.b16 %v529
  %v2260 = vunpack.c.l.b16 %v530
  %v2261 = vunpack.c.l.b16 %v531
  %v2262 = vunpack.c.h.b16 %v531
  %v2263 = vunpack.c.l.b16 %v532
  %v2264 = vunpack.c.l.b16 %v533
  %v2265 = vunpack.c.h.b16 %v533
  %v2266 = vunpack.c.l.b16 %v534
  %v2267 = vunpack.c.l.b16 %v535
  %v2268 = vunpack.c.h.b16 %v535
  %v2269 = vunpack.c.l.b16 %v536
  %v2270 = vunpack.c.l.b16 %v537
  %v2271 = vunpack.c.h.b16 %v537
  %v2272 = vunpack.c.l.b16 %v538
  %v2273 = vunpack.c.l.b16 %v539
  %v2274 = vunpack.c.h.b16 %v539
  %v2275 = vunpack.c.l.b16 %v540
  %v2276 = vunpack.c.l.b16 %v541
  %v2277 = vunpack.c.h.b16 %v541
  %v2278 = vunpack.c.l.b16 %v542
  %v2279 = vunpack.c.l.b16 %v543
  %v2280 = vunpack.c.h.b16 %v543
  %v2281 = vunpack.c.l.b16 %v544
  %v2282 = vunpack.c.l.b16 %v545
  %v2283 = vunpack.c.h.b16 %v545
  %v2284 = vunpack.c.l.b16 %v546
  %v2285 = vunpack.c.l.b16 %v547
  %v2286 = vunpack.c.h.b16 %v547
  %v2287 = vunpack.c.l.b16 %v548
  %v2288 = vpack.c.b16 %v1715, %v1712
  %v2289 = vpack.c.b16 %v1716, %v1713
  %v2290 = vpack.c.b16 %v1717, %v1714
  %v2291 = vpack.c.b16 %v1721, %v1718
  %v2292 = vpack.c.b16 %v1722, %v1719
  %v2293 = vpack.c.b16 %v1723, %v1720
  %v2294 = vpack.c.b16 %v1727, %v1724
  %v2295 = vpack.c.b16 %v1728, %v1725
  %v2296 = vpack.c.b16 %v1729, %v1726
  %v2297 = vpack.c.b16 %v1733, %v1730
  %v2298 = vpack.c.b16 %v1734, %v1731
  %v2299 = vpack.c.b16 %v1735, %v1732
  %v2300 = vpack.c.b16 %v1739, %v1736
  %v2301 = vpack.c.b16 %v1740, %v1737
  %v2302 = vpack.c.b16 %v1741, %v1738
  %v2303 = vpack.c.b16 %v1745, %v1742
  %v2304 = vpack.c.b16 %v1746, %v1743
  %v2305 = vpack.c.b16 %v1747, %v1744
  %v2306 = vpack.c.b16 %v1751, %v1748
  %v2307 = vpack.c.b16 %v1752, %v1749
  %v2308 = vpack.c.b16 %v1753, %v1750
  %v2309 = vpack.c.b16 %v1757, %v1754
  %v2310 = vpack.c.b16 %v1758, %v1755
  %v2311 = vpack.c.b16 %v1759, %v1756
  %v2312 = vpack.c.b16 %v1763, %v1760
  %v2313 = vpack.c.b16 %v1764, %v1761
  %v2314 = vpack.c.b16 %v1765, %v1762
  %v2315 = vpack.c.b16 %v1769, %v1766
  %v2316 = vpack.c.b16 %v1770, %v1767
  %v2317 = vpack.c.b16 %v1771, %v1768
  %v2318 = vpack.c.b16 %v1775, %v1772
  %v2319 = vpack.c.b16 %v1776, %v1773
  %v2320 = vpack.c.b16 %v1777, %v1774
  %v2321 = vpack.c.b16 %v1781, %v1778
  %v2322 = vpack.c.b16 %v1782, %v1779
  %v2323 = vpack.c.b16 %v1783, %v1780
  %v2324 = vpack.c.b16 %v1787, %v1784
  %v2325 = vpack.c.b16 %v1788, %v1785
  %v2326 = vpack.c.b16 %v1789, %v1786
  %v2327 = vpack.c.b16 %v1793, %v1790
  %v2328 = vpack.c.b16 %v1794, %v1791
  %v2329 = vpack.c.b16 %v1795, %v1792
  %v2330 = vpack.c.b16 %v1799, %v1796
  %v2331 = vpack.c.b16 %v1800, %v1797
  %v2332 = vpack.c.b16 %v1801, %v1798
  %v2333 = vpack.c.b16 %v1805, %v1802
  %v2334 = vpack.c.b16 %v1806, %v1803
  %v2335 = vpack.c.b16 %v1807, %v1804
  %v2336 = vpack.c.b16 %v1811, %v1808
  %v2337 = vpack.c.b16 %v1812, %v1809
  %v2338 = vpack.c.b16 %v1813, %v1810
  %v2339 = vpack.c.b16 %v1817, %v1814
  %v2340 = vpack.c.b16 %v1818, %v1815
  %v2341 = vpack.c.b16 %v1819, %v1816
  %v2342 = vpack.c.b16 %v1823, %v1820
  %v2343 = vpack.c.b16 %v1824, %v1821
  %v2344 = vpack.c.b16 %v1825, %v1822
  %v2345 = vpack.c.b16 %v1829, %v1826
  %v2346 = vpack.c.b16 %v1830, %v1827
  %v2347 = vpack.c.b16 %v1831, %v1828
  %v2348 = vpack.c.b16 %v1835, %v1832
  %v2349 = vpack.c.b16 %v1836, %v1833
  %v2350 = vpack.c.b16 %v1837, %v1834
  %v2351 = vpack.c.b16 %v1841, %v1838
  %v2352 = vpack.c.b16 %v1842, %v1839
  %v2353 = vpack.c.b16 %v1843, %v1840
  %v2354 = vpack.c.b16 %v1847, %v1844
  %v2355 = vpack.c.b16 %v1848, %v1845
  %v2356 = vpack.c.b16 %v1849, %v1846
  %v2357 = vpack.c.b16 %v1853, %v1850
  %v2358 = vpack.c.b16 %v1854, %v1851
  %v2359 = vpack.c.b16 %v1855, %v1852
  %v2360 = vpack.c.b16 %v1859, %v1856
  %v2361 = vpack.c.b16 %v1860, %v1857
  %v2362 = vpack.c.b16 %v1861, %v1858
  %v2363 = vpack.c.b16 %v1865, %v1862
  %v2364 = vpack.c.b16 %v1866, %v1863
  %v2365 = vpack.c.b16 %v1867, %v1864
  %v2366 = vpack.c.b16 %v1871, %v1868
  %v2367 = vpack.c.b16 %v1872, %v1869
  %v2368 = vpack.c.b16 %v1873, %v1870
  %v2369 = vpack.c.b16 %v1877, %v1874
  %v2370 = vpack.c.b16 %v1878, %v1875
  %v2371 = vpack.c.b16 %v1879, %v1876
  %v2372 = vpack.c.b16 %v1883, %v1880
  %v2373 = vpack.c.b16 %v1884, %v1881
  %v2374 = vpack.c.b16 %v1885, %v1882
  %v2375 = vpack.c.b16 %v1889, %v1886
  %v2376 = vpack.c.b16 %v1890, %v1887
  %v2377 = vpack.c.b16 %v1891, %v1888
  %v2378 = vpack.c.b16 %v1895, %v1892
  %v2379 = vpack.c.b16 %v1896, %v1893
  %v2380 = vpack.c.b16 %v1897, %v1894
  %v2381 = vpack.c.b16 %v1901, %v1898
  %v2382 = vpack.c.b16 %v1902, %v1899
  %v2383 = vpack.c.b16 %v1903, %v1900
  %v2384 = vpack.c.b16 %v1907, %v1904
  %v2385 = vpack.c.b16 %v1908, %v1905
  %v2386 = vpack.c.b16 %v1909, %v1906
  %v2387 = vpack.c.b16 %v1913, %v1910
  %v2388 = vpack.c.b16 %v1914, %v1911
  %v2389 = vpack.c.b16 %v1915, %v1912
  %v2390 = vpack.c.b16 %v1919, %v1916
  %v2391 = vpack.c.b16 %v1920, %v1917
  %v2392 = vpack.c.b16 %v1921, %v1918
  %v2393 = vpack.c.b16 %v1925, %v1922
  %v2394 = vpack.c.b16 %v1926, %v1923
  %v2395 = vpack.c.b16 %v1927, %v1924
  %v2396 = vpack.c.b16 %v1931, %v1928
  %v2397 = vpack.c.b16 %v1932, %v1929
  %v2398 = vpack.c.b16 %v1933, %v1930
  %v2399 = vpack.c.b16 %v1937, %v1934
  %v2400 = vpack.c.b16 %v1938, %v1935
  %v2401 = vpack.c.b16 %v1939, %v1936
  %v2402 = vpack.c.b16 %v1943, %v1940
  %v2403 = vpack.c.b16 %v1944, %v1941
  %v2404 = vpack.c.b16 %v1945, %v1942
  %v2405 = vpack.c.b16 %v1949, %v1946
  %v2406 = vpack.c.b16 %v1950, %v1947
  %v2407 = vpack.c.b16 %v1951, %v1948
  %v2408 = vpack.c.b16 %v1955, %v1952
  %v2409 = vpack.c.b16 %v1956, %v1953
  %v2410 = vpack.c.b16 %v1957, %v1954
  %v2411 = vpack.c.b16 %v1961, %v1958
  %v2412 = vpack.c.b16 %v1962, %v1959
  %v2413 = vpack.c.b16 %v1963, %v1960
  %v2414 = vpack.c.b16 %v1967, %v1964
  %v2415 = vpack.c.b16 %v1968, %v1965
  %v2416 = vpack.c.b16 %v1969, %v1966
  %v2417 = vpack.c.b16 %v1973, %v1970
  %v2418 = vpack.c.b16 %v1974, %v1971
  %v2419 = vpack.c.b16 %v1975, %v1972
  %v2420 = vpack.c.b16 %v1979, %v1976
  %v2421 = vpack.c.b16 %v1980, %v1977
  %v2422 = vpack.c.b16 %v1981, %v1978
  %v2423 = vpack.c.b16 %v1985, %v1982
  %v2424 = vpack.c.b16 %v1986, %v1983
  %v2425 = vpack.c.b16 %v1987, %v1984
  %v2426 = vpack.c.b16 %v1991, %v1988
  %v2427 = vpack.c.b16 %v1992, %v1989
  %v2428 = vpack.c.b16 %v1993, %v1990
  %v2429 = vpack.c.b16 %v1997, %v1994
  %v2430 = vpack.c.b16 %v1998, %v1995
  %v2431 = vpack.c.b16 %v1999, %v1996
  %v2432 = vpack.c.b16 %v2003, %v2000
  %v2433 = vpack.c.b16 %v2004, %v2001
  %v2434 = vpack.c.b16 %v2005, %v2002
  %v2435 = vpack.c.b16 %v2009, %v2006
  %v2436 = vpack.c.b16 %v2010, %v2007
  %v2437 = vpack.c.b16 %v2011, %v2008
  %v2438 = vpack.c.b16 %v2015, %v2012
  %v2439 = vpack.c.b16 %v2016, %v2013
  %v2440 = vpack.c.b16 %v2017, %v2014
  %v2441 = vpack.c.b16 %v2021, %v2018
  %v2442 = vpack.c.b16 %v2022, %v2019
  %v2443 = vpack.c.b16 %v2023, %v2020
  %v2444 = vpack.c.b16 %v2027, %v2024
  %v2445 = vpack.c.b16 %v2028, %v2025
  %v2446 = vpack.c.b16 %v2029, %v2026
  %v2447 = vpack.c.b16 %v2033, %v2030
  %v2448 = vpack.c.b16 %v2034, %v2031
  %v2449 = vpack.c.b16 %v2035, %v2032
  %v2450 = vpack.c.b16 %v2039, %v2036
  %v2451 = vpack.c.b16 %v2040, %v2037
  %v2452 = vpack.c.b16 %v2041, %v2038
  %v2453 = vpack.c.b16 %v2045, %v2042
  %v2454 = vpack.c.b16 %v2046, %v2043
  %v2455 = vpack.c.b16 %v2047, %v2044
  %v2456 = vpack.c.b16 %v2051, %v2048
  %v2457 = vpack.c.b16 %v2052, %v2049
  %v2458 = vpack.c.b16 %v2053, %v2050
  %v2459 = vpack.c.b16 %v2057, %v2054
  %v2460 = vpack.c.b16 %v2058, %v2055
  %v2461 = vpack.c.b16 %v2059, %v2056
  %v2462 = vpack.c.b16 %v2063, %v2060
  %v2463 = vpack.c.b16 %v2064, %v2061
  %v2464 = vpack.c.b16 %v2065, %v2062
  %v2465 = vpack.c.b16 %v2069, %v2066
  %v2466 = vpack.c.b16 %v2070, %v2067
  %v2467 = vpack.c.b16 %v2071, %v2068
  %v2468 = vpack.c.b16 %v2075, %v2072
  %v2469 = vpack.c.b16 %v2076, %v2073
  %v2470 = vpack.c.b16 %v2077, %v2074
  %v2471 = vpack.c.b16 %v2081, %v2078
  %v2472 = vpack.c.b16 %v2082, %v2079
  %v2473 = vpack.c.b16 %v2083, %v2080
  %v2474 = vpack.c.b16 %v2087, %v2084
  %v2475 = vpack.c.b16 %v2088, %v2085
  %v2476 = vpack.c.b16 %v2089, %v2086
  %v2477 = vpack.c.b16 %v2093, %v2090
  %v2478 = vpack.c.b16 %v2094, %v2091
  %v2479 = vpack.c.b16 %v2095, %v2092
  %v2480 = vpack.c.b16 %v2099, %v2096
  %v2481 = vpack.c.b16 %v2100, %v2097
  %v2482 = vpack.c.b16 %v2101, %v2098
  %v2483 = vpack.c.b16 %v2105, %v2102
  %v2484 = vpack.c.b16 %v2106, %v2103
  %v2485 = vpack.c.b16 %v2107, %v2104
  %v2486 = vpack.c.b16 %v2111, %v2108
  %v2487 = vpack.c.b16 %v2112, %v2109
  %v2488 = vpack.c.b16 %v2113, %v2110
  %v2489 = vpack.c.b16 %v2117, %v2114
  %v2490 = vpack.c.b16 %v2118, %v2115
  %v2491 = vpack.c.b16 %v2119, %v2116
  %v2492 = vpack.c.b16 %v2123, %v2120
  %v2493 = vpack.c.b16 %v2124, %v2121
  %v2494 = vpack.c.b16 %v2125, %v2122
  %v2495 = vpack.c.b16 %v2129, %v2126
  %v2496 = vpack.c.b16 %v2130, %v2127
  %v2497 = vpack.c.b16 %v2131, %v2128
  %v2498 = vpack.c.b16 %v2135, %v2132
  %v2499 = vpack.c.b16 %v2136, %v2133
  %v2500 = vpack.c.b16 %v2137, %v2134
  %v2501 = vpack.c.b16 %v2141, %v2138
  %v2502 = vpack.c.b16 %v2142, %v2139
  %v2503 = vpack.c.b16 %v2143, %v2140
  %v2504 = vpack.c.b16 %v2147, %v2144
  %v2505 = vpack.c.b16 %v2148, %v2145
  %v2506 = vpack.c.b16 %v2149, %v2146
  %v2507 = vpack.c.b16 %v2153, %v2150
  %v2508 = vpack.c.b16 %v2154, %v2151
  %v2509 = vpack.c.b16 %v2155, %v2152
  %v2510 = vpack.c.b16 %v2159, %v2156
  %v2511 = vpack.c.b16 %v2160, %v2157
  %v2512 = vpack.c.b16 %v2161, %v2158
  %v2513 = vpack.c.b16 %v2165, %v2162
  %v2514 = vpack.c.b16 %v2166, %v2163
  %v2515 = vpack.c.b16 %v2167, %v2164
  %v2516 = vpack.c.b16 %v2171, %v2168
  %v2517 = vpack.c.b16 %v2172, %v2169
  %v2518 = vpack.c.b16 %v2173, %v2170
  %v2519 = vpack.c.b16 %v2177, %v2174
  %v2520 = vpack.c.b16 %v2178, %v2175
  %v2521 = vpack.c.b16 %v2179, %v2176
  %v2522 = vpack.c.b16 %v2183, %v2180
  %v2523 = vpack.c.b16 %v2184, %v2181
  %v2524 = vpack.c.b16 %v2185, %v2182
  %v2525 = vpack.c.b16 %v2189, %v2186
  %v2526 = vpack.c.b16 %v2190, %v2187
  %v2527 = vpack.c.b16 %v2191, %v2188
  %v2528 = vpack.c.b16 %v2195, %v2192
  %v2529 = vpack.c.b16 %v2196, %v2193
  %v2530 = vpack.c.b16 %v2197, %v2194
  %v2531 = vpack.c.b16 %v2201, %v2198
  %v2532 = vpack.c.b16 %v2202, %v2199
  %v2533 = vpack.c.b16 %v2203, %v2200
  %v2534 = vpack.c.b16 %v2207, %v2204
  %v2535 = vpack.c.b16 %v2208, %v2205
  %v2536 = vpack.c.b16 %v2209, %v2206
  %v2537 = vpack.c.b16 %v2213, %v2210
  %v2538 = vpack.c.b16 %v2214, %v2211
  %v2539 = vpack.c.b16 %v2215, %v2212
  %v2540 = vpack.c.b16 %v2219, %v2216
  %v2541 = vpack.c.b16 %v2220, %v2217
  %v2542 = vpack.c.b16 %v2221, %v2218
  %v2543 = vpack.c.b16 %v2225, %v2222
  %v2544 = vpack.c.b16 %v2226, %v2223
  %v2545 = vpack.c.b16 %v2227, %v2224
  %v2546 = vpack.c.b16 %v2231, %v2228
  %v2547 = vpack.c.b16 %v2232, %v2229
  %v2548 = vpack.c.b16 %v2233, %v2230
  %v2549 = vpack.c.b16 %v2237, %v2234
  %v2550 = vpack.c.b16 %v2238, %v2235
  %v2551 = vpack.c.b16 %v2239, %v2236
  %v2552 = vpack.c.b16 %v2243, %v2240
  %v2553 = vpack.c.b16 %v2244, %v2241
  %v2554 = vpack.c.b16 %v2245, %v2242
  %v2555 = vpack.c.b16 %v2249, %v2246
  %v2556 = vpack.c.b16 %v2250, %v2247
  %v2557 = vpack.c.b16 %v2251, %v2248
  %v2558 = vpack.c.b16 %v2255, %v2252
  %v2559 = vpack.c.b16 %v2256, %v2253
  %v2560 = vpack.c.b16 %v2257, %v2254
  %v2561 = vpack.c.b16 %v2261, %v2258
  %v2562 = vpack.c.b16 %v2262, %v2259
  %v2563 = vpack.c.b16 %v2263, %v2260
  %v2564 = vpack.c.b16 %v2267, %v2264
  %v2565 = vpack.c.b16 %v2268, %v2265
  %v2566 = vpack.c.b16 %v2269, %v2266
  %v2567 = vpack.c.b16 %v2273, %v2270
  %v2568 = vpack.c.b16 %v2274, %v2271
  %v2569 = vpack.c.b16 %v2275, %v2272
  %v2570 = vpack.c.b16 %v2279, %v2276
  %v2571 = vpack.c.b16 %v2280, %v2277
  %v2572 = vpack.c.b16 %v2281, %v2278
  %v2573 = vpack.c.b16 %v2285, %v2282
  %v2574 = vpack.c.b16 %v2286, %v2283
  %v2575 = vpack.c.b16 %v2287, %v2284
  %2864 = vmatprep.subr.bf16.mxu0 %v2289
  %2865 = vmatpush1.bf16.msra.mxu0 %v2288
  %2866 = vmatprep.subr.bf16.mxu0 %v2292
  %2867 = vmatpush1.bf16.msra.mxu0 %v2291
  %2868 = vmatprep.subr.bf16.mxu0 %v2295
  %2869 = vmatpush1.bf16.msra.mxu0 %v2294
  %2870 = vmatprep.subr.bf16.mxu0 %v2298
  %2871 = vmatpush1.bf16.msra.mxu0 %v2297
  %2872 = vmatprep.subr.bf16.mxu0 %v2301
  %2873 = vmatpush1.bf16.msra.mxu0 %v2300
  %2874 = vmatprep.subr.bf16.mxu0 %v2304
  %2875 = vmatpush1.bf16.msra.mxu0 %v2303
  %2876 = vmatprep.subr.bf16.mxu0 %v2307
  %2877 = vmatpush1.bf16.msra.mxu0 %v2306
  %2878 = vmatprep.subr.bf16.mxu0 %v2310
  %2879 = vmatpush1.bf16.msra.mxu0 %v2309
  %2880 = vmatprep.subr.bf16.mxu0 %v2313
  %2881 = vmatpush1.bf16.msra.mxu0 %v2312
  %2882 = vmatprep.subr.bf16.mxu0 %v2316
  %2883 = vmatpush1.bf16.msra.mxu0 %v2315
  %2884 = vmatprep.subr.bf16.mxu0 %v2319
  %2885 = vmatpush1.bf16.msra.mxu0 %v2318
  %2886 = vmatprep.subr.bf16.mxu0 %v2322
  %2887 = vmatpush1.bf16.msra.mxu0 %v2321
  %2888 = vmatprep.subr.bf16.mxu0 %v2325
  %2889 = vmatpush1.bf16.msra.mxu0 %v2324
  %2890 = vmatprep.subr.bf16.mxu0 %v2328
  %2891 = vmatpush1.bf16.msra.mxu0 %v2327
  %2892 = vmatprep.subr.bf16.mxu0 %v2331
  %2893 = vmatpush1.bf16.msra.mxu0 %v2330
  %2894 = vmatprep.subr.bf16.mxu0 %v2334
  %2895 = vmatpush1.bf16.msra.mxu0 %v2333
  %2896 = vmatprep.mubr.bf16.mxu0 %v1017
  %2897 = vmatmul.mubr.bf16.gmra.mrb[0].mxu0 %v1016
  %v2898 = vpop.f32.mrb[0].mxu0
  %v2899 = vadd.f32 %v554, %v2898
  %v2900 = vpop.f32.mrb[0].mxu0
  %v2901 = vadd.f32 %v558, %v2900
  %v2902 = vpop.f32.mrb[0].mxu0
  %v2903 = vadd.f32 %v554, %v2902
  %v2904 = vpop.f32.mrb[0].mxu0
  %v2905 = vadd.f32 %v558, %v2904
  %2906 = vmatprep.mubr.bf16.mxu0 %v1029
  %2907 = vmatmul.mubr.bf16.gmra.mrb[0].mxu0 %v1028
  %v2908 = vpop.f32.mrb[0].mxu0
  %v2909 = vadd.f32 %v554, %v2908
  %v2910 = vpop.f32.mrb[0].mxu0
  %v2911 = vadd.f32 %v558, %v2910
  %v2912 = vpop.f32.mrb[0].mxu0
  %v2913 = vadd.f32 %v554, %v2912
  %v2914 = vpop.f32.mrb[0].mxu0
  %v2915 = vadd.f32 %v558, %v2914
  %2916 = vmatprep.mubr.bf16.mxu0 %v1041
  %2917 = vmatmul.mubr.bf16.gmra.mrb[0].mxu0 %v1040
  %v2918 = vpop.f32.mrb[0].mxu0
  %v2919 = vadd.f32 %v554, %v2918
  %v2920 = vpop.f32.mrb[0].mxu0
  %v2921 = vadd.f32 %v558, %v2920
  %v2922 = vpop.f32.mrb[0].mxu0
  %v2923 = vadd.f32 %v554, %v2922
  %v2924 = vpop.f32.mrb[0].mxu0
  %v2925 = vadd.f32 %v558, %v2924
  %2926 = vmatprep.mubr.bf16.mxu0 %v1053
  %2927 = vmatmul.mubr.bf16.gmra.mrb[0].mxu0 %v1052
  %v2928 = vpop.f32.mrb[0].mxu0
  %v2929 = vadd.f32 %v554, %v2928
  %v2930 = vpop.f32.mrb[0].mxu0
  %v2931 = vadd.f32 %v558, %v2930
  %v2932 = vpop.f32.mrb[0].mxu0
  %v2933 = vadd.f32 %v554, %v2932
  %v2934 = vpop.f32.mrb[0].mxu0
  %v2935 = vadd.f32 %v558, %v2934
  %2936 = vmatprep.mubr.bf16.mxu0 %v1065
  %2937 = vmatmul.mubr.bf16.gmra.mrb[0].mxu0 %v1064
  %v2938 = vpop.f32.mrb[0].mxu0
  %v2939 = vadd.f32 %v554, %v2938
  %v2940 = vpop.f32.mrb[0].mxu0
  %v2941 = vadd.f32 %v558, %v2940
  %v2942 = vpop.f32.mrb[0].mxu0
  %v2943 = vadd.f32 %v554, %v2942
  %v2944 = vpop.f32.mrb[0].mxu0
  %v2945 = vadd.f32 %v558, %v2944
  %2946 = vmatprep.mubr.bf16.mxu0 %v1077
  %2947 = vmatmul.mubr.bf16.gmra.mrb[0].mxu0 %v1076
  %v2948 = vpop.f32.mrb[0].mxu0
  %v2949 = vadd.f32 %v554, %v2948
  %v2950 = vpop.f32.mrb[0].mxu0
  %v2951 = vadd.f32 %v558, %v2950
  %v2952 = vpop.f32.mrb[0].mxu0
  %v2953 = vadd.f32 %v554, %v2952
  %v2954 = vpop.f32.mrb[0].mxu0
  %v2955 = vadd.f32 %v558, %v2954
  %2956 = vmatprep.mubr.bf16.mxu0 %v1089
  %2957 = vmatmul.mubr.bf16.gmra.mrb[0].mxu0 %v1088
  %v2958 = vpop.f32.mrb[0].mxu0
  %v2959 = vadd.f32 %v554, %v2958
  %v2960 = vpop.f32.mrb[0].mxu0
  %v2961 = vadd.f32 %v558, %v2960
  %v2962 = vpop.f32.mrb[0].mxu0
  %v2963 = vadd.f32 %v554, %v2962
  %v2964 = vpop.f32.mrb[0].mxu0
  %v2965 = vadd.f32 %v558, %v2964
  %2966 = vmatprep.mubr.bf16.mxu0 %v1101
  %2967 = vmatmul.mubr.bf16.gmra.mrb[0].mxu0 %v1100
  %v2968 = vpop.f32.mrb[0].mxu0
  %v2969 = vadd.f32 %v554, %v2968
  %v2970 = vpop.f32.mrb[0].mxu0
  %v2971 = vadd.f32 %v558, %v2970
  %v2972 = vpop.f32.mrb[0].mxu0
  %v2973 = vadd.f32 %v554, %v2972
  %v2974 = vpop.f32.mrb[0].mxu0
  %v2975 = vadd.f32 %v558, %v2974
  %2976 = vmatprep.mubr.bf16.mxu0 %v1113
  %2977 = vmatmul.mubr.bf16.gmra.mrb[0].mxu0 %v1112
  %v2978 = vpop.f32.mrb[0].mxu0
  %v2979 = vadd.f32 %v554, %v2978
  %v2980 = vpop.f32.mrb[0].mxu0
  %v2981 = vadd.f32 %v558, %v2980
  %v2982 = vpop.f32.mrb[0].mxu0
  %v2983 = vadd.f32 %v554, %v2982
  %v2984 = vpop.f32.mrb[0].mxu0
  %v2985 = vadd.f32 %v558, %v2984
  %2986 = vmatprep.mubr.bf16.mxu0 %v1125
  %2987 = vmatmul.mubr.bf16.gmra.mrb[0].mxu0 %v1124
  %v2988 = vpop.f32.mrb[0].mxu0
  %v2989 = vadd.f32 %v554, %v2988
  %v2990 = vpop.f32.mrb[0].mxu0
  %v2991 = vadd.f32 %v558, %v2990
  %v2992 = vpop.f32.mrb[0].mxu0
  %v2993 = vadd.f32 %v554, %v2992
  %v2994 = vpop.f32.mrb[0].mxu0
  %v2995 = vadd.f32 %v558, %v2994
  %2996 = vmatprep.mubr.bf16.mxu0 %v1137
  %2997 = vmatmul.mubr.bf16.gmra.mrb[0].mxu0 %v1136
  %v2998 = vpop.f32.mrb[0].mxu0
  %v2999 = vadd.f32 %v554, %v2998
  %v3000 = vpop.f32.mrb[0].mxu0
  %v3001 = vadd.f32 %v558, %v3000
  %v3002 = vpop.f32.mrb[0].mxu0
  %v3003 = vadd.f32 %v554, %v3002
  %v3004 = vpop.f32.mrb[0].mxu0
  %v3005 = vadd.f32 %v558, %v3004
  %3006 = vmatprep.mubr.bf16.mxu0 %v1149
  %3007 = vmatmul.mubr.bf16.gmra.mrb[0].mxu0 %v1148
  %v3008 = vpop.f32.mrb[0].mxu0
  %v3009 = vadd.f32 %v554, %v3008
  %v3010 = vpop.f32.mrb[0].mxu0
  %v3011 = vadd.f32 %v558, %v3010
  %v3012 = vpop.f32.mrb[0].mxu0
  %v3013 = vadd.f32 %v554, %v3012
  %v3014 = vpop.f32.mrb[0].mxu0
  %v3015 = vadd.f32 %v558, %v3014
  %3016 = vmatprep.mubr.bf16.mxu0 %v1161
  %3017 = vmatmul.mubr.bf16.gmra.mrb[0].mxu0 %v1160
  %v3018 = vpop.f32.mrb[0].mxu0
  %v3019 = vadd.f32 %v554, %v3018
  %v3020 = vpop.f32.mrb[0].mxu0
  %v3021 = vadd.f32 %v558, %v3020
  %v3022 = vpop.f32.mrb[0].mxu0
  %v3023 = vpop.f32.mrb[0].mxu0
  %3024 = vdwg.mxu0
  %3025 = vmatprep.subr.bf16.mxu0 %v2337
  %3026 = vmatpush1.bf16.msra.mxu0 %v2336
  %3027 = vmatprep.subr.bf16.mxu0 %v2340
  %3028 = vmatpush1.bf16.msra.mxu0 %v2339
  %3029 = vmatprep.subr.bf16.mxu0 %v2343
  %3030 = vmatpush1.bf16.msra.mxu0 %v2342
  %3031 = vmatprep.subr.bf16.mxu0 %v2346
  %3032 = vmatpush1.bf16.msra.mxu0 %v2345
  %3033 = vmatprep.subr.bf16.mxu0 %v2349
  %3034 = vmatpush1.bf16.msra.mxu0 %v2348
  %3035 = vmatprep.subr.bf16.mxu0 %v2352
  %3036 = vmatpush1.bf16.msra.mxu0 %v2351
  %3037 = vmatprep.subr.bf16.mxu0 %v2355
  %3038 = vmatpush1.bf16.msra.mxu0 %v2354
  %3039 = vmatprep.subr.bf16.mxu0 %v2358
  %3040 = vmatpush1.bf16.msra.mxu0 %v2357
  %3041 = vmatprep.subr.bf16.mxu0 %v2361
  %3042 = vmatpush1.bf16.msra.mxu0 %v2360
  %3043 = vmatprep.subr.bf16.mxu0 %v2364
  %3044 = vmatpush1.bf16.msra.mxu0 %v2363
  %3045 = vmatprep.subr.bf16.mxu0 %v2367
  %3046 = vmatpush1.bf16.msra.mxu0 %v2366
  %3047 = vmatprep.subr.bf16.mxu0 %v2370
  %3048 = vmatpush1.bf16.msra.mxu0 %v2369
  %3049 = vmatprep.subr.bf16.mxu0 %v2373
  %3050 = vmatpush1.bf16.msra.mxu0 %v2372
  %3051 = vmatprep.subr.bf16.mxu0 %v2376
  %3052 = vmatpush1.bf16.msra.mxu0 %v2375
  %3053 = vmatprep.subr.bf16.mxu0 %v2379
  %3054 = vmatpush1.bf16.msra.mxu0 %v2378
  %3055 = vmatprep.subr.bf16.mxu0 %v2382
  %3056 = vmatpush1.bf16.msra.mxu0 %v2381
  %3057 = vmatprep.mubr.bf16.mxu0 %v1019
  %3058 = vmatmul.mubr.bf16.gmra.mrb[0].mxu0 %v1018
  %v3059 = vpop.f32.mrb[0].mxu0
  %v3060 = vadd.f32 %v2899, %v3059
  %v3061 = vpop.f32.mrb[0].mxu0
  %v3062 = vadd.f32 %v2901, %v3061
  %v3063 = vpop.f32.mrb[0].mxu0
  %v3064 = vadd.f32 %v2903, %v3063
  %v3065 = vpop.f32.mrb[0].mxu0
  %v3066 = vadd.f32 %v2905, %v3065
  %3067 = vmatprep.mubr.bf16.mxu0 %v1031
  %3068 = vmatmul.mubr.bf16.gmra.mrb[0].mxu0 %v1030
  %v3069 = vpop.f32.mrb[0].mxu0
  %v3070 = vadd.f32 %v2909, %v3069
  %v3071 = vpop.f32.mrb[0].mxu0
  %v3072 = vadd.f32 %v2911, %v3071
  %v3073 = vpop.f32.mrb[0].mxu0
  %v3074 = vadd.f32 %v2913, %v3073
  %v3075 = vpop.f32.mrb[0].mxu0
  %v3076 = vadd.f32 %v2915, %v3075
  %3077 = vmatprep.mubr.bf16.mxu0 %v1043
  %3078 = vmatmul.mubr.bf16.gmra.mrb[0].mxu0 %v1042
  %v3079 = vpop.f32.mrb[0].mxu0
  %v3080 = vadd.f32 %v2919, %v3079
  %v3081 = vpop.f32.mrb[0].mxu0
  %v3082 = vadd.f32 %v2921, %v3081
  %v3083 = vpop.f32.mrb[0].mxu0
  %v3084 = vadd.f32 %v2923, %v3083
  %v3085 = vpop.f32.mrb[0].mxu0
  %v3086 = vadd.f32 %v2925, %v3085
  %3087 = vmatprep.mubr.bf16.mxu0 %v1055
  %3088 = vmatmul.mubr.bf16.gmra.mrb[0].mxu0 %v1054
  %v3089 = vpop.f32.mrb[0].mxu0
  %v3090 = vadd.f32 %v2929, %v3089
  %v3091 = vpop.f32.mrb[0].mxu0
  %v3092 = vadd.f32 %v2931, %v3091
  %v3093 = vpop.f32.mrb[0].mxu0
  %v3094 = vadd.f32 %v2933, %v3093
  %v3095 = vpop.f32.mrb[0].mxu0
  %v3096 = vadd.f32 %v2935, %v3095
  %3097 = vmatprep.mubr.bf16.mxu0 %v1067
  %3098 = vmatmul.mubr.bf16.gmra.mrb[0].mxu0 %v1066
  %v3099 = vpop.f32.mrb[0].mxu0
  %v3100 = vadd.f32 %v2939, %v3099
  %v3101 = vpop.f32.mrb[0].mxu0
  %v3102 = vadd.f32 %v2941, %v3101
  %v3103 = vpop.f32.mrb[0].mxu0
  %v3104 = vadd.f32 %v2943, %v3103
  %v3105 = vpop.f32.mrb[0].mxu0
  %v3106 = vadd.f32 %v2945, %v3105
  %3107 = vmatprep.mubr.bf16.mxu0 %v1079
  %3108 = vmatmul.mubr.bf16.gmra.mrb[0].mxu0 %v1078
  %v3109 = vpop.f32.mrb[0].mxu0
  %v3110 = vadd.f32 %v2949, %v3109
  %v3111 = vpop.f32.mrb[0].mxu0
  %v3112 = vadd.f32 %v2951, %v3111
  %v3113 = vpop.f32.mrb[0].mxu0
  %v3114 = vadd.f32 %v2953, %v3113
  %v3115 = vpop.f32.mrb[0].mxu0
  %v3116 = vadd.f32 %v2955, %v3115
  %3117 = vmatprep.mubr.bf16.mxu0 %v1091
  %3118 = vmatmul.mubr.bf16.gmra.mrb[0].mxu0 %v1090
  %v3119 = vpop.f32.mrb[0].mxu0
  %v3120 = vadd.f32 %v2959, %v3119
  %v3121 = vpop.f32.mrb[0].mxu0
  %v3122 = vadd.f32 %v2961, %v3121
  %v3123 = vpop.f32.mrb[0].mxu0
  %v3124 = vadd.f32 %v2963, %v3123
  %v3125 = vpop.f32.mrb[0].mxu0
  %v3126 = vadd.f32 %v2965, %v3125
  %3127 = vmatprep.mubr.bf16.mxu0 %v1103
  %3128 = vmatmul.mubr.bf16.gmra.mrb[0].mxu0 %v1102
  %v3129 = vpop.f32.mrb[0].mxu0
  %v3130 = vadd.f32 %v2969, %v3129
  %v3131 = vpop.f32.mrb[0].mxu0
  %v3132 = vadd.f32 %v2971, %v3131
  %v3133 = vpop.f32.mrb[0].mxu0
  %v3134 = vadd.f32 %v2973, %v3133
  %v3135 = vpop.f32.mrb[0].mxu0
  %v3136 = vadd.f32 %v2975, %v3135
  %3137 = vmatprep.mubr.bf16.mxu0 %v1115
  %3138 = vmatmul.mubr.bf16.gmra.mrb[0].mxu0 %v1114
  %v3139 = vpop.f32.mrb[0].mxu0
  %v3140 = vadd.f32 %v2979, %v3139
  %v3141 = vpop.f32.mrb[0].mxu0
  %v3142 = vadd.f32 %v2981, %v3141
  %v3143 = vpop.f32.mrb[0].mxu0
  %v3144 = vadd.f32 %v2983, %v3143
  %v3145 = vpop.f32.mrb[0].mxu0
  %v3146 = vadd.f32 %v2985, %v3145
  %3147 = vmatprep.mubr.bf16.mxu0 %v1127
  %3148 = vmatmul.mubr.bf16.gmra.mrb[0].mxu0 %v1126
  %v3149 = vpop.f32.mrb[0].mxu0
  %v3150 = vadd.f32 %v2989, %v3149
  %v3151 = vpop.f32.mrb[0].mxu0
  %v3152 = vadd.f32 %v2991, %v3151
  %v3153 = vpop.f32.mrb[0].mxu0
  %v3154 = vadd.f32 %v2993, %v3153
  %v3155 = vpop.f32.mrb[0].mxu0
  %v3156 = vadd.f32 %v2995, %v3155
  %3157 = vmatprep.mubr.bf16.mxu0 %v1139
  %3158 = vmatmul.mubr.bf16.gmra.mrb[0].mxu0 %v1138
  %v3159 = vpop.f32.mrb[0].mxu0
  %v3160 = vadd.f32 %v2999, %v3159
  %v3161 = vpop.f32.mrb[0].mxu0
  %v3162 = vadd.f32 %v3001, %v3161
  %v3163 = vpop.f32.mrb[0].mxu0
  %v3164 = vadd.f32 %v3003, %v3163
  %v3165 = vpop.f32.mrb[0].mxu0
  %v3166 = vadd.f32 %v3005, %v3165
  %3167 = vmatprep.mubr.bf16.mxu0 %v1151
  %3168 = vmatmul.mubr.bf16.gmra.mrb[0].mxu0 %v1150
  %v3169 = vpop.f32.mrb[0].mxu0
  %v3170 = vadd.f32 %v3009, %v3169
  %v3171 = vpop.f32.mrb[0].mxu0
  %v3172 = vadd.f32 %v3011, %v3171
  %v3173 = vpop.f32.mrb[0].mxu0
  %v3174 = vadd.f32 %v3013, %v3173
  %v3175 = vpop.f32.mrb[0].mxu0
  %v3176 = vadd.f32 %v3015, %v3175
  %3177 = vmatprep.mubr.bf16.mxu0 %v1163
  %3178 = vmatmul.mubr.bf16.gmra.mrb[0].mxu0 %v1162
  %v3179 = vpop.f32.mrb[0].mxu0
  %v3180 = vadd.f32 %v3019, %v3179
  %v3181 = vpop.f32.mrb[0].mxu0
  %v3182 = vadd.f32 %v3021, %v3181
  %v3183 = vpop.f32.mrb[0].mxu0
  %v3184 = vpop.f32.mrb[0].mxu0
  %3185 = vdwg.mxu0
  %3186 = vmatprep.subr.bf16.mxu0 %v2385
  %3187 = vmatpush1.bf16.msra.mxu0 %v2384
  %3188 = vmatprep.subr.bf16.mxu0 %v2388
  %3189 = vmatpush1.bf16.msra.mxu0 %v2387
  %3190 = vmatprep.subr.bf16.mxu0 %v2391
  %3191 = vmatpush1.bf16.msra.mxu0 %v2390
  %3192 = vmatprep.subr.bf16.mxu0 %v2394
  %3193 = vmatpush1.bf16.msra.mxu0 %v2393
  %3194 = vmatprep.subr.bf16.mxu0 %v2397
  %3195 = vmatpush1.bf16.msra.mxu0 %v2396
  %3196 = vmatprep.subr.bf16.mxu0 %v2400
  %3197 = vmatpush1.bf16.msra.mxu0 %v2399
  %3198 = vmatprep.subr.bf16.mxu0 %v2403
  %3199 = vmatpush1.bf16.msra.mxu0 %v2402
  %3200 = vmatprep.subr.bf16.mxu0 %v2406
  %3201 = vmatpush1.bf16.msra.mxu0 %v2405
  %3202 = vmatprep.subr.bf16.mxu0 %v2409
  %3203 = vmatpush1.bf16.msra.mxu0 %v2408
  %3204 = vmatprep.subr.bf16.mxu0 %v2412
  %3205 = vmatpush1.bf16.msra.mxu0 %v2411
  %3206 = vmatprep.subr.bf16.mxu0 %v2415
  %3207 = vmatpush1.bf16.msra.mxu0 %v2414
  %3208 = vmatprep.subr.bf16.mxu0 %v2418
  %3209 = vmatpush1.bf16.msra.mxu0 %v2417
  %3210 = vmatprep.subr.bf16.mxu0 %v2421
  %3211 = vmatpush1.bf16.msra.mxu0 %v2420
  %3212 = vmatprep.subr.bf16.mxu0 %v2424
  %3213 = vmatpush1.bf16.msra.mxu0 %v2423
  %3214 = vmatprep.subr.bf16.mxu0 %v2427
  %3215 = vmatpush1.bf16.msra.mxu0 %v2426
  %3216 = vmatprep.subr.bf16.mxu0 %v2430
  %3217 = vmatpush1.bf16.msra.mxu0 %v2429
  %3218 = vmatprep.mubr.bf16.mxu0 %v1021
  %3219 = vmatmul.mubr.bf16.gmra.mrb[0].mxu0 %v1020
  %v3220 = vpop.f32.mrb[0].mxu0
  %v3221 = vadd.f32 %v3060, %v3220
  %v3222 = vpop.f32.mrb[0].mxu0
  %v3223 = vadd.f32 %v3062, %v3222
  %v3224 = vpop.f32.mrb[0].mxu0
  %v3225 = vadd.f32 %v3064, %v3224
  %v3226 = vpop.f32.mrb[0].mxu0
  %v3227 = vadd.f32 %v3066, %v3226
  %3228 = vmatprep.mubr.bf16.mxu0 %v1033
  %3229 = vmatmul.mubr.bf16.gmra.mrb[0].mxu0 %v1032
  %v3230 = vpop.f32.mrb[0].mxu0
  %v3231 = vadd.f32 %v3070, %v3230
  %v3232 = vpop.f32.mrb[0].mxu0
  %v3233 = vadd.f32 %v3072, %v3232
  %v3234 = vpop.f32.mrb[0].mxu0
  %v3235 = vadd.f32 %v3074, %v3234
  %v3236 = vpop.f32.mrb[0].mxu0
  %v3237 = vadd.f32 %v3076, %v3236
  %3238 = vmatprep.mubr.bf16.mxu0 %v1045
  %3239 = vmatmul.mubr.bf16.gmra.mrb[0].mxu0 %v1044
  %v3240 = vpop.f32.mrb[0].mxu0
  %v3241 = vadd.f32 %v3080, %v3240
  %v3242 = vpop.f32.mrb[0].mxu0
  %v3243 = vadd.f32 %v3082, %v3242
  %v3244 = vpop.f32.mrb[0].mxu0
  %v3245 = vadd.f32 %v3084, %v3244
  %v3246 = vpop.f32.mrb[0].mxu0
  %v3247 = vadd.f32 %v3086, %v3246
  %3248 = vmatprep.mubr.bf16.mxu0 %v1057
  %3249 = vmatmul.mubr.bf16.gmra.mrb[0].mxu0 %v1056
  %v3250 = vpop.f32.mrb[0].mxu0
  %v3251 = vadd.f32 %v3090, %v3250
  %v3252 = vpop.f32.mrb[0].mxu0
  %v3253 = vadd.f32 %v3092, %v3252
  %v3254 = vpop.f32.mrb[0].mxu0
  %v3255 = vadd.f32 %v3094, %v3254
  %v3256 = vpop.f32.mrb[0].mxu0
  %v3257 = vadd.f32 %v3096, %v3256
  %3258 = vmatprep.mubr.bf16.mxu0 %v1069
  %3259 = vmatmul.mubr.bf16.gmra.mrb[0].mxu0 %v1068
  %v3260 = vpop.f32.mrb[0].mxu0
  %v3261 = vadd.f32 %v3100, %v3260
  %v3262 = vpop.f32.mrb[0].mxu0
  %v3263 = vadd.f32 %v3102, %v3262
  %v3264 = vpop.f32.mrb[0].mxu0
  %v3265 = vadd.f32 %v3104, %v3264
  %v3266 = vpop.f32.mrb[0].mxu0
  %v3267 = vadd.f32 %v3106, %v3266
  %3268 = vmatprep.mubr.bf16.mxu0 %v1081
  %3269 = vmatmul.mubr.bf16.gmra.mrb[0].mxu0 %v1080
  %v3270 = vpop.f32.mrb[0].mxu0
  %v3271 = vadd.f32 %v3110, %v3270
  %v3272 = vpop.f32.mrb[0].mxu0
  %v3273 = vadd.f32 %v3112, %v3272
  %v3274 = vpop.f32.mrb[0].mxu0
  %v3275 = vadd.f32 %v3114, %v3274
  %v3276 = vpop.f32.mrb[0].mxu0
  %v3277 = vadd.f32 %v3116, %v3276
  %3278 = vmatprep.mubr.bf16.mxu0 %v1093
  %3279 = vmatmul.mubr.bf16.gmra.mrb[0].mxu0 %v1092
  %v3280 = vpop.f32.mrb[0].mxu0
  %v3281 = vadd.f32 %v3120, %v3280
  %v3282 = vpop.f32.mrb[0].mxu0
  %v3283 = vadd.f32 %v3122, %v3282
  %v3284 = vpop.f32.mrb[0].mxu0
  %v3285 = vadd.f32 %v3124, %v3284
  %v3286 = vpop.f32.mrb[0].mxu0
  %v3287 = vadd.f32 %v3126, %v3286
  %3288 = vmatprep.mubr.bf16.mxu0 %v1105
  %3289 = vmatmul.mubr.bf16.gmra.mrb[0].mxu0 %v1104
  %v3290 = vpop.f32.mrb[0].mxu0
  %v3291 = vadd.f32 %v3130, %v3290
  %v3292 = vpop.f32.mrb[0].mxu0
  %v3293 = vadd.f32 %v3132, %v3292
  %v3294 = vpop.f32.mrb[0].mxu0
  %v3295 = vadd.f32 %v3134, %v3294
  %v3296 = vpop.f32.mrb[0].mxu0
  %v3297 = vadd.f32 %v3136, %v3296
  %3298 = vmatprep.mubr.bf16.mxu0 %v1117
  %3299 = vmatmul.mubr.bf16.gmra.mrb[0].mxu0 %v1116
  %v3300 = vpop.f32.mrb[0].mxu0
  %v3301 = vadd.f32 %v3140, %v3300
  %v3302 = vpop.f32.mrb[0].mxu0
  %v3303 = vadd.f32 %v3142, %v3302
  %v3304 = vpop.f32.mrb[0].mxu0
  %v3305 = vadd.f32 %v3144, %v3304
  %v3306 = vpop.f32.mrb[0].mxu0
  %v3307 = vadd.f32 %v3146, %v3306
  %3308 = vmatprep.mubr.bf16.mxu0 %v1129
  %3309 = vmatmul.mubr.bf16.gmra.mrb[0].mxu0 %v1128
  %v3310 = vpop.f32.mrb[0].mxu0
  %v3311 = vadd.f32 %v3150, %v3310
  %v3312 = vpop.f32.mrb[0].mxu0
  %v3313 = vadd.f32 %v3152, %v3312
  %v3314 = vpop.f32.mrb[0].mxu0
  %v3315 = vadd.f32 %v3154, %v3314
  %v3316 = vpop.f32.mrb[0].mxu0
  %v3317 = vadd.f32 %v3156, %v3316
  %3318 = vmatprep.mubr.bf16.mxu0 %v1141
  %3319 = vmatmul.mubr.bf16.gmra.mrb[0].mxu0 %v1140
  %v3320 = vpop.f32.mrb[0].mxu0
  %v3321 = vadd.f32 %v3160, %v3320
  %v3322 = vpop.f32.mrb[0].mxu0
  %v3323 = vadd.f32 %v3162, %v3322
  %v3324 = vpop.f32.mrb[0].mxu0
  %v3325 = vadd.f32 %v3164, %v3324
  %v3326 = vpop.f32.mrb[0].mxu0
  %v3327 = vadd.f32 %v3166, %v3326
  %3328 = vmatprep.mubr.bf16.mxu0 %v1153
  %3329 = vmatmul.mubr.bf16.gmra.mrb[0].mxu0 %v1152
  %v3330 = vpop.f32.mrb[0].mxu0
  %v3331 = vadd.f32 %v3170, %v3330
  %v3332 = vpop.f32.mrb[0].mxu0
  %v3333 = vadd.f32 %v3172, %v3332
  %v3334 = vpop.f32.mrb[0].mxu0
  %v3335 = vadd.f32 %v3174, %v3334
  %v3336 = vpop.f32.mrb[0].mxu0
  %v3337 = vadd.f32 %v3176, %v3336
  %3338 = vmatprep.mubr.bf16.mxu0 %v1165
  %3339 = vmatmul.mubr.bf16.gmra.mrb[0].mxu0 %v1164
  %v3340 = vpop.f32.mrb[0].mxu0
  %v3341 = vadd.f32 %v3180, %v3340
  %v3342 = vpop.f32.mrb[0].mxu0
  %v3343 = vadd.f32 %v3182, %v3342
  %v3344 = vpop.f32.mrb[0].mxu0
  %v3345 = vpop.f32.mrb[0].mxu0
  %3346 = vdwg.mxu0
  %3347 = vmatprep.subr.bf16.mxu0 %v2433
  %3348 = vmatpush1.bf16.msra.mxu0 %v2432
  %3349 = vmatprep.subr.bf16.mxu0 %v2436
  %3350 = vmatpush1.bf16.msra.mxu0 %v2435
  %3351 = vmatprep.subr.bf16.mxu0 %v2439
  %3352 = vmatpush1.bf16.msra.mxu0 %v2438
  %3353 = vmatprep.subr.bf16.mxu0 %v2442
  %3354 = vmatpush1.bf16.msra.mxu0 %v2441
  %3355 = vmatprep.subr.bf16.mxu0 %v2445
  %3356 = vmatpush1.bf16.msra.mxu0 %v2444
  %3357 = vmatprep.subr.bf16.mxu0 %v2448
  %3358 = vmatpush1.bf16.msra.mxu0 %v2447
  %3359 = vmatprep.subr.bf16.mxu0 %v2451
  %3360 = vmatpush1.bf16.msra.mxu0 %v2450
  %3361 = vmatprep.subr.bf16.mxu0 %v2454
  %3362 = vmatpush1.bf16.msra.mxu0 %v2453
  %3363 = vmatprep.subr.bf16.mxu0 %v2457
  %3364 = vmatpush1.bf16.msra.mxu0 %v2456
  %3365 = vmatprep.subr.bf16.mxu0 %v2460
  %3366 = vmatpush1.bf16.msra.mxu0 %v2459
  %3367 = vmatprep.subr.bf16.mxu0 %v2463
  %3368 = vmatpush1.bf16.msra.mxu0 %v2462
  %3369 = vmatprep.subr.bf16.mxu0 %v2466
  %3370 = vmatpush1.bf16.msra.mxu0 %v2465
  %3371 = vmatprep.subr.bf16.mxu0 %v2469
  %3372 = vmatpush1.bf16.msra.mxu0 %v2468
  %3373 = vmatprep.subr.bf16.mxu0 %v2472
  %3374 = vmatpush1.bf16.msra.mxu0 %v2471
  %3375 = vmatprep.subr.bf16.mxu0 %v2475
  %3376 = vmatpush1.bf16.msra.mxu0 %v2474
  %3377 = vmatprep.subr.bf16.mxu0 %v2478
  %3378 = vmatpush1.bf16.msra.mxu0 %v2477
  %3379 = vmatprep.mubr.bf16.mxu0 %v1023
  %3380 = vmatmul.mubr.bf16.gmra.mrb[0].mxu0 %v1022
  %v3381 = vpop.f32.mrb[0].mxu0
  %v3382 = vadd.f32 %v3221, %v3381
  %v3383 = vpop.f32.mrb[0].mxu0
  %v3384 = vadd.f32 %v3223, %v3383
  %v3385 = vpop.f32.mrb[0].mxu0
  %v3386 = vadd.f32 %v3225, %v3385
  %v3387 = vpop.f32.mrb[0].mxu0
  %v3388 = vadd.f32 %v3227, %v3387
  %3389 = vmatprep.mubr.bf16.mxu0 %v1035
  %3390 = vmatmul.mubr.bf16.gmra.mrb[0].mxu0 %v1034
  %v3391 = vpop.f32.mrb[0].mxu0
  %v3392 = vadd.f32 %v3231, %v3391
  %v3393 = vpop.f32.mrb[0].mxu0
  %v3394 = vadd.f32 %v3233, %v3393
  %v3395 = vpop.f32.mrb[0].mxu0
  %v3396 = vadd.f32 %v3235, %v3395
  %v3397 = vpop.f32.mrb[0].mxu0
  %v3398 = vadd.f32 %v3237, %v3397
  %3399 = vmatprep.mubr.bf16.mxu0 %v1047
  %3400 = vmatmul.mubr.bf16.gmra.mrb[0].mxu0 %v1046
  %v3401 = vpop.f32.mrb[0].mxu0
  %v3402 = vadd.f32 %v3241, %v3401
  %v3403 = vpop.f32.mrb[0].mxu0
  %v3404 = vadd.f32 %v3243, %v3403
  %v3405 = vpop.f32.mrb[0].mxu0
  %v3406 = vadd.f32 %v3245, %v3405
  %v3407 = vpop.f32.mrb[0].mxu0
  %v3408 = vadd.f32 %v3247, %v3407
  %3409 = vmatprep.mubr.bf16.mxu0 %v1059
  %3410 = vmatmul.mubr.bf16.gmra.mrb[0].mxu0 %v1058
  %v3411 = vpop.f32.mrb[0].mxu0
  %v3412 = vadd.f32 %v3251, %v3411
  %v3413 = vpop.f32.mrb[0].mxu0
  %v3414 = vadd.f32 %v3253, %v3413
  %v3415 = vpop.f32.mrb[0].mxu0
  %v3416 = vadd.f32 %v3255, %v3415
  %v3417 = vpop.f32.mrb[0].mxu0
  %v3418 = vadd.f32 %v3257, %v3417
  %3419 = vmatprep.mubr.bf16.mxu0 %v1071
  %3420 = vmatmul.mubr.bf16.gmra.mrb[0].mxu0 %v1070
  %v3421 = vpop.f32.mrb[0].mxu0
  %v3422 = vadd.f32 %v3261, %v3421
  %v3423 = vpop.f32.mrb[0].mxu0
  %v3424 = vadd.f32 %v3263, %v3423
  %v3425 = vpop.f32.mrb[0].mxu0
  %v3426 = vadd.f32 %v3265, %v3425
  %v3427 = vpop.f32.mrb[0].mxu0
  %v3428 = vadd.f32 %v3267, %v3427
  %3429 = vmatprep.mubr.bf16.mxu0 %v1083
  %3430 = vmatmul.mubr.bf16.gmra.mrb[0].mxu0 %v1082
  %v3431 = vpop.f32.mrb[0].mxu0
  %v3432 = vadd.f32 %v3271, %v3431
  %v3433 = vpop.f32.mrb[0].mxu0
  %v3434 = vadd.f32 %v3273, %v3433
  %v3435 = vpop.f32.mrb[0].mxu0
  %v3436 = vadd.f32 %v3275, %v3435
  %v3437 = vpop.f32.mrb[0].mxu0
  %v3438 = vadd.f32 %v3277, %v3437
  %3439 = vmatprep.mubr.bf16.mxu0 %v1095
  %3440 = vmatmul.mubr.bf16.gmra.mrb[0].mxu0 %v1094
  %v3441 = vpop.f32.mrb[0].mxu0
  %v3442 = vadd.f32 %v3281, %v3441
  %v3443 = vpop.f32.mrb[0].mxu0
  %v3444 = vadd.f32 %v3283, %v3443
  %v3445 = vpop.f32.mrb[0].mxu0
  %v3446 = vadd.f32 %v3285, %v3445
  %v3447 = vpop.f32.mrb[0].mxu0
  %v3448 = vadd.f32 %v3287, %v3447
  %3449 = vmatprep.mubr.bf16.mxu0 %v1107
  %3450 = vmatmul.mubr.bf16.gmra.mrb[0].mxu0 %v1106
  %v3451 = vpop.f32.mrb[0].mxu0
  %v3452 = vadd.f32 %v3291, %v3451
  %v3453 = vpop.f32.mrb[0].mxu0
  %v3454 = vadd.f32 %v3293, %v3453
  %v3455 = vpop.f32.mrb[0].mxu0
  %v3456 = vadd.f32 %v3295, %v3455
  %v3457 = vpop.f32.mrb[0].mxu0
  %v3458 = vadd.f32 %v3297, %v3457
  %3459 = vmatprep.mubr.bf16.mxu0 %v1119
  %3460 = vmatmul.mubr.bf16.gmra.mrb[0].mxu0 %v1118
  %v3461 = vpop.f32.mrb[0].mxu0
  %v3462 = vadd.f32 %v3301, %v3461
  %v3463 = vpop.f32.mrb[0].mxu0
  %v3464 = vadd.f32 %v3303, %v3463
  %v3465 = vpop.f32.mrb[0].mxu0
  %v3466 = vadd.f32 %v3305, %v3465
  %v3467 = vpop.f32.mrb[0].mxu0
  %v3468 = vadd.f32 %v3307, %v3467
  %3469 = vmatprep.mubr.bf16.mxu0 %v1131
  %3470 = vmatmul.mubr.bf16.gmra.mrb[0].mxu0 %v1130
  %v3471 = vpop.f32.mrb[0].mxu0
  %v3472 = vadd.f32 %v3311, %v3471
  %v3473 = vpop.f32.mrb[0].mxu0
  %v3474 = vadd.f32 %v3313, %v3473
  %v3475 = vpop.f32.mrb[0].mxu0
  %v3476 = vadd.f32 %v3315, %v3475
  %v3477 = vpop.f32.mrb[0].mxu0
  %v3478 = vadd.f32 %v3317, %v3477
  %3479 = vmatprep.mubr.bf16.mxu0 %v1143
  %3480 = vmatmul.mubr.bf16.gmra.mrb[0].mxu0 %v1142
  %v3481 = vpop.f32.mrb[0].mxu0
  %v3482 = vadd.f32 %v3321, %v3481
  %v3483 = vpop.f32.mrb[0].mxu0
  %v3484 = vadd.f32 %v3323, %v3483
  %v3485 = vpop.f32.mrb[0].mxu0
  %v3486 = vadd.f32 %v3325, %v3485
  %v3487 = vpop.f32.mrb[0].mxu0
  %v3488 = vadd.f32 %v3327, %v3487
  %3489 = vmatprep.mubr.bf16.mxu0 %v1155
  %3490 = vmatmul.mubr.bf16.gmra.mrb[0].mxu0 %v1154
  %v3491 = vpop.f32.mrb[0].mxu0
  %v3492 = vadd.f32 %v3331, %v3491
  %v3493 = vpop.f32.mrb[0].mxu0
  %v3494 = vadd.f32 %v3333, %v3493
  %v3495 = vpop.f32.mrb[0].mxu0
  %v3496 = vadd.f32 %v3335, %v3495
  %v3497 = vpop.f32.mrb[0].mxu0
  %v3498 = vadd.f32 %v3337, %v3497
  %3499 = vmatprep.mubr.bf16.mxu0 %v1167
  %3500 = vmatmul.mubr.bf16.gmra.mrb[0].mxu0 %v1166
  %v3501 = vpop.f32.mrb[0].mxu0
  %v3502 = vadd.f32 %v3341, %v3501
  %v3503 = vpop.f32.mrb[0].mxu0
  %v3504 = vadd.f32 %v3343, %v3503
  %v3505 = vpop.f32.mrb[0].mxu0
  %v3506 = vpop.f32.mrb[0].mxu0
  %3507 = vdwg.mxu0
  %3508 = vmatprep.subr.bf16.mxu0 %v2481
  %3509 = vmatpush1.bf16.msra.mxu0 %v2480
  %3510 = vmatprep.subr.bf16.mxu0 %v2484
  %3511 = vmatpush1.bf16.msra.mxu0 %v2483
  %3512 = vmatprep.subr.bf16.mxu0 %v2487
  %3513 = vmatpush1.bf16.msra.mxu0 %v2486
  %3514 = vmatprep.subr.bf16.mxu0 %v2490
  %3515 = vmatpush1.bf16.msra.mxu0 %v2489
  %3516 = vmatprep.subr.bf16.mxu0 %v2493
  %3517 = vmatpush1.bf16.msra.mxu0 %v2492
  %3518 = vmatprep.subr.bf16.mxu0 %v2496
  %3519 = vmatpush1.bf16.msra.mxu0 %v2495
  %3520 = vmatprep.subr.bf16.mxu0 %v2499
  %3521 = vmatpush1.bf16.msra.mxu0 %v2498
  %3522 = vmatprep.subr.bf16.mxu0 %v2502
  %3523 = vmatpush1.bf16.msra.mxu0 %v2501
  %3524 = vmatprep.subr.bf16.mxu0 %v2505
  %3525 = vmatpush1.bf16.msra.mxu0 %v2504
  %3526 = vmatprep.subr.bf16.mxu0 %v2508
  %3527 = vmatpush1.bf16.msra.mxu0 %v2507
  %3528 = vmatprep.subr.bf16.mxu0 %v2511
  %3529 = vmatpush1.bf16.msra.mxu0 %v2510
  %3530 = vmatprep.subr.bf16.mxu0 %v2514
  %3531 = vmatpush1.bf16.msra.mxu0 %v2513
  %3532 = vmatprep.subr.bf16.mxu0 %v2517
  %3533 = vmatpush1.bf16.msra.mxu0 %v2516
  %3534 = vmatprep.subr.bf16.mxu0 %v2520
  %3535 = vmatpush1.bf16.msra.mxu0 %v2519
  %3536 = vmatprep.subr.bf16.mxu0 %v2523
  %3537 = vmatpush1.bf16.msra.mxu0 %v2522
  %3538 = vmatprep.subr.bf16.mxu0 %v2526
  %3539 = vmatpush1.bf16.msra.mxu0 %v2525
  %3540 = vmatprep.mubr.bf16.mxu0 %v1025
  %3541 = vmatmul.mubr.bf16.gmra.mrb[0].mxu0 %v1024
  %v3542 = vpop.f32.mrb[0].mxu0
  %v3543 = vadd.f32 %v3382, %v3542
  %v3544 = vpop.f32.mrb[0].mxu0
  %v3545 = vadd.f32 %v3384, %v3544
  %v3546 = vpop.f32.mrb[0].mxu0
  %v3547 = vadd.f32 %v3386, %v3546
  %v3548 = vpop.f32.mrb[0].mxu0
  %v3549 = vadd.f32 %v3388, %v3548
  %3550 = vmatprep.mubr.bf16.mxu0 %v1037
  %3551 = vmatmul.mubr.bf16.gmra.mrb[0].mxu0 %v1036
  %v3552 = vpop.f32.mrb[0].mxu0
  %v3553 = vadd.f32 %v3392, %v3552
  %v3554 = vpop.f32.mrb[0].mxu0
  %v3555 = vadd.f32 %v3394, %v3554
  %v3556 = vpop.f32.mrb[0].mxu0
  %v3557 = vadd.f32 %v3396, %v3556
  %v3558 = vpop.f32.mrb[0].mxu0
  %v3559 = vadd.f32 %v3398, %v3558
  %3560 = vmatprep.mubr.bf16.mxu0 %v1049
  %3561 = vmatmul.mubr.bf16.gmra.mrb[0].mxu0 %v1048
  %v3562 = vpop.f32.mrb[0].mxu0
  %v3563 = vadd.f32 %v3402, %v3562
  %v3564 = vpop.f32.mrb[0].mxu0
  %v3565 = vadd.f32 %v3404, %v3564
  %v3566 = vpop.f32.mrb[0].mxu0
  %v3567 = vadd.f32 %v3406, %v3566
  %v3568 = vpop.f32.mrb[0].mxu0
  %v3569 = vadd.f32 %v3408, %v3568
  %3570 = vmatprep.mubr.bf16.mxu0 %v1061
  %3571 = vmatmul.mubr.bf16.gmra.mrb[0].mxu0 %v1060
  %v3572 = vpop.f32.mrb[0].mxu0
  %v3573 = vadd.f32 %v3412, %v3572
  %v3574 = vpop.f32.mrb[0].mxu0
  %v3575 = vadd.f32 %v3414, %v3574
  %v3576 = vpop.f32.mrb[0].mxu0
  %v3577 = vadd.f32 %v3416, %v3576
  %v3578 = vpop.f32.mrb[0].mxu0
  %v3579 = vadd.f32 %v3418, %v3578
  %3580 = vmatprep.mubr.bf16.mxu0 %v1073
  %3581 = vmatmul.mubr.bf16.gmra.mrb[0].mxu0 %v1072
  %v3582 = vpop.f32.mrb[0].mxu0
  %v3583 = vadd.f32 %v3422, %v3582
  %v3584 = vpop.f32.mrb[0].mxu0
  %v3585 = vadd.f32 %v3424, %v3584
  %v3586 = vpop.f32.mrb[0].mxu0
  %v3587 = vadd.f32 %v3426, %v3586
  %v3588 = vpop.f32.mrb[0].mxu0
  %v3589 = vadd.f32 %v3428, %v3588
  %3590 = vmatprep.mubr.bf16.mxu0 %v1085
  %3591 = vmatmul.mubr.bf16.gmra.mrb[0].mxu0 %v1084
  %v3592 = vpop.f32.mrb[0].mxu0
  %v3593 = vadd.f32 %v3432, %v3592
  %v3594 = vpop.f32.mrb[0].mxu0
  %v3595 = vadd.f32 %v3434, %v3594
  %v3596 = vpop.f32.mrb[0].mxu0
  %v3597 = vadd.f32 %v3436, %v3596
  %v3598 = vpop.f32.mrb[0].mxu0
  %v3599 = vadd.f32 %v3438, %v3598
  %3600 = vmatprep.mubr.bf16.mxu0 %v1097
  %3601 = vmatmul.mubr.bf16.gmra.mrb[0].mxu0 %v1096
  %v3602 = vpop.f32.mrb[0].mxu0
  %v3603 = vadd.f32 %v3442, %v3602
  %v3604 = vpop.f32.mrb[0].mxu0
  %v3605 = vadd.f32 %v3444, %v3604
  %v3606 = vpop.f32.mrb[0].mxu0
  %v3607 = vadd.f32 %v3446, %v3606
  %v3608 = vpop.f32.mrb[0].mxu0
  %v3609 = vadd.f32 %v3448, %v3608
  %3610 = vmatprep.mubr.bf16.mxu0 %v1109
  %3611 = vmatmul.mubr.bf16.gmra.mrb[0].mxu0 %v1108
  %v3612 = vpop.f32.mrb[0].mxu0
  %v3613 = vadd.f32 %v3452, %v3612
  %v3614 = vpop.f32.mrb[0].mxu0
  %v3615 = vadd.f32 %v3454, %v3614
  %v3616 = vpop.f32.mrb[0].mxu0
  %v3617 = vadd.f32 %v3456, %v3616
  %v3618 = vpop.f32.mrb[0].mxu0
  %v3619 = vadd.f32 %v3458, %v3618
  %3620 = vmatprep.mubr.bf16.mxu0 %v1121
  %3621 = vmatmul.mubr.bf16.gmra.mrb[0].mxu0 %v1120
  %v3622 = vpop.f32.mrb[0].mxu0
  %v3623 = vadd.f32 %v3462, %v3622
  %v3624 = vpop.f32.mrb[0].mxu0
  %v3625 = vadd.f32 %v3464, %v3624
  %v3626 = vpop.f32.mrb[0].mxu0
  %v3627 = vadd.f32 %v3466, %v3626
  %v3628 = vpop.f32.mrb[0].mxu0
  %v3629 = vadd.f32 %v3468, %v3628
  %3630 = vmatprep.mubr.bf16.mxu0 %v1133
  %3631 = vmatmul.mubr.bf16.gmra.mrb[0].mxu0 %v1132
  %v3632 = vpop.f32.mrb[0].mxu0
  %v3633 = vadd.f32 %v3472, %v3632
  %v3634 = vpop.f32.mrb[0].mxu0
  %v3635 = vadd.f32 %v3474, %v3634
  %v3636 = vpop.f32.mrb[0].mxu0
  %v3637 = vadd.f32 %v3476, %v3636
  %v3638 = vpop.f32.mrb[0].mxu0
  %v3639 = vadd.f32 %v3478, %v3638
  %3640 = vmatprep.mubr.bf16.mxu0 %v1145
  %3641 = vmatmul.mubr.bf16.gmra.mrb[0].mxu0 %v1144
  %v3642 = vpop.f32.mrb[0].mxu0
  %v3643 = vadd.f32 %v3482, %v3642
  %v3644 = vpop.f32.mrb[0].mxu0
  %v3645 = vadd.f32 %v3484, %v3644
  %v3646 = vpop.f32.mrb[0].mxu0
  %v3647 = vadd.f32 %v3486, %v3646
  %v3648 = vpop.f32.mrb[0].mxu0
  %v3649 = vadd.f32 %v3488, %v3648
  %3650 = vmatprep.mubr.bf16.mxu0 %v1157
  %3651 = vmatmul.mubr.bf16.gmra.mrb[0].mxu0 %v1156
  %v3652 = vpop.f32.mrb[0].mxu0
  %v3653 = vadd.f32 %v3492, %v3652
  %v3654 = vpop.f32.mrb[0].mxu0
  %v3655 = vadd.f32 %v3494, %v3654
  %v3656 = vpop.f32.mrb[0].mxu0
  %v3657 = vadd.f32 %v3496, %v3656
  %v3658 = vpop.f32.mrb[0].mxu0
  %v3659 = vadd.f32 %v3498, %v3658
  %3660 = vmatprep.mubr.bf16.mxu0 %v1169
  %3661 = vmatmul.mubr.bf16.gmra.mrb[0].mxu0 %v1168
  %v3662 = vpop.f32.mrb[0].mxu0
  %v3663 = vadd.f32 %v3502, %v3662
  %v3664 = vpop.f32.mrb[0].mxu0
  %v3665 = vadd.f32 %v3504, %v3664
  %v3666 = vpop.f32.mrb[0].mxu0
  %v3667 = vpop.f32.mrb[0].mxu0
  %3668 = vdwg.mxu0
  %3669 = vmatprep.subr.bf16.mxu0 %v2529
  %3670 = vmatpush1.bf16.msra.mxu0 %v2528
  %3671 = vmatprep.subr.bf16.mxu0 %v2532
  %3672 = vmatpush1.bf16.msra.mxu0 %v2531
  %3673 = vmatprep.subr.bf16.mxu0 %v2535
  %3674 = vmatpush1.bf16.msra.mxu0 %v2534
  %3675 = vmatprep.subr.bf16.mxu0 %v2538
  %3676 = vmatpush1.bf16.msra.mxu0 %v2537
  %3677 = vmatprep.subr.bf16.mxu0 %v2541
  %3678 = vmatpush1.bf16.msra.mxu0 %v2540
  %3679 = vmatprep.subr.bf16.mxu0 %v2544
  %3680 = vmatpush1.bf16.msra.mxu0 %v2543
  %3681 = vmatprep.subr.bf16.mxu0 %v2547
  %3682 = vmatpush1.bf16.msra.mxu0 %v2546
  %3683 = vmatprep.subr.bf16.mxu0 %v2550
  %3684 = vmatpush1.bf16.msra.mxu0 %v2549
  %3685 = vmatprep.subr.bf16.mxu0 %v2553
  %3686 = vmatpush1.bf16.msra.mxu0 %v2552
  %3687 = vmatprep.subr.bf16.mxu0 %v2556
  %3688 = vmatpush1.bf16.msra.mxu0 %v2555
  %3689 = vmatprep.subr.bf16.mxu0 %v2559
  %3690 = vmatpush1.bf16.msra.mxu0 %v2558
  %3691 = vmatprep.subr.bf16.mxu0 %v2562
  %3692 = vmatpush1.bf16.msra.mxu0 %v2561
  %3693 = vmatprep.subr.bf16.mxu0 %v2565
  %3694 = vmatpush1.bf16.msra.mxu0 %v2564
  %3695 = vmatprep.subr.bf16.mxu0 %v2568
  %3696 = vmatpush1.bf16.msra.mxu0 %v2567
  %3697 = vmatprep.subr.bf16.mxu0 %v2571
  %3698 = vmatpush1.bf16.msra.mxu0 %v2570
  %3699 = vmatprep.subr.bf16.mxu0 %v2574
  %3700 = vmatpush1.bf16.msra.mxu0 %v2573
  %3701 = vmatprep.mubr.bf16.mxu0 %v1027
  %3702 = vmatmul.mubr.bf16.gmra.mrb[0].mxu0 %v1026
  %v3703 = vpop.f32.mrb[0].mxu0
  %v3704 = vadd.f32 %v3543, %v3703
  %v3705 = vpop.f32.mrb[0].mxu0
  %v3706 = vadd.f32 %v3545, %v3705
  %v3707 = vpop.f32.mrb[0].mxu0
  %v3708 = vadd.f32 %v3547, %v3707
  %v3709 = vpop.f32.mrb[0].mxu0
  %v3710 = vadd.f32 %v3549, %v3709
  %3711 = vmatprep.mubr.bf16.mxu0 %v1039
  %3712 = vmatmul.mubr.bf16.gmra.mrb[0].mxu0 %v1038
  %v3713 = vpop.f32.mrb[0].mxu0
  %v3714 = vadd.f32 %v3553, %v3713
  %v3715 = vpop.f32.mrb[0].mxu0
  %v3716 = vadd.f32 %v3555, %v3715
  %v3717 = vpop.f32.mrb[0].mxu0
  %v3718 = vadd.f32 %v3557, %v3717
  %v3719 = vpop.f32.mrb[0].mxu0
  %v3720 = vadd.f32 %v3559, %v3719
  %3721 = vmatprep.mubr.bf16.mxu0 %v1051
  %3722 = vmatmul.mubr.bf16.gmra.mrb[0].mxu0 %v1050
  %v3723 = vpop.f32.mrb[0].mxu0
  %v3724 = vadd.f32 %v3563, %v3723
  %v3725 = vpop.f32.mrb[0].mxu0
  %v3726 = vadd.f32 %v3565, %v3725
  %v3727 = vpop.f32.mrb[0].mxu0
  %v3728 = vadd.f32 %v3567, %v3727
  %v3729 = vpop.f32.mrb[0].mxu0
  %v3730 = vadd.f32 %v3569, %v3729
  %3731 = vmatprep.mubr.bf16.mxu0 %v1063
  %3732 = vmatmul.mubr.bf16.gmra.mrb[0].mxu0 %v1062
  %v3733 = vpop.f32.mrb[0].mxu0
  %v3734 = vadd.f32 %v3573, %v3733
  %v3735 = vpop.f32.mrb[0].mxu0
  %v3736 = vadd.f32 %v3575, %v3735
  %v3737 = vpop.f32.mrb[0].mxu0
  %v3738 = vadd.f32 %v3577, %v3737
  %v3739 = vpop.f32.mrb[0].mxu0
  %v3740 = vadd.f32 %v3579, %v3739
  %3741 = vmatprep.mubr.bf16.mxu0 %v1075
  %3742 = vmatmul.mubr.bf16.gmra.mrb[0].mxu0 %v1074
  %v3743 = vpop.f32.mrb[0].mxu0
  %v3744 = vadd.f32 %v3583, %v3743
  %v3745 = vpop.f32.mrb[0].mxu0
  %v3746 = vadd.f32 %v3585, %v3745
  %v3747 = vpop.f32.mrb[0].mxu0
  %v3748 = vadd.f32 %v3587, %v3747
  %v3749 = vpop.f32.mrb[0].mxu0
  %v3750 = vadd.f32 %v3589, %v3749
  %3751 = vmatprep.mubr.bf16.mxu0 %v1087
  %3752 = vmatmul.mubr.bf16.gmra.mrb[0].mxu0 %v1086
  %v3753 = vpop.f32.mrb[0].mxu0
  %v3754 = vadd.f32 %v3593, %v3753
  %v3755 = vpop.f32.mrb[0].mxu0
  %v3756 = vadd.f32 %v3595, %v3755
  %v3757 = vpop.f32.mrb[0].mxu0
  %v3758 = vadd.f32 %v3597, %v3757
  %v3759 = vpop.f32.mrb[0].mxu0
  %v3760 = vadd.f32 %v3599, %v3759
  %3761 = vmatprep.mubr.bf16.mxu0 %v1099
  %3762 = vmatmul.mubr.bf16.gmra.mrb[0].mxu0 %v1098
  %v3763 = vpop.f32.mrb[0].mxu0
  %v3764 = vadd.f32 %v3603, %v3763
  %v3765 = vpop.f32.mrb[0].mxu0
  %v3766 = vadd.f32 %v3605, %v3765
  %v3767 = vpop.f32.mrb[0].mxu0
  %v3768 = vadd.f32 %v3607, %v3767
  %v3769 = vpop.f32.mrb[0].mxu0
  %v3770 = vadd.f32 %v3609, %v3769
  %3771 = vmatprep.mubr.bf16.mxu0 %v1111
  %3772 = vmatmul.mubr.bf16.gmra.mrb[0].mxu0 %v1110
  %v3773 = vpop.f32.mrb[0].mxu0
  %v3774 = vadd.f32 %v3613, %v3773
  %v3775 = vpop.f32.mrb[0].mxu0
  %v3776 = vadd.f32 %v3615, %v3775
  %v3777 = vpop.f32.mrb[0].mxu0
  %v3778 = vadd.f32 %v3617, %v3777
  %v3779 = vpop.f32.mrb[0].mxu0
  %v3780 = vadd.f32 %v3619, %v3779
  %3781 = vmatprep.mubr.bf16.mxu0 %v1123
  %3782 = vmatmul.mubr.bf16.gmra.mrb[0].mxu0 %v1122
  %v3783 = vpop.f32.mrb[0].mxu0
  %v3784 = vadd.f32 %v3623, %v3783
  %v3785 = vpop.f32.mrb[0].mxu0
  %v3786 = vadd.f32 %v3625, %v3785
  %v3787 = vpop.f32.mrb[0].mxu0
  %v3788 = vadd.f32 %v3627, %v3787
  %v3789 = vpop.f32.mrb[0].mxu0
  %v3790 = vadd.f32 %v3629, %v3789
  %3791 = vmatprep.mubr.bf16.mxu0 %v1135
  %3792 = vmatmul.mubr.bf16.gmra.mrb[0].mxu0 %v1134
  %v3793 = vpop.f32.mrb[0].mxu0
  %v3794 = vadd.f32 %v3633, %v3793
  %v3795 = vpop.f32.mrb[0].mxu0
  %v3796 = vadd.f32 %v3635, %v3795
  %v3797 = vpop.f32.mrb[0].mxu0
  %v3798 = vadd.f32 %v3637, %v3797
  %v3799 = vpop.f32.mrb[0].mxu0
  %v3800 = vadd.f32 %v3639, %v3799
  %3801 = vmatprep.mubr.bf16.mxu0 %v1147
  %3802 = vmatmul.mubr.bf16.gmra.mrb[0].mxu0 %v1146
  %v3803 = vpop.f32.mrb[0].mxu0
  %v3804 = vadd.f32 %v3643, %v3803
  %v3805 = vpop.f32.mrb[0].mxu0
  %v3806 = vadd.f32 %v3645, %v3805
  %v3807 = vpop.f32.mrb[0].mxu0
  %v3808 = vadd.f32 %v3647, %v3807
  %v3809 = vpop.f32.mrb[0].mxu0
  %v3810 = vadd.f32 %v3649, %v3809
  %3811 = vmatprep.mubr.bf16.mxu0 %v1159
  %3812 = vmatmul.mubr.bf16.gmra.mrb[0].mxu0 %v1158
  %v3813 = vpop.f32.mrb[0].mxu0
  %v3814 = vadd.f32 %v3653, %v3813
  %v3815 = vpop.f32.mrb[0].mxu0
  %v3816 = vadd.f32 %v3655, %v3815
  %v3817 = vpop.f32.mrb[0].mxu0
  %v3818 = vadd.f32 %v3657, %v3817
  %v3819 = vpop.f32.mrb[0].mxu0
  %v3820 = vadd.f32 %v3659, %v3819
  %3821 = vmatprep.mubr.bf16.mxu0 %v1171
  %3822 = vmatmul.mubr.bf16.gmra.mrb[0].mxu0 %v1170
  %v3823 = vpop.f32.mrb[0].mxu0
  %v3824 = vadd.f32 %v3663, %v3823
  %v3825 = vpop.f32.mrb[0].mxu0
  %v3826 = vadd.f32 %v3665, %v3825
  %v3827 = vpop.f32.mrb[0].mxu0
  %v3828 = vpop.f32.mrb[0].mxu0
  %3829 = vdwg.mxu0
  %3830 = vmatprep.subr.bf16.mxu0 0
  %3831 = vmatpush1.bf16.msra.mxu0 %v2290
  %3832 = vmatprep.subr.bf16.mxu0 0
  %3833 = vmatpush1.bf16.msra.mxu0 %v2293
  %3834 = vmatprep.subr.bf16.mxu0 0
  %3835 = vmatpush1.bf16.msra.mxu0 %v2296
  %3836 = vmatprep.subr.bf16.mxu0 0
  %3837 = vmatpush1.bf16.msra.mxu0 %v2299
  %3838 = vmatprep.subr.bf16.mxu0 0
  %3839 = vmatpush1.bf16.msra.mxu0 %v2302
  %3840 = vmatprep.subr.bf16.mxu0 0
  %3841 = vmatpush1.bf16.msra.mxu0 %v2305
  %3842 = vmatprep.subr.bf16.mxu0 0
  %3843 = vmatpush1.bf16.msra.mxu0 %v2308
  %3844 = vmatprep.subr.bf16.mxu0 0
  %3845 = vmatpush1.bf16.msra.mxu0 %v2311
  %3846 = vmatprep.subr.bf16.mxu0 0
  %3847 = vmatpush1.bf16.msra.mxu0 %v2314
  %3848 = vmatprep.subr.bf16.mxu0 0
  %3849 = vmatpush1.bf16.msra.mxu0 %v2317
  %3850 = vmatprep.subr.bf16.mxu0 0
  %3851 = vmatpush1.bf16.msra.mxu0 %v2320
  %3852 = vmatprep.subr.bf16.mxu0 0
  %3853 = vmatpush1.bf16.msra.mxu0 %v2323
  %3854 = vmatprep.subr.bf16.mxu0 0
  %3855 = vmatpush1.bf16.msra.mxu0 %v2326
  %3856 = vmatprep.subr.bf16.mxu0 0
  %3857 = vmatpush1.bf16.msra.mxu0 %v2329
  %3858 = vmatprep.subr.bf16.mxu0 0
  %3859 = vmatpush1.bf16.msra.mxu0 %v2332
  %3860 = vmatprep.subr.bf16.mxu0 0
  %3861 = vmatpush1.bf16.msra.mxu0 %v2335
  %3862 = vmatprep.mubr.bf16.mxu0 %v1017
  %3863 = vmatmul.mubr.bf16.gmra.mrb[0].mxu0 %v1016
  %v3864 = vpop.f32.mrb[0].mxu0
  %v3865 = vadd.f32 %v562, %v3864
  %v3866 = vpop.f32.mrb[0].mxu0
  %v3867 = vpop.f32.mrb[0].mxu0
  %v3868 = vadd.f32 %v562, %v3867
  %v3869 = vpop.f32.mrb[0].mxu0
  %3870 = vmatprep.mubr.bf16.mxu0 %v1029
  %3871 = vmatmul.mubr.bf16.gmra.mrb[0].mxu0 %v1028
  %v3872 = vpop.f32.mrb[0].mxu0
  %v3873 = vadd.f32 %v562, %v3872
  %v3874 = vpop.f32.mrb[0].mxu0
  %v3875 = vpop.f32.mrb[0].mxu0
  %v3876 = vadd.f32 %v562, %v3875
  %v3877 = vpop.f32.mrb[0].mxu0
  %3878 = vmatprep.mubr.bf16.mxu0 %v1041
  %3879 = vmatmul.mubr.bf16.gmra.mrb[0].mxu0 %v1040
  %v3880 = vpop.f32.mrb[0].mxu0
  %v3881 = vadd.f32 %v562, %v3880
  %v3882 = vpop.f32.mrb[0].mxu0
  %v3883 = vpop.f32.mrb[0].mxu0
  %v3884 = vadd.f32 %v562, %v3883
  %v3885 = vpop.f32.mrb[0].mxu0
  %3886 = vmatprep.mubr.bf16.mxu0 %v1053
  %3887 = vmatmul.mubr.bf16.gmra.mrb[0].mxu0 %v1052
  %v3888 = vpop.f32.mrb[0].mxu0
  %v3889 = vadd.f32 %v562, %v3888
  %v3890 = vpop.f32.mrb[0].mxu0
  %v3891 = vpop.f32.mrb[0].mxu0
  %v3892 = vadd.f32 %v562, %v3891
  %v3893 = vpop.f32.mrb[0].mxu0
  %3894 = vmatprep.mubr.bf16.mxu0 %v1065
  %3895 = vmatmul.mubr.bf16.gmra.mrb[0].mxu0 %v1064
  %v3896 = vpop.f32.mrb[0].mxu0
  %v3897 = vadd.f32 %v562, %v3896
  %v3898 = vpop.f32.mrb[0].mxu0
  %v3899 = vpop.f32.mrb[0].mxu0
  %v3900 = vadd.f32 %v562, %v3899
  %v3901 = vpop.f32.mrb[0].mxu0
  %3902 = vmatprep.mubr.bf16.mxu0 %v1077
  %3903 = vmatmul.mubr.bf16.gmra.mrb[0].mxu0 %v1076
  %v3904 = vpop.f32.mrb[0].mxu0
  %v3905 = vadd.f32 %v562, %v3904
  %v3906 = vpop.f32.mrb[0].mxu0
  %v3907 = vpop.f32.mrb[0].mxu0
  %v3908 = vadd.f32 %v562, %v3907
  %v3909 = vpop.f32.mrb[0].mxu0
  %3910 = vmatprep.mubr.bf16.mxu0 %v1089
  %3911 = vmatmul.mubr.bf16.gmra.mrb[0].mxu0 %v1088
  %v3912 = vpop.f32.mrb[0].mxu0
  %v3913 = vadd.f32 %v562, %v3912
  %v3914 = vpop.f32.mrb[0].mxu0
  %v3915 = vpop.f32.mrb[0].mxu0
  %v3916 = vadd.f32 %v562, %v3915
  %v3917 = vpop.f32.mrb[0].mxu0
  %3918 = vmatprep.mubr.bf16.mxu0 %v1101
  %3919 = vmatmul.mubr.bf16.gmra.mrb[0].mxu0 %v1100
  %v3920 = vpop.f32.mrb[0].mxu0
  %v3921 = vadd.f32 %v562, %v3920
  %v3922 = vpop.f32.mrb[0].mxu0
  %v3923 = vpop.f32.mrb[0].mxu0
  %v3924 = vadd.f32 %v562, %v3923
  %v3925 = vpop.f32.mrb[0].mxu0
  %3926 = vmatprep.mubr.bf16.mxu0 %v1113
  %3927 = vmatmul.mubr.bf16.gmra.mrb[0].mxu0 %v1112
  %v3928 = vpop.f32.mrb[0].mxu0
  %v3929 = vadd.f32 %v562, %v3928
  %v3930 = vpop.f32.mrb[0].mxu0
  %v3931 = vpop.f32.mrb[0].mxu0
  %v3932 = vadd.f32 %v562, %v3931
  %v3933 = vpop.f32.mrb[0].mxu0
  %3934 = vmatprep.mubr.bf16.mxu0 %v1125
  %3935 = vmatmul.mubr.bf16.gmra.mrb[0].mxu0 %v1124
  %v3936 = vpop.f32.mrb[0].mxu0
  %v3937 = vadd.f32 %v562, %v3936
  %v3938 = vpop.f32.mrb[0].mxu0
  %v3939 = vpop.f32.mrb[0].mxu0
  %v3940 = vadd.f32 %v562, %v3939
  %v3941 = vpop.f32.mrb[0].mxu0
  %3942 = vmatprep.mubr.bf16.mxu0 %v1137
  %3943 = vmatmul.mubr.bf16.gmra.mrb[0].mxu0 %v1136
  %v3944 = vpop.f32.mrb[0].mxu0
  %v3945 = vadd.f32 %v562, %v3944
  %v3946 = vpop.f32.mrb[0].mxu0
  %v3947 = vpop.f32.mrb[0].mxu0
  %v3948 = vadd.f32 %v562, %v3947
  %v3949 = vpop.f32.mrb[0].mxu0
  %3950 = vmatprep.mubr.bf16.mxu0 %v1149
  %3951 = vmatmul.mubr.bf16.gmra.mrb[0].mxu0 %v1148
  %v3952 = vpop.f32.mrb[0].mxu0
  %v3953 = vadd.f32 %v562, %v3952
  %v3954 = vpop.f32.mrb[0].mxu0
  %v3955 = vpop.f32.mrb[0].mxu0
  %v3956 = vadd.f32 %v562, %v3955
  %v3957 = vpop.f32.mrb[0].mxu0
  %3958 = vmatprep.mubr.bf16.mxu0 %v1161
  %3959 = vmatmul.mubr.bf16.gmra.mrb[0].mxu0 %v1160
  %v3960 = vpop.f32.mrb[0].mxu0
  %v3961 = vadd.f32 %v562, %v3960
  %v3962 = vpop.f32.mrb[0].mxu0
  %v3963 = vpop.f32.mrb[0].mxu0
  %v3964 = vpop.f32.mrb[0].mxu0
  %3965 = vdwg.mxu0
  %3966 = vmatprep.subr.bf16.mxu0 0
  %3967 = vmatpush1.bf16.msra.mxu0 %v2338
  %3968 = vmatprep.subr.bf16.mxu0 0
  %3969 = vmatpush1.bf16.msra.mxu0 %v2341
  %3970 = vmatprep.subr.bf16.mxu0 0
  %3971 = vmatpush1.bf16.msra.mxu0 %v2344
  %3972 = vmatprep.subr.bf16.mxu0 0
  %3973 = vmatpush1.bf16.msra.mxu0 %v2347
  %3974 = vmatprep.subr.bf16.mxu0 0
  %3975 = vmatpush1.bf16.msra.mxu0 %v2350
  %3976 = vmatprep.subr.bf16.mxu0 0
  %3977 = vmatpush1.bf16.msra.mxu0 %v2353
  %3978 = vmatprep.subr.bf16.mxu0 0
  %3979 = vmatpush1.bf16.msra.mxu0 %v2356
  %3980 = vmatprep.subr.bf16.mxu0 0
  %3981 = vmatpush1.bf16.msra.mxu0 %v2359
  %3982 = vmatprep.subr.bf16.mxu0 0
  %3983 = vmatpush1.bf16.msra.mxu0 %v2362
  %3984 = vmatprep.subr.bf16.mxu0 0
  %3985 = vmatpush1.bf16.msra.mxu0 %v2365
  %3986 = vmatprep.subr.bf16.mxu0 0
  %3987 = vmatpush1.bf16.msra.mxu0 %v2368
  %3988 = vmatprep.subr.bf16.mxu0 0
  %3989 = vmatpush1.bf16.msra.mxu0 %v2371
  %3990 = vmatprep.subr.bf16.mxu0 0
  %3991 = vmatpush1.bf16.msra.mxu0 %v2374
  %3992 = vmatprep.subr.bf16.mxu0 0
  %3993 = vmatpush1.bf16.msra.mxu0 %v2377
  %3994 = vmatprep.subr.bf16.mxu0 0
  %3995 = vmatpush1.bf16.msra.mxu0 %v2380
  %3996 = vmatprep.subr.bf16.mxu0 0
  %3997 = vmatpush1.bf16.msra.mxu0 %v2383
  %3998 = vmatprep.mubr.bf16.mxu0 %v1019
  %3999 = vmatmul.mubr.bf16.gmra.mrb[0].mxu0 %v1018
  %v4000 = vpop.f32.mrb[0].mxu0
  %v4001 = vadd.f32 %v3865, %v4000
  %v4002 = vpop.f32.mrb[0].mxu0
  %v4003 = vpop.f32.mrb[0].mxu0
  %v4004 = vadd.f32 %v3868, %v4003
  %v4005 = vpop.f32.mrb[0].mxu0
  %4006 = vmatprep.mubr.bf16.mxu0 %v1031
  %4007 = vmatmul.mubr.bf16.gmra.mrb[0].mxu0 %v1030
  %v4008 = vpop.f32.mrb[0].mxu0
  %v4009 = vadd.f32 %v3873, %v4008
  %v4010 = vpop.f32.mrb[0].mxu0
  %v4011 = vpop.f32.mrb[0].mxu0
  %v4012 = vadd.f32 %v3876, %v4011
  %v4013 = vpop.f32.mrb[0].mxu0
  %4014 = vmatprep.mubr.bf16.mxu0 %v1043
  %4015 = vmatmul.mubr.bf16.gmra.mrb[0].mxu0 %v1042
  %v4016 = vpop.f32.mrb[0].mxu0
  %v4017 = vadd.f32 %v3881, %v4016
  %v4018 = vpop.f32.mrb[0].mxu0
  %v4019 = vpop.f32.mrb[0].mxu0
  %v4020 = vadd.f32 %v3884, %v4019
  %v4021 = vpop.f32.mrb[0].mxu0
  %4022 = vmatprep.mubr.bf16.mxu0 %v1055
  %4023 = vmatmul.mubr.bf16.gmra.mrb[0].mxu0 %v1054
  %v4024 = vpop.f32.mrb[0].mxu0
  %v4025 = vadd.f32 %v3889, %v4024
  %v4026 = vpop.f32.mrb[0].mxu0
  %v4027 = vpop.f32.mrb[0].mxu0
  %v4028 = vadd.f32 %v3892, %v4027
  %v4029 = vpop.f32.mrb[0].mxu0
  %4030 = vmatprep.mubr.bf16.mxu0 %v1067
  %4031 = vmatmul.mubr.bf16.gmra.mrb[0].mxu0 %v1066
  %v4032 = vpop.f32.mrb[0].mxu0
  %v4033 = vadd.f32 %v3897, %v4032
  %v4034 = vpop.f32.mrb[0].mxu0
  %v4035 = vpop.f32.mrb[0].mxu0
  %v4036 = vadd.f32 %v3900, %v4035
  %v4037 = vpop.f32.mrb[0].mxu0
  %4038 = vmatprep.mubr.bf16.mxu0 %v1079
  %4039 = vmatmul.mubr.bf16.gmra.mrb[0].mxu0 %v1078
  %v4040 = vpop.f32.mrb[0].mxu0
  %v4041 = vadd.f32 %v3905, %v4040
  %v4042 = vpop.f32.mrb[0].mxu0
  %v4043 = vpop.f32.mrb[0].mxu0
  %v4044 = vadd.f32 %v3908, %v4043
  %v4045 = vpop.f32.mrb[0].mxu0
  %4046 = vmatprep.mubr.bf16.mxu0 %v1091
  %4047 = vmatmul.mubr.bf16.gmra.mrb[0].mxu0 %v1090
  %v4048 = vpop.f32.mrb[0].mxu0
  %v4049 = vadd.f32 %v3913, %v4048
  %v4050 = vpop.f32.mrb[0].mxu0
  %v4051 = vpop.f32.mrb[0].mxu0
  %v4052 = vadd.f32 %v3916, %v4051
  %v4053 = vpop.f32.mrb[0].mxu0
  %4054 = vmatprep.mubr.bf16.mxu0 %v1103
  %4055 = vmatmul.mubr.bf16.gmra.mrb[0].mxu0 %v1102
  %v4056 = vpop.f32.mrb[0].mxu0
  %v4057 = vadd.f32 %v3921, %v4056
  %v4058 = vpop.f32.mrb[0].mxu0
  %v4059 = vpop.f32.mrb[0].mxu0
  %v4060 = vadd.f32 %v3924, %v4059
  %v4061 = vpop.f32.mrb[0].mxu0
  %4062 = vmatprep.mubr.bf16.mxu0 %v1115
  %4063 = vmatmul.mubr.bf16.gmra.mrb[0].mxu0 %v1114
  %v4064 = vpop.f32.mrb[0].mxu0
  %v4065 = vadd.f32 %v3929, %v4064
  %v4066 = vpop.f32.mrb[0].mxu0
  %v4067 = vpop.f32.mrb[0].mxu0
  %v4068 = vadd.f32 %v3932, %v4067
  %v4069 = vpop.f32.mrb[0].mxu0
  %4070 = vmatprep.mubr.bf16.mxu0 %v1127
  %4071 = vmatmul.mubr.bf16.gmra.mrb[0].mxu0 %v1126
  %v4072 = vpop.f32.mrb[0].mxu0
  %v4073 = vadd.f32 %v3937, %v4072
  %v4074 = vpop.f32.mrb[0].mxu0
  %v4075 = vpop.f32.mrb[0].mxu0
  %v4076 = vadd.f32 %v3940, %v4075
  %v4077 = vpop.f32.mrb[0].mxu0
  %4078 = vmatprep.mubr.bf16.mxu0 %v1139
  %4079 = vmatmul.mubr.bf16.gmra.mrb[0].mxu0 %v1138
  %v4080 = vpop.f32.mrb[0].mxu0
  %v4081 = vadd.f32 %v3945, %v4080
  %v4082 = vpop.f32.mrb[0].mxu0
  %v4083 = vpop.f32.mrb[0].mxu0
  %v4084 = vadd.f32 %v3948, %v4083
  %v4085 = vpop.f32.mrb[0].mxu0
  %4086 = vmatprep.mubr.bf16.mxu0 %v1151
  %4087 = vmatmul.mubr.bf16.gmra.mrb[0].mxu0 %v1150
  %v4088 = vpop.f32.mrb[0].mxu0
  %v4089 = vadd.f32 %v3953, %v4088
  %v4090 = vpop.f32.mrb[0].mxu0
  %v4091 = vpop.f32.mrb[0].mxu0
  %v4092 = vadd.f32 %v3956, %v4091
  %v4093 = vpop.f32.mrb[0].mxu0
  %4094 = vmatprep.mubr.bf16.mxu0 %v1163
  %4095 = vmatmul.mubr.bf16.gmra.mrb[0].mxu0 %v1162
  %v4096 = vpop.f32.mrb[0].mxu0
  %v4097 = vadd.f32 %v3961, %v4096
  %v4098 = vpop.f32.mrb[0].mxu0
  %v4099 = vpop.f32.mrb[0].mxu0
  %v4100 = vpop.f32.mrb[0].mxu0
  %4101 = vdwg.mxu0
  %4102 = vmatprep.subr.bf16.mxu0 0
  %4103 = vmatpush1.bf16.msra.mxu0 %v2386
  %4104 = vmatprep.subr.bf16.mxu0 0
  %4105 = vmatpush1.bf16.msra.mxu0 %v2389
  %4106 = vmatprep.subr.bf16.mxu0 0
  %4107 = vmatpush1.bf16.msra.mxu0 %v2392
  %4108 = vmatprep.subr.bf16.mxu0 0
  %4109 = vmatpush1.bf16.msra.mxu0 %v2395
  %4110 = vmatprep.subr.bf16.mxu0 0
  %4111 = vmatpush1.bf16.msra.mxu0 %v2398
  %4112 = vmatprep.subr.bf16.mxu0 0
  %4113 = vmatpush1.bf16.msra.mxu0 %v2401
  %4114 = vmatprep.subr.bf16.mxu0 0
  %4115 = vmatpush1.bf16.msra.mxu0 %v2404
  %4116 = vmatprep.subr.bf16.mxu0 0
  %4117 = vmatpush1.bf16.msra.mxu0 %v2407
  %4118 = vmatprep.subr.bf16.mxu0 0
  %4119 = vmatpush1.bf16.msra.mxu0 %v2410
  %4120 = vmatprep.subr.bf16.mxu0 0
  %4121 = vmatpush1.bf16.msra.mxu0 %v2413
  %4122 = vmatprep.subr.bf16.mxu0 0
  %4123 = vmatpush1.bf16.msra.mxu0 %v2416
  %4124 = vmatprep.subr.bf16.mxu0 0
  %4125 = vmatpush1.bf16.msra.mxu0 %v2419
  %4126 = vmatprep.subr.bf16.mxu0 0
  %4127 = vmatpush1.bf16.msra.mxu0 %v2422
  %4128 = vmatprep.subr.bf16.mxu0 0
  %4129 = vmatpush1.bf16.msra.mxu0 %v2425
  %4130 = vmatprep.subr.bf16.mxu0 0
  %4131 = vmatpush1.bf16.msra.mxu0 %v2428
  %4132 = vmatprep.subr.bf16.mxu0 0
  %4133 = vmatpush1.bf16.msra.mxu0 %v2431
  %4134 = vmatprep.mubr.bf16.mxu0 %v1021
  %4135 = vmatmul.mubr.bf16.gmra.mrb[0].mxu0 %v1020
  %v4136 = vpop.f32.mrb[0].mxu0
  %v4137 = vadd.f32 %v4001, %v4136
  %v4138 = vpop.f32.mrb[0].mxu0
  %v4139 = vpop.f32.mrb[0].mxu0
  %v4140 = vadd.f32 %v4004, %v4139
  %v4141 = vpop.f32.mrb[0].mxu0
  %4142 = vmatprep.mubr.bf16.mxu0 %v1033
  %4143 = vmatmul.mubr.bf16.gmra.mrb[0].mxu0 %v1032
  %v4144 = vpop.f32.mrb[0].mxu0
  %v4145 = vadd.f32 %v4009, %v4144
  %v4146 = vpop.f32.mrb[0].mxu0
  %v4147 = vpop.f32.mrb[0].mxu0
  %v4148 = vadd.f32 %v4012, %v4147
  %v4149 = vpop.f32.mrb[0].mxu0
  %4150 = vmatprep.mubr.bf16.mxu0 %v1045
  %4151 = vmatmul.mubr.bf16.gmra.mrb[0].mxu0 %v1044
  %v4152 = vpop.f32.mrb[0].mxu0
  %v4153 = vadd.f32 %v4017, %v4152
  %v4154 = vpop.f32.mrb[0].mxu0
  %v4155 = vpop.f32.mrb[0].mxu0
  %v4156 = vadd.f32 %v4020, %v4155
  %v4157 = vpop.f32.mrb[0].mxu0
  %4158 = vmatprep.mubr.bf16.mxu0 %v1057
  %4159 = vmatmul.mubr.bf16.gmra.mrb[0].mxu0 %v1056
  %v4160 = vpop.f32.mrb[0].mxu0
  %v4161 = vadd.f32 %v4025, %v4160
  %v4162 = vpop.f32.mrb[0].mxu0
  %v4163 = vpop.f32.mrb[0].mxu0
  %v4164 = vadd.f32 %v4028, %v4163
  %v4165 = vpop.f32.mrb[0].mxu0
  %4166 = vmatprep.mubr.bf16.mxu0 %v1069
  %4167 = vmatmul.mubr.bf16.gmra.mrb[0].mxu0 %v1068
  %v4168 = vpop.f32.mrb[0].mxu0
  %v4169 = vadd.f32 %v4033, %v4168
  %v4170 = vpop.f32.mrb[0].mxu0
  %v4171 = vpop.f32.mrb[0].mxu0
  %v4172 = vadd.f32 %v4036, %v4171
  %v4173 = vpop.f32.mrb[0].mxu0
  %4174 = vmatprep.mubr.bf16.mxu0 %v1081
  %4175 = vmatmul.mubr.bf16.gmra.mrb[0].mxu0 %v1080
  %v4176 = vpop.f32.mrb[0].mxu0
  %v4177 = vadd.f32 %v4041, %v4176
  %v4178 = vpop.f32.mrb[0].mxu0
  %v4179 = vpop.f32.mrb[0].mxu0
  %v4180 = vadd.f32 %v4044, %v4179
  %v4181 = vpop.f32.mrb[0].mxu0
  %4182 = vmatprep.mubr.bf16.mxu0 %v1093
  %4183 = vmatmul.mubr.bf16.gmra.mrb[0].mxu0 %v1092
  %v4184 = vpop.f32.mrb[0].mxu0
  %v4185 = vadd.f32 %v4049, %v4184
  %v4186 = vpop.f32.mrb[0].mxu0
  %v4187 = vpop.f32.mrb[0].mxu0
  %v4188 = vadd.f32 %v4052, %v4187
  %v4189 = vpop.f32.mrb[0].mxu0
  %4190 = vmatprep.mubr.bf16.mxu0 %v1105
  %4191 = vmatmul.mubr.bf16.gmra.mrb[0].mxu0 %v1104
  %v4192 = vpop.f32.mrb[0].mxu0
  %v4193 = vadd.f32 %v4057, %v4192
  %v4194 = vpop.f32.mrb[0].mxu0
  %v4195 = vpop.f32.mrb[0].mxu0
  %v4196 = vadd.f32 %v4060, %v4195
  %v4197 = vpop.f32.mrb[0].mxu0
  %4198 = vmatprep.mubr.bf16.mxu0 %v1117
  %4199 = vmatmul.mubr.bf16.gmra.mrb[0].mxu0 %v1116
  %v4200 = vpop.f32.mrb[0].mxu0
  %v4201 = vadd.f32 %v4065, %v4200
  %v4202 = vpop.f32.mrb[0].mxu0
  %v4203 = vpop.f32.mrb[0].mxu0
  %v4204 = vadd.f32 %v4068, %v4203
  %v4205 = vpop.f32.mrb[0].mxu0
  %4206 = vmatprep.mubr.bf16.mxu0 %v1129
  %4207 = vmatmul.mubr.bf16.gmra.mrb[0].mxu0 %v1128
  %v4208 = vpop.f32.mrb[0].mxu0
  %v4209 = vadd.f32 %v4073, %v4208
  %v4210 = vpop.f32.mrb[0].mxu0
  %v4211 = vpop.f32.mrb[0].mxu0
  %v4212 = vadd.f32 %v4076, %v4211
  %v4213 = vpop.f32.mrb[0].mxu0
  %4214 = vmatprep.mubr.bf16.mxu0 %v1141
  %4215 = vmatmul.mubr.bf16.gmra.mrb[0].mxu0 %v1140
  %v4216 = vpop.f32.mrb[0].mxu0
  %v4217 = vadd.f32 %v4081, %v4216
  %v4218 = vpop.f32.mrb[0].mxu0
  %v4219 = vpop.f32.mrb[0].mxu0
  %v4220 = vadd.f32 %v4084, %v4219
  %v4221 = vpop.f32.mrb[0].mxu0
  %4222 = vmatprep.mubr.bf16.mxu0 %v1153
  %4223 = vmatmul.mubr.bf16.gmra.mrb[0].mxu0 %v1152
  %v4224 = vpop.f32.mrb[0].mxu0
  %v4225 = vadd.f32 %v4089, %v4224
  %v4226 = vpop.f32.mrb[0].mxu0
  %v4227 = vpop.f32.mrb[0].mxu0
  %v4228 = vadd.f32 %v4092, %v4227
  %v4229 = vpop.f32.mrb[0].mxu0
  %4230 = vmatprep.mubr.bf16.mxu0 %v1165
  %4231 = vmatmul.mubr.bf16.gmra.mrb[0].mxu0 %v1164
  %v4232 = vpop.f32.mrb[0].mxu0
  %v4233 = vadd.f32 %v4097, %v4232
  %v4234 = vpop.f32.mrb[0].mxu0
  %v4235 = vpop.f32.mrb[0].mxu0
  %v4236 = vpop.f32.mrb[0].mxu0
  %4237 = vdwg.mxu0
  %4238 = vmatprep.subr.bf16.mxu0 0
  %4239 = vmatpush1.bf16.msra.mxu0 %v2434
  %4240 = vmatprep.subr.bf16.mxu0 0
  %4241 = vmatpush1.bf16.msra.mxu0 %v2437
  %4242 = vmatprep.subr.bf16.mxu0 0
  %4243 = vmatpush1.bf16.msra.mxu0 %v2440
  %4244 = vmatprep.subr.bf16.mxu0 0
  %4245 = vmatpush1.bf16.msra.mxu0 %v2443
  %4246 = vmatprep.subr.bf16.mxu0 0
  %4247 = vmatpush1.bf16.msra.mxu0 %v2446
  %4248 = vmatprep.subr.bf16.mxu0 0
  %4249 = vmatpush1.bf16.msra.mxu0 %v2449
  %4250 = vmatprep.subr.bf16.mxu0 0
  %4251 = vmatpush1.bf16.msra.mxu0 %v2452
  %4252 = vmatprep.subr.bf16.mxu0 0
  %4253 = vmatpush1.bf16.msra.mxu0 %v2455
  %4254 = vmatprep.subr.bf16.mxu0 0
  %4255 = vmatpush1.bf16.msra.mxu0 %v2458
  %4256 = vmatprep.subr.bf16.mxu0 0
  %4257 = vmatpush1.bf16.msra.mxu0 %v2461
  %4258 = vmatprep.subr.bf16.mxu0 0
  %4259 = vmatpush1.bf16.msra.mxu0 %v2464
  %4260 = vmatprep.subr.bf16.mxu0 0
  %4261 = vmatpush1.bf16.msra.mxu0 %v2467
  %4262 = vmatprep.subr.bf16.mxu0 0
  %4263 = vmatpush1.bf16.msra.mxu0 %v2470
  %4264 = vmatprep.subr.bf16.mxu0 0
  %4265 = vmatpush1.bf16.msra.mxu0 %v2473
  %4266 = vmatprep.subr.bf16.mxu0 0
  %4267 = vmatpush1.bf16.msra.mxu0 %v2476
  %4268 = vmatprep.subr.bf16.mxu0 0
  %4269 = vmatpush1.bf16.msra.mxu0 %v2479
  %4270 = vmatprep.mubr.bf16.mxu0 %v1023
  %4271 = vmatmul.mubr.bf16.gmra.mrb[0].mxu0 %v1022
  %v4272 = vpop.f32.mrb[0].mxu0
  %v4273 = vadd.f32 %v4137, %v4272
  %v4274 = vpop.f32.mrb[0].mxu0
  %v4275 = vpop.f32.mrb[0].mxu0
  %v4276 = vadd.f32 %v4140, %v4275
  %v4277 = vpop.f32.mrb[0].mxu0
  %4278 = vmatprep.mubr.bf16.mxu0 %v1035
  %4279 = vmatmul.mubr.bf16.gmra.mrb[0].mxu0 %v1034
  %v4280 = vpop.f32.mrb[0].mxu0
  %v4281 = vadd.f32 %v4145, %v4280
  %v4282 = vpop.f32.mrb[0].mxu0
  %v4283 = vpop.f32.mrb[0].mxu0
  %v4284 = vadd.f32 %v4148, %v4283
  %v4285 = vpop.f32.mrb[0].mxu0
  %4286 = vmatprep.mubr.bf16.mxu0 %v1047
  %4287 = vmatmul.mubr.bf16.gmra.mrb[0].mxu0 %v1046
  %v4288 = vpop.f32.mrb[0].mxu0
  %v4289 = vadd.f32 %v4153, %v4288
  %v4290 = vpop.f32.mrb[0].mxu0
  %v4291 = vpop.f32.mrb[0].mxu0
  %v4292 = vadd.f32 %v4156, %v4291
  %v4293 = vpop.f32.mrb[0].mxu0
  %4294 = vmatprep.mubr.bf16.mxu0 %v1059
  %4295 = vmatmul.mubr.bf16.gmra.mrb[0].mxu0 %v1058
  %v4296 = vpop.f32.mrb[0].mxu0
  %v4297 = vadd.f32 %v4161, %v4296
  %v4298 = vpop.f32.mrb[0].mxu0
  %v4299 = vpop.f32.mrb[0].mxu0
  %v4300 = vadd.f32 %v4164, %v4299
  %v4301 = vpop.f32.mrb[0].mxu0
  %4302 = vmatprep.mubr.bf16.mxu0 %v1071
  %4303 = vmatmul.mubr.bf16.gmra.mrb[0].mxu0 %v1070
  %v4304 = vpop.f32.mrb[0].mxu0
  %v4305 = vadd.f32 %v4169, %v4304
  %v4306 = vpop.f32.mrb[0].mxu0
  %v4307 = vpop.f32.mrb[0].mxu0
  %v4308 = vadd.f32 %v4172, %v4307
  %v4309 = vpop.f32.mrb[0].mxu0
  %4310 = vmatprep.mubr.bf16.mxu0 %v1083
  %4311 = vmatmul.mubr.bf16.gmra.mrb[0].mxu0 %v1082
  %v4312 = vpop.f32.mrb[0].mxu0
  %v4313 = vadd.f32 %v4177, %v4312
  %v4314 = vpop.f32.mrb[0].mxu0
  %v4315 = vpop.f32.mrb[0].mxu0
  %v4316 = vadd.f32 %v4180, %v4315
  %v4317 = vpop.f32.mrb[0].mxu0
  %4318 = vmatprep.mubr.bf16.mxu0 %v1095
  %4319 = vmatmul.mubr.bf16.gmra.mrb[0].mxu0 %v1094
  %v4320 = vpop.f32.mrb[0].mxu0
  %v4321 = vadd.f32 %v4185, %v4320
  %v4322 = vpop.f32.mrb[0].mxu0
  %v4323 = vpop.f32.mrb[0].mxu0
  %v4324 = vadd.f32 %v4188, %v4323
  %v4325 = vpop.f32.mrb[0].mxu0
  %4326 = vmatprep.mubr.bf16.mxu0 %v1107
  %4327 = vmatmul.mubr.bf16.gmra.mrb[0].mxu0 %v1106
  %v4328 = vpop.f32.mrb[0].mxu0
  %v4329 = vadd.f32 %v4193, %v4328
  %v4330 = vpop.f32.mrb[0].mxu0
  %v4331 = vpop.f32.mrb[0].mxu0
  %v4332 = vadd.f32 %v4196, %v4331
  %v4333 = vpop.f32.mrb[0].mxu0
  %4334 = vmatprep.mubr.bf16.mxu0 %v1119
  %4335 = vmatmul.mubr.bf16.gmra.mrb[0].mxu0 %v1118
  %v4336 = vpop.f32.mrb[0].mxu0
  %v4337 = vadd.f32 %v4201, %v4336
  %v4338 = vpop.f32.mrb[0].mxu0
  %v4339 = vpop.f32.mrb[0].mxu0
  %v4340 = vadd.f32 %v4204, %v4339
  %v4341 = vpop.f32.mrb[0].mxu0
  %4342 = vmatprep.mubr.bf16.mxu0 %v1131
  %4343 = vmatmul.mubr.bf16.gmra.mrb[0].mxu0 %v1130
  %v4344 = vpop.f32.mrb[0].mxu0
  %v4345 = vadd.f32 %v4209, %v4344
  %v4346 = vpop.f32.mrb[0].mxu0
  %v4347 = vpop.f32.mrb[0].mxu0
  %v4348 = vadd.f32 %v4212, %v4347
  %v4349 = vpop.f32.mrb[0].mxu0
  %4350 = vmatprep.mubr.bf16.mxu0 %v1143
  %4351 = vmatmul.mubr.bf16.gmra.mrb[0].mxu0 %v1142
  %v4352 = vpop.f32.mrb[0].mxu0
  %v4353 = vadd.f32 %v4217, %v4352
  %v4354 = vpop.f32.mrb[0].mxu0
  %v4355 = vpop.f32.mrb[0].mxu0
  %v4356 = vadd.f32 %v4220, %v4355
  %v4357 = vpop.f32.mrb[0].mxu0
  %4358 = vmatprep.mubr.bf16.mxu0 %v1155
  %4359 = vmatmul.mubr.bf16.gmra.mrb[0].mxu0 %v1154
  %v4360 = vpop.f32.mrb[0].mxu0
  %v4361 = vadd.f32 %v4225, %v4360
  %v4362 = vpop.f32.mrb[0].mxu0
  %v4363 = vpop.f32.mrb[0].mxu0
  %v4364 = vadd.f32 %v4228, %v4363
  %v4365 = vpop.f32.mrb[0].mxu0
  %4366 = vmatprep.mubr.bf16.mxu0 %v1167
  %4367 = vmatmul.mubr.bf16.gmra.mrb[0].mxu0 %v1166
  %v4368 = vpop.f32.mrb[0].mxu0
  %v4369 = vadd.f32 %v4233, %v4368
  %v4370 = vpop.f32.mrb[0].mxu0
  %v4371 = vpop.f32.mrb[0].mxu0
  %v4372 = vpop.f32.mrb[0].mxu0
  %4373 = vdwg.mxu0
  %4374 = vmatprep.subr.bf16.mxu0 0
  %4375 = vmatpush1.bf16.msra.mxu0 %v2482
  %4376 = vmatprep.subr.bf16.mxu0 0
  %4377 = vmatpush1.bf16.msra.mxu0 %v2485
  %4378 = vmatprep.subr.bf16.mxu0 0
  %4379 = vmatpush1.bf16.msra.mxu0 %v2488
  %4380 = vmatprep.subr.bf16.mxu0 0
  %4381 = vmatpush1.bf16.msra.mxu0 %v2491
  %4382 = vmatprep.subr.bf16.mxu0 0
  %4383 = vmatpush1.bf16.msra.mxu0 %v2494
  %4384 = vmatprep.subr.bf16.mxu0 0
  %4385 = vmatpush1.bf16.msra.mxu0 %v2497
  %4386 = vmatprep.subr.bf16.mxu0 0
  %4387 = vmatpush1.bf16.msra.mxu0 %v2500
  %4388 = vmatprep.subr.bf16.mxu0 0
  %4389 = vmatpush1.bf16.msra.mxu0 %v2503
  %4390 = vmatprep.subr.bf16.mxu0 0
  %4391 = vmatpush1.bf16.msra.mxu0 %v2506
  %4392 = vmatprep.subr.bf16.mxu0 0
  %4393 = vmatpush1.bf16.msra.mxu0 %v2509
  %4394 = vmatprep.subr.bf16.mxu0 0
  %4395 = vmatpush1.bf16.msra.mxu0 %v2512
  %4396 = vmatprep.subr.bf16.mxu0 0
  %4397 = vmatpush1.bf16.msra.mxu0 %v2515
  %4398 = vmatprep.subr.bf16.mxu0 0
  %4399 = vmatpush1.bf16.msra.mxu0 %v2518
  %4400 = vmatprep.subr.bf16.mxu0 0
  %4401 = vmatpush1.bf16.msra.mxu0 %v2521
  %4402 = vmatprep.subr.bf16.mxu0 0
  %4403 = vmatpush1.bf16.msra.mxu0 %v2524
  %4404 = vmatprep.subr.bf16.mxu0 0
  %4405 = vmatpush1.bf16.msra.mxu0 %v2527
  %4406 = vmatprep.mubr.bf16.mxu0 %v1025
  %4407 = vmatmul.mubr.bf16.gmra.mrb[0].mxu0 %v1024
  %v4408 = vpop.f32.mrb[0].mxu0
  %v4409 = vadd.f32 %v4273, %v4408
  %v4410 = vpop.f32.mrb[0].mxu0
  %v4411 = vpop.f32.mrb[0].mxu0
  %v4412 = vadd.f32 %v4276, %v4411
  %v4413 = vpop.f32.mrb[0].mxu0
  %4414 = vmatprep.mubr.bf16.mxu0 %v1037
  %4415 = vmatmul.mubr.bf16.gmra.mrb[0].mxu0 %v1036
  %v4416 = vpop.f32.mrb[0].mxu0
  %v4417 = vadd.f32 %v4281, %v4416
  %v4418 = vpop.f32.mrb[0].mxu0
  %v4419 = vpop.f32.mrb[0].mxu0
  %v4420 = vadd.f32 %v4284, %v4419
  %v4421 = vpop.f32.mrb[0].mxu0
  %4422 = vmatprep.mubr.bf16.mxu0 %v1049
  %4423 = vmatmul.mubr.bf16.gmra.mrb[0].mxu0 %v1048
  %v4424 = vpop.f32.mrb[0].mxu0
  %v4425 = vadd.f32 %v4289, %v4424
  %v4426 = vpop.f32.mrb[0].mxu0
  %v4427 = vpop.f32.mrb[0].mxu0
  %v4428 = vadd.f32 %v4292, %v4427
  %v4429 = vpop.f32.mrb[0].mxu0
  %4430 = vmatprep.mubr.bf16.mxu0 %v1061
  %4431 = vmatmul.mubr.bf16.gmra.mrb[0].mxu0 %v1060
  %v4432 = vpop.f32.mrb[0].mxu0
  %v4433 = vadd.f32 %v4297, %v4432
  %v4434 = vpop.f32.mrb[0].mxu0
  %v4435 = vpop.f32.mrb[0].mxu0
  %v4436 = vadd.f32 %v4300, %v4435
  %v4437 = vpop.f32.mrb[0].mxu0
  %4438 = vmatprep.mubr.bf16.mxu0 %v1073
  %4439 = vmatmul.mubr.bf16.gmra.mrb[0].mxu0 %v1072
  %v4440 = vpop.f32.mrb[0].mxu0
  %v4441 = vadd.f32 %v4305, %v4440
  %v4442 = vpop.f32.mrb[0].mxu0
  %v4443 = vpop.f32.mrb[0].mxu0
  %v4444 = vadd.f32 %v4308, %v4443
  %v4445 = vpop.f32.mrb[0].mxu0
  %4446 = vmatprep.mubr.bf16.mxu0 %v1085
  %4447 = vmatmul.mubr.bf16.gmra.mrb[0].mxu0 %v1084
  %v4448 = vpop.f32.mrb[0].mxu0
  %v4449 = vadd.f32 %v4313, %v4448
  %v4450 = vpop.f32.mrb[0].mxu0
  %v4451 = vpop.f32.mrb[0].mxu0
  %v4452 = vadd.f32 %v4316, %v4451
  %v4453 = vpop.f32.mrb[0].mxu0
  %4454 = vmatprep.mubr.bf16.mxu0 %v1097
  %4455 = vmatmul.mubr.bf16.gmra.mrb[0].mxu0 %v1096
  %v4456 = vpop.f32.mrb[0].mxu0
  %v4457 = vadd.f32 %v4321, %v4456
  %v4458 = vpop.f32.mrb[0].mxu0
  %v4459 = vpop.f32.mrb[0].mxu0
  %v4460 = vadd.f32 %v4324, %v4459
  %v4461 = vpop.f32.mrb[0].mxu0
  %4462 = vmatprep.mubr.bf16.mxu0 %v1109
  %4463 = vmatmul.mubr.bf16.gmra.mrb[0].mxu0 %v1108
  %v4464 = vpop.f32.mrb[0].mxu0
  %v4465 = vadd.f32 %v4329, %v4464
  %v4466 = vpop.f32.mrb[0].mxu0
  %v4467 = vpop.f32.mrb[0].mxu0
  %v4468 = vadd.f32 %v4332, %v4467
  %v4469 = vpop.f32.mrb[0].mxu0
  %4470 = vmatprep.mubr.bf16.mxu0 %v1121
  %4471 = vmatmul.mubr.bf16.gmra.mrb[0].mxu0 %v1120
  %v4472 = vpop.f32.mrb[0].mxu0
  %v4473 = vadd.f32 %v4337, %v4472
  %v4474 = vpop.f32.mrb[0].mxu0
  %v4475 = vpop.f32.mrb[0].mxu0
  %v4476 = vadd.f32 %v4340, %v4475
  %v4477 = vpop.f32.mrb[0].mxu0
  %4478 = vmatprep.mubr.bf16.mxu0 %v1133
  %4479 = vmatmul.mubr.bf16.gmra.mrb[0].mxu0 %v1132
  %v4480 = vpop.f32.mrb[0].mxu0
  %v4481 = vadd.f32 %v4345, %v4480
  %v4482 = vpop.f32.mrb[0].mxu0
  %v4483 = vpop.f32.mrb[0].mxu0
  %v4484 = vadd.f32 %v4348, %v4483
  %v4485 = vpop.f32.mrb[0].mxu0
  %4486 = vmatprep.mubr.bf16.mxu0 %v1145
  %4487 = vmatmul.mubr.bf16.gmra.mrb[0].mxu0 %v1144
  %v4488 = vpop.f32.mrb[0].mxu0
  %v4489 = vadd.f32 %v4353, %v4488
  %v4490 = vpop.f32.mrb[0].mxu0
  %v4491 = vpop.f32.mrb[0].mxu0
  %v4492 = vadd.f32 %v4356, %v4491
  %v4493 = vpop.f32.mrb[0].mxu0
  %4494 = vmatprep.mubr.bf16.mxu0 %v1157
  %4495 = vmatmul.mubr.bf16.gmra.mrb[0].mxu0 %v1156
  %v4496 = vpop.f32.mrb[0].mxu0
  %v4497 = vadd.f32 %v4361, %v4496
  %v4498 = vpop.f32.mrb[0].mxu0
  %v4499 = vpop.f32.mrb[0].mxu0
  %v4500 = vadd.f32 %v4364, %v4499
  %v4501 = vpop.f32.mrb[0].mxu0
  %4502 = vmatprep.mubr.bf16.mxu0 %v1169
  %4503 = vmatmul.mubr.bf16.gmra.mrb[0].mxu0 %v1168
  %v4504 = vpop.f32.mrb[0].mxu0
  %v4505 = vadd.f32 %v4369, %v4504
  %v4506 = vpop.f32.mrb[0].mxu0
  %v4507 = vpop.f32.mrb[0].mxu0
  %v4508 = vpop.f32.mrb[0].mxu0
  %4509 = vdwg.mxu0
  %4510 = vmatprep.subr.bf16.mxu0 0
  %4511 = vmatpush1.bf16.msra.mxu0 %v2530
  %4512 = vmatprep.subr.bf16.mxu0 0
  %4513 = vmatpush1.bf16.msra.mxu0 %v2533
  %4514 = vmatprep.subr.bf16.mxu0 0
  %4515 = vmatpush1.bf16.msra.mxu0 %v2536
  %4516 = vmatprep.subr.bf16.mxu0 0
  %4517 = vmatpush1.bf16.msra.mxu0 %v2539
  %4518 = vmatprep.subr.bf16.mxu0 0
  %4519 = vmatpush1.bf16.msra.mxu0 %v2542
  %4520 = vmatprep.subr.bf16.mxu0 0
  %4521 = vmatpush1.bf16.msra.mxu0 %v2545
  %4522 = vmatprep.subr.bf16.mxu0 0
  %4523 = vmatpush1.bf16.msra.mxu0 %v2548
  %4524 = vmatprep.subr.bf16.mxu0 0
  %4525 = vmatpush1.bf16.msra.mxu0 %v2551
  %4526 = vmatprep.subr.bf16.mxu0 0
  %4527 = vmatpush1.bf16.msra.mxu0 %v2554
  %4528 = vmatprep.subr.bf16.mxu0 0
  %4529 = vmatpush1.bf16.msra.mxu0 %v2557
  %4530 = vmatprep.subr.bf16.mxu0 0
  %4531 = vmatpush1.bf16.msra.mxu0 %v2560
  %4532 = vmatprep.subr.bf16.mxu0 0
  %4533 = vmatpush1.bf16.msra.mxu0 %v2563
  %4534 = vmatprep.subr.bf16.mxu0 0
  %4535 = vmatpush1.bf16.msra.mxu0 %v2566
  %4536 = vmatprep.subr.bf16.mxu0 0
  %4537 = vmatpush1.bf16.msra.mxu0 %v2569
  %4538 = vmatprep.subr.bf16.mxu0 0
  %4539 = vmatpush1.bf16.msra.mxu0 %v2572
  %4540 = vmatprep.subr.bf16.mxu0 0
  %4541 = vmatpush1.bf16.msra.mxu0 %v2575
  %4542 = vmatprep.mubr.bf16.mxu0 %v1027
  %4543 = vmatmul.mubr.bf16.gmra.mrb[0].mxu0 %v1026
  %v4544 = vpop.f32.mrb[0].mxu0
  %v4545 = vadd.f32 %v4409, %v4544
  %v4546 = vpop.f32.mrb[0].mxu0
  %v4547 = vpop.f32.mrb[0].mxu0
  %v4548 = vadd.f32 %v4412, %v4547
  %v4549 = vpop.f32.mrb[0].mxu0
  %4550 = vmatprep.mubr.bf16.mxu0 %v1039
  %4551 = vmatmul.mubr.bf16.gmra.mrb[0].mxu0 %v1038
  %v4552 = vpop.f32.mrb[0].mxu0
  %v4553 = vadd.f32 %v4417, %v4552
  %v4554 = vpop.f32.mrb[0].mxu0
  %v4555 = vpop.f32.mrb[0].mxu0
  %v4556 = vadd.f32 %v4420, %v4555
  %v4557 = vpop.f32.mrb[0].mxu0
  %4558 = vmatprep.mubr.bf16.mxu0 %v1051
  %4559 = vmatmul.mubr.bf16.gmra.mrb[0].mxu0 %v1050
  %v4560 = vpop.f32.mrb[0].mxu0
  %v4561 = vadd.f32 %v4425, %v4560
  %v4562 = vpop.f32.mrb[0].mxu0
  %v4563 = vpop.f32.mrb[0].mxu0
  %v4564 = vadd.f32 %v4428, %v4563
  %v4565 = vpop.f32.mrb[0].mxu0
  %4566 = vmatprep.mubr.bf16.mxu0 %v1063
  %4567 = vmatmul.mubr.bf16.gmra.mrb[0].mxu0 %v1062
  %v4568 = vpop.f32.mrb[0].mxu0
  %v4569 = vadd.f32 %v4433, %v4568
  %v4570 = vpop.f32.mrb[0].mxu0
  %v4571 = vpop.f32.mrb[0].mxu0
  %v4572 = vadd.f32 %v4436, %v4571
  %v4573 = vpop.f32.mrb[0].mxu0
  %4574 = vmatprep.mubr.bf16.mxu0 %v1075
  %4575 = vmatmul.mubr.bf16.gmra.mrb[0].mxu0 %v1074
  %v4576 = vpop.f32.mrb[0].mxu0
  %v4577 = vadd.f32 %v4441, %v4576
  %v4578 = vpop.f32.mrb[0].mxu0
  %v4579 = vpop.f32.mrb[0].mxu0
  %v4580 = vadd.f32 %v4444, %v4579
  %v4581 = vpop.f32.mrb[0].mxu0
  %4582 = vmatprep.mubr.bf16.mxu0 %v1087
  %4583 = vmatmul.mubr.bf16.gmra.mrb[0].mxu0 %v1086
  %v4584 = vpop.f32.mrb[0].mxu0
  %v4585 = vadd.f32 %v4449, %v4584
  %v4586 = vpop.f32.mrb[0].mxu0
  %v4587 = vpop.f32.mrb[0].mxu0
  %v4588 = vadd.f32 %v4452, %v4587
  %v4589 = vpop.f32.mrb[0].mxu0
  %4590 = vmatprep.mubr.bf16.mxu0 %v1099
  %4591 = vmatmul.mubr.bf16.gmra.mrb[0].mxu0 %v1098
  %v4592 = vpop.f32.mrb[0].mxu0
  %v4593 = vadd.f32 %v4457, %v4592
  %v4594 = vpop.f32.mrb[0].mxu0
  %v4595 = vpop.f32.mrb[0].mxu0
  %v4596 = vadd.f32 %v4460, %v4595
  %v4597 = vpop.f32.mrb[0].mxu0
  %4598 = vmatprep.mubr.bf16.mxu0 %v1111
  %4599 = vmatmul.mubr.bf16.gmra.mrb[0].mxu0 %v1110
  %v4600 = vpop.f32.mrb[0].mxu0
  %v4601 = vadd.f32 %v4465, %v4600
  %v4602 = vpop.f32.mrb[0].mxu0
  %v4603 = vpop.f32.mrb[0].mxu0
  %v4604 = vadd.f32 %v4468, %v4603
  %v4605 = vpop.f32.mrb[0].mxu0
  %4606 = vmatprep.mubr.bf16.mxu0 %v1123
  %4607 = vmatmul.mubr.bf16.gmra.mrb[0].mxu0 %v1122
  %v4608 = vpop.f32.mrb[0].mxu0
  %v4609 = vadd.f32 %v4473, %v4608
  %v4610 = vpop.f32.mrb[0].mxu0
  %v4611 = vpop.f32.mrb[0].mxu0
  %v4612 = vadd.f32 %v4476, %v4611
  %v4613 = vpop.f32.mrb[0].mxu0
  %4614 = vmatprep.mubr.bf16.mxu0 %v1135
  %4615 = vmatmul.mubr.bf16.gmra.mrb[0].mxu0 %v1134
  %v4616 = vpop.f32.mrb[0].mxu0
  %v4617 = vadd.f32 %v4481, %v4616
  %v4618 = vpop.f32.mrb[0].mxu0
  %v4619 = vpop.f32.mrb[0].mxu0
  %v4620 = vadd.f32 %v4484, %v4619
  %v4621 = vpop.f32.mrb[0].mxu0
  %4622 = vmatprep.mubr.bf16.mxu0 %v1147
  %4623 = vmatmul.mubr.bf16.gmra.mrb[0].mxu0 %v1146
  %v4624 = vpop.f32.mrb[0].mxu0
  %v4625 = vadd.f32 %v4489, %v4624
  %v4626 = vpop.f32.mrb[0].mxu0
  %v4627 = vpop.f32.mrb[0].mxu0
  %v4628 = vadd.f32 %v4492, %v4627
  %v4629 = vpop.f32.mrb[0].mxu0
  %4630 = vmatprep.mubr.bf16.mxu0 %v1159
  %4631 = vmatmul.mubr.bf16.gmra.mrb[0].mxu0 %v1158
  %v4632 = vpop.f32.mrb[0].mxu0
  %v4633 = vadd.f32 %v4497, %v4632
  %v4634 = vpop.f32.mrb[0].mxu0
  %v4635 = vpop.f32.mrb[0].mxu0
  %v4636 = vadd.f32 %v4500, %v4635
  %v4637 = vpop.f32.mrb[0].mxu0
  %4638 = vmatprep.mubr.bf16.mxu0 %v1171
  %4639 = vmatmul.mubr.bf16.gmra.mrb[0].mxu0 %v1170
  %v4640 = vpop.f32.mrb[0].mxu0
  %v4641 = vadd.f32 %v4505, %v4640
  %v4642 = vpop.f32.mrb[0].mxu0
  %v4643 = vpop.f32.mrb[0].mxu0
  %v4644 = vpop.f32.mrb[0].mxu0
  %4645 = vdwg.mxu0
  %4646 = vst [vmem:[%s3] sm:$0xff] %v3704
  %4647 = vst [vmem:[%s3 + $0x8] sm:$0xff] %v3706
  %4648 = vst [vmem:[%s3 + $0x10] sm:$0xff] %v4545
  %4649 = vst [vmem:[%s3 + $0x18] sm:$0xff] %v3708
  %4650 = vst [vmem:[%s3 + $0x20] sm:$0xff] %v3710
  %4651 = vst [vmem:[%s3 + $0x28] sm:$0xff] %v4548
  %4652 = vst [vmem:[%s3 + $0x30] sm:$0xff] %v3714
  %4653 = vst [vmem:[%s3 + $0x38] sm:$0xff] %v3716
  %4654 = vst [vmem:[%s3 + $0x40] sm:$0xff] %v4553
  %4655 = vst [vmem:[%s3 + $0x48] sm:$0xff] %v3718
  %4656 = vst [vmem:[%s3 + $0x50] sm:$0xff] %v3720
  %4657 = vst [vmem:[%s3 + $0x58] sm:$0xff] %v4556
  %4658 = vst [vmem:[%s3 + $0x60] sm:$0xff] %v3724
  %4659 = vst [vmem:[%s3 + $0x68] sm:$0xff] %v3726
  %4660 = vst [vmem:[%s3 + $0x70] sm:$0xff] %v4561
  %4661 = vst [vmem:[%s3 + $0x78] sm:$0xff] %v3728
  %4662 = vst [vmem:[%s3 + $0x80] sm:$0xff] %v3730
  %4663 = vst [vmem:[%s3 + $0x88] sm:$0xff] %v4564
  %4664 = vst [vmem:[%s3 + $0x90] sm:$0xff] %v3734
  %4665 = vst [vmem:[%s3 + $0x98] sm:$0xff] %v3736
  %4666 = vst [vmem:[%s3 + $0xa0] sm:$0xff] %v4569
  %4667 = vst [vmem:[%s3 + $0xa8] sm:$0xff] %v3738
  %4668 = vst [vmem:[%s3 + $0xb0] sm:$0xff] %v3740
  %4669 = vst [vmem:[%s3 + $0xb8] sm:$0xff] %v4572
  %4670 = vst [vmem:[%s3 + $0xc0] sm:$0xff] %v3744
  %4671 = vst [vmem:[%s3 + $0xc8] sm:$0xff] %v3746
  %4672 = vst [vmem:[%s3 + $0xd0] sm:$0xff] %v4577
  %4673 = vst [vmem:[%s3 + $0xd8] sm:$0xff] %v3748
  %4674 = vst [vmem:[%s3 + $0xe0] sm:$0xff] %v3750
  %4675 = vst [vmem:[%s3 + $0xe8] sm:$0xff] %v4580
  %4676 = vst [vmem:[%s3 + $0xf0] sm:$0xff] %v3754
  %4677 = vst [vmem:[%s3 + $0xf8] sm:$0xff] %v3756
  %4678 = vst [vmem:[%s3 + $0x100] sm:$0xff] %v4585
  %4679 = vst [vmem:[%s3 + $0x108] sm:$0xff] %v3758
  %4680 = vst [vmem:[%s3 + $0x110] sm:$0xff] %v3760
  %4681 = vst [vmem:[%s3 + $0x118] sm:$0xff] %v4588
  %4682 = vst [vmem:[%s3 + $0x120] sm:$0xff] %v3764
  %4683 = vst [vmem:[%s3 + $0x128] sm:$0xff] %v3766
  %4684 = vst [vmem:[%s3 + $0x130] sm:$0xff] %v4593
  %4685 = vst [vmem:[%s3 + $0x138] sm:$0xff] %v3768
  %4686 = vst [vmem:[%s3 + $0x140] sm:$0xff] %v3770
  %4687 = vst [vmem:[%s3 + $0x148] sm:$0xff] %v4596
  %4688 = vst [vmem:[%s3 + $0x150] sm:$0xff] %v3774
  %4689 = vst [vmem:[%s3 + $0x158] sm:$0xff] %v3776
  %4690 = vst [vmem:[%s3 + $0x160] sm:$0xff] %v4601
  %4691 = vst [vmem:[%s3 + $0x168] sm:$0xff] %v3778
  %4692 = vst [vmem:[%s3 + $0x170] sm:$0xff] %v3780
  %4693 = vst [vmem:[%s3 + $0x178] sm:$0xff] %v4604
  %4694 = vst [vmem:[%s3 + $0x180] sm:$0xff] %v3784
  %4695 = vst [vmem:[%s3 + $0x188] sm:$0xff] %v3786
  %4696 = vst [vmem:[%s3 + $0x190] sm:$0xff] %v4609
  %4697 = vst [vmem:[%s3 + $0x198] sm:$0xff] %v3788
  %4698 = vst [vmem:[%s3 + $0x1a0] sm:$0xff] %v3790
  %4699 = vst [vmem:[%s3 + $0x1a8] sm:$0xff] %v4612
  %4700 = vst [vmem:[%s3 + $0x1b0] sm:$0xff] %v3794
  %4701 = vst [vmem:[%s3 + $0x1b8] sm:$0xff] %v3796
  %4702 = vst [vmem:[%s3 + $0x1c0] sm:$0xff] %v4617
  %4703 = vst [vmem:[%s3 + $0x1c8] sm:$0xff] %v3798
  %4704 = vst [vmem:[%s3 + $0x1d0] sm:$0xff] %v3800
  %4705 = vst [vmem:[%s3 + $0x1d8] sm:$0xff] %v4620
  %4706 = vst [vmem:[%s3 + $0x1e0] sm:$0xff] %v3804
  %4707 = vst [vmem:[%s3 + $0x1e8] sm:$0xff] %v3806
  %4708 = vst [vmem:[%s3 + $0x1f0] sm:$0xff] %v4625
  %4709 = vst [vmem:[%s3 + $0x1f8] sm:$0xff] %v3808
  %4710 = vst [vmem:[%s3 + $0x200] sm:$0xff] %v3810
  %4711 = vst [vmem:[%s3 + $0x208] sm:$0xff] %v4628
  %4712 = vst [vmem:[%s3 + $0x210] sm:$0xff] %v3814
  %4713 = vst [vmem:[%s3 + $0x218] sm:$0xff] %v3816
  %4714 = vst [vmem:[%s3 + $0x220] sm:$0xff] %v4633
  %4715 = vst [vmem:[%s3 + $0x228] sm:$0xff] %v3818
  %4716 = vst [vmem:[%s3 + $0x230] sm:$0xff] %v3820
  %4717 = vst [vmem:[%s3 + $0x238] sm:$0xff] %v4636
  %4718 = vst [vmem:[%s3 + $0x240] sm:$0xf] %v3824
  %4719 = vst [vmem:[%s3 + $0x248] sm:$0xf] %v3826
  %4720 = vst [vmem:[%s3 + $0x250] sm:$0xf] %v4641
  // Predicated region
  $region14: #{dropout_linear_dropout.1} parent=0 // pred_check
    _
  $region15: #{dropout_linear_dropout.1} parent=0 // pred_check_branch
    %4722 = sbr.rel (0) target = $region17
  $region16: #{dropout_linear_dropout.1} parent=0 // pred_region
    _
  $region17: #{dropout_linear_dropout.1} parent=0 // pred_fallthru
    _
  // Predicated region
  $region18: #{dropout_linear_dropout.1} parent=0 // pred_check
    _
  $region19: #{dropout_linear_dropout.1} parent=0 // pred_check_branch
    %4724 = sbr.rel (0) target = $region21
  $region20: #{dropout_linear_dropout.1} parent=0 // pred_region
    _
  $region21: #{dropout_linear_dropout.1} parent=0 // pred_fallthru
    _

</llo_original>
